<compile_context>
chip_gen: v7x
topology: tpu7x:2x2x1
jax: 0.10.0
libtpu: 0.0.40
codegen_flags: <defaults>
</compile_context>

<pallas_src>
import functools
import math

import jax
import jax.numpy as jnp
from jax.experimental import pallas as pl
from jax.experimental.pallas import tpu as pltpu

IN_DIM = 12
LAYERS = [8, 6]
LATENT = 3
LANE = 128
SUBLANE = 8

# (in_dim, out_dim) of the 6 Linear layers (encoder then decoder); ReLU flags.
_LAYER_DIMS = [
    (IN_DIM, LAYERS[0]), (LAYERS[0], LAYERS[1]), (LAYERS[1], LATENT),
    (LATENT, LAYERS[1]), (LAYERS[1], LAYERS[0]), (LAYERS[0], IN_DIM),
]
_RELU = [True, True, False, True, True, False]   # final layer gets sigmoid instead

# Offsets into the flattened 1-D weight / bias SMEM arrays.
_W_OFF, _B_OFF = [], []
_wo = _bo = 0
for _i, _o in _LAYER_DIMS:
    _W_OFF.append(_wo)
    _B_OFF.append(_bo)
    _wo += _i * _o
    _bo += _o
_W_SIZE, _B_SIZE = _wo, _bo          # 324, 43


def _cdiv(a, b):
    return -(-a // b)


def _round_up(n, m):
    return _cdiv(n, m) * m


def _ae_kernel(w_ref, b_ref, x_ref, out_ref):
    """Fused encoder+decoder chain for one batch tile.

    w_ref  : (324,) f32 SMEM -- 6 PyTorch (out,in) weights, row-major, concatenated.
    b_ref  : (43,)  f32 SMEM -- 6 biases concatenated.
    x_ref  : (12, G, 128) f32 VMEM -- feature-major, fully dense batch tile.
    out_ref: (12, G, 128) f32 VMEM.
    """
    h = None
    for layer, (in_d, out_d) in enumerate(_LAYER_DIMS):
        w_off, b_off = _W_OFF[layer], _B_OFF[layer]
        nxt = []
        for o in range(out_d):
            base = w_off + o * in_d
            # SMEM-scalar * dense-vreg products (lazy x_ref row reads for layer 0).
            terms = []
            for k in range(in_d):
                xk = x_ref[k] if layer == 0 else h[k]
                terms.append(w_ref[base + k] * xk)
            # Two independent accumulation chains -> ILP for the 4 VALU slots.
            acc0, acc1 = terms[0], terms[1]
            for t in terms[2::2]:
                acc0 = acc0 + t
            for t in terms[3::2]:
                acc1 = acc1 + t
            y = acc0 + acc1 + b_ref[b_off + o]
            nxt.append(jnp.maximum(y, 0.0) if _RELU[layer] else y)
        h = nxt

    # Sigmoid: exp + divide routed to the EUP (approx vrcp, rel. err ~2^-12).
    for f in range(IN_DIM):
        out_ref[f] = pl.reciprocal(1.0 + jnp.exp(-h[f]), approx=True)


def _choose_tiling(n_samples, tile_b):
    """Pick how many 128-sample lane groups each grid step processes."""
    g_total = _cdiv(n_samples, LANE)                 # total 128-sample groups
    g_tile = max(1, min(tile_b // LANE, g_total))
    # v7x megacore: keep >= 2 parallel grid steps once the batch is big enough.
    if g_total >= 2 * SUBLANE:
        g_tile = min(g_tile, _round_up(_cdiv(g_total, 2), SUBLANE))
    if g_tile < g_total:
        # Multi-step grid: second-minor block dim must be a multiple of 8.
        g_tile = max(SUBLANE, (g_tile // SUBLANE) * SUBLANE)
    else:
        g_tile = g_total                              # single step covers everything
    n_steps = _cdiv(g_total, g_tile)
    return g_tile, n_steps


@functools.partial(jax.jit, static_argnames=("tile_b",))
def autoencoder_forward_fm(xt, w_flat, b_flat, *, tile_b=8192):
    """Feature-major forward: xt is (12, B); returns (12, B).

    No wrapper-side transposes -- use this when the surrounding model keeps its
    activations feature-major (review item 1, option A).
    """
    d, n = xt.shape
    assert d == IN_DIM
    g_tile, n_steps = _choose_tiling(n, tile_b)
    n_pad = n_steps * g_tile * LANE
    if n_pad != n:
        xt = jnp.pad(xt, ((0, 0), (0, n_pad - n)))
    x3 = xt.reshape(IN_DIM, n_steps * g_tile, LANE)

    out3 = pl.pallas_call(
        _ae_kernel,
        out_shape=jax.ShapeDtypeStruct((IN_DIM, n_steps * g_tile, LANE), jnp.float32),
        grid=(n_steps,),
        in_specs=[
            pl.BlockSpec(memory_space=pltpu.MemorySpace.SMEM),       # packed weights
            pl.BlockSpec(memory_space=pltpu.MemorySpace.SMEM),       # packed biases
            pl.BlockSpec((IN_DIM, g_tile, LANE), lambda i: (0, i, 0)),
        ],
        out_specs=pl.BlockSpec((IN_DIM, g_tile, LANE), lambda i: (0, i, 0)),
        compiler_params=pltpu.CompilerParams(
            dimension_semantics=("parallel",),     # batch tiles across TCs (v7x)
            vmem_limit_bytes=32 * 1024 * 1024,     # usage is ~2 MiB; safe on v5e/v6e/v7x
        ),
    )(w_flat, b_flat, x3)

    return out3.reshape(IN_DIM, n_pad)[:, :n]


@functools.partial(jax.jit, static_argnames=("tile_b",))
def autoencoder_forward(x, w_flat, b_flat, *, tile_b=8192):
    """Spec-compatible forward: x is (B, 12) like the PyTorch module; returns (B, 12).

    The one transpose per side is the unavoidable layout-conversion cost of the
    (batch, feature) contract; callers that can stay feature-major should use
    autoencoder_forward_fm directly.
    """
    return autoencoder_forward_fm(x.T, w_flat, b_flat, tile_b=tile_b).T


def init_params(key):
    """PyTorch nn.Linear init: W is (out,in), U(+-1/sqrt(fan_in)) for W and b."""
    ws, bs = [], []
    for fan_in, fan_out in _LAYER_DIMS:
        key, kw, kb = jax.random.split(key, 3)
        bound = 1.0 / math.sqrt(fan_in)
        ws.append(jax.random.uniform(kw, (fan_out, fan_in), jnp.float32, -bound, bound))
        bs.append(jax.random.uniform(kb, (fan_out,), jnp.float32, -bound, bound))
    return ws, bs


def pack_params(ws, bs):
    """Flatten the 6 (out,in) weights and 6 biases into two 1-D SMEM-friendly arrays."""
    w_flat = jnp.concatenate([w.reshape(-1) for w in ws]).astype(jnp.float32)
    b_flat = jnp.concatenate([b.reshape(-1) for b in bs]).astype(jnp.float32)
    assert w_flat.shape == (_W_SIZE,) and b_flat.shape == (_B_SIZE,)
    return w_flat, b_flat


def reference_forward(x, ws, bs):
    """Pure-JAX reference matching the PyTorch forward (f32-exact matmuls)."""
    hp = jax.lax.Precision.HIGHEST
    h = jax.nn.relu(jnp.dot(x, ws[0].T, precision=hp) + bs[0])
    h = jax.nn.relu(jnp.dot(h, ws[1].T, precision=hp) + bs[1])
    z = jnp.dot(h, ws[2].T, precision=hp) + bs[2]
    h = jax.nn.relu(jnp.dot(z, ws[3].T, precision=hp) + bs[3])
    h = jax.nn.relu(jnp.dot(h, ws[4].T, precision=hp) + bs[4])
    y = jnp.dot(h, ws[5].T, precision=hp) + bs[5]
    return jax.nn.sigmoid(y)


if __name__ == "__main__":
    key = jax.random.PRNGKey(0)
    key, kx = jax.random.split(key)
    ws, bs = init_params(key)
    w_flat, b_flat = pack_params(ws, bs)

    # Primary small test batch (PyTorch layout).
    batch = 16
    x = jax.random.normal(kx, (batch, IN_DIM), jnp.float32)
    out = jax.block_until_ready(autoencoder_forward(x, w_flat, b_flat))
    ref = reference_forward(x, ws, bs)
    assert out.shape == (batch, IN_DIM)
    # Tolerance covers the EUP's approximate reciprocal in the sigmoid (~2^-12);
    # everything else is exact f32.
    assert jnp.allclose(out, ref, atol=2e-3, rtol=2e-3), "mismatch vs reference"

    # Larger, non-aligned batch: exercises batch padding + multi-step "parallel" grid.
    key, kx2 = jax.random.split(key)
    x2 = jax.random.normal(kx2, (2500, IN_DIM), jnp.float32)
    out2 = jax.block_until_ready(autoencoder_forward(x2, w_flat, b_flat, tile_b=1024))
    ref2 = reference_forward(x2, ws, bs)
    assert jnp.allclose(out2, ref2, atol=2e-3, rtol=2e-3), "mismatch vs reference (tiled)"

    # Feature-major entry point (zero wrapper transposes).
    out3 = jax.block_until_ready(
        autoencoder_forward_fm(x2.T, w_flat, b_flat, tile_b=1024))
    assert jnp.allclose(out3.T, ref2, atol=2e-3, rtol=2e-3), "mismatch (feature-major)"

    print("KERNEL_OK")
</pallas_src>

<mosaic_0001>
module attributes {stable_mosaic.version = 11 : i64} {
  func.func @_ae_kernel(%arg0: i32, %arg1: memref<324xf32, #tpu.memory_space<smem>>, %arg2: memref<43xf32, #tpu.memory_space<smem>>, %arg3: memref<12x1x128xf32, #tpu.memory_space<vmem>>, %arg4: memref<12x1x128xf32, #tpu.memory_space<vmem>>) attributes {dimension_semantics = [#tpu.dimension_semantics<parallel>], iteration_bounds = array<i64: 1>, scalar_prefetch = 0 : i64, scratch_operands = 0 : i64, tpu.core_type = #tpu.core_type<tc>, window_params = [{transform_indices = @transform_0, window_bounds = array<i64: 324>}, {transform_indices = @transform_1, window_bounds = array<i64: 43>}, {transform_indices = @transform_2, window_bounds = array<i64: 12, 1, 128>}, {transform_indices = @transform_3, window_bounds = array<i64: 12, 1, 128>}]} {
    %c0 = arith.constant 0 : index
    %c0_0 = arith.constant 0 : index
    %c0_1 = arith.constant 0 : index
    %0 = vector.load %arg3[%c0, %c0_0, %c0_1] : memref<12x1x128xf32, #tpu.memory_space<vmem>>, vector<1x1x128xf32>
    %1 = vector.shape_cast %0 : vector<1x1x128xf32> to vector<1x128xf32>
    %c0_2 = arith.constant 0 : index
    %2 = memref.load %arg1[%c0_2] : memref<324xf32, #tpu.memory_space<smem>>
    %3 = vector.broadcast %2 : f32 to vector<1x128xf32>
    %4 = arith.mulf %3, %1 : vector<1x128xf32>
    %c1 = arith.constant 1 : index
    %c0_3 = arith.constant 0 : index
    %c0_4 = arith.constant 0 : index
    %5 = vector.load %arg3[%c1, %c0_3, %c0_4] : memref<12x1x128xf32, #tpu.memory_space<vmem>>, vector<1x1x128xf32>
    %6 = vector.shape_cast %5 : vector<1x1x128xf32> to vector<1x128xf32>
    %c1_5 = arith.constant 1 : index
    %7 = memref.load %arg1[%c1_5] : memref<324xf32, #tpu.memory_space<smem>>
    %8 = vector.broadcast %7 : f32 to vector<1x128xf32>
    %9 = arith.mulf %8, %6 : vector<1x128xf32>
    %c2 = arith.constant 2 : index
    %c0_6 = arith.constant 0 : index
    %c0_7 = arith.constant 0 : index
    %10 = vector.load %arg3[%c2, %c0_6, %c0_7] : memref<12x1x128xf32, #tpu.memory_space<vmem>>, vector<1x1x128xf32>
    %11 = vector.shape_cast %10 : vector<1x1x128xf32> to vector<1x128xf32>
    %c2_8 = arith.constant 2 : index
    %12 = memref.load %arg1[%c2_8] : memref<324xf32, #tpu.memory_space<smem>>
    %13 = vector.broadcast %12 : f32 to vector<1x128xf32>
    %14 = arith.mulf %13, %11 : vector<1x128xf32>
    %c3 = arith.constant 3 : index
    %c0_9 = arith.constant 0 : index
    %c0_10 = arith.constant 0 : index
    %15 = vector.load %arg3[%c3, %c0_9, %c0_10] : memref<12x1x128xf32, #tpu.memory_space<vmem>>, vector<1x1x128xf32>
    %16 = vector.shape_cast %15 : vector<1x1x128xf32> to vector<1x128xf32>
    %c3_11 = arith.constant 3 : index
    %17 = memref.load %arg1[%c3_11] : memref<324xf32, #tpu.memory_space<smem>>
    %18 = vector.broadcast %17 : f32 to vector<1x128xf32>
    %19 = arith.mulf %18, %16 : vector<1x128xf32>
    %c4 = arith.constant 4 : index
    %c0_12 = arith.constant 0 : index
    %c0_13 = arith.constant 0 : index
    %20 = vector.load %arg3[%c4, %c0_12, %c0_13] : memref<12x1x128xf32, #tpu.memory_space<vmem>>, vector<1x1x128xf32>
    %21 = vector.shape_cast %20 : vector<1x1x128xf32> to vector<1x128xf32>
    %c4_14 = arith.constant 4 : index
    %22 = memref.load %arg1[%c4_14] : memref<324xf32, #tpu.memory_space<smem>>
    %23 = vector.broadcast %22 : f32 to vector<1x128xf32>
    %24 = arith.mulf %23, %21 : vector<1x128xf32>
    %c5 = arith.constant 5 : index
    %c0_15 = arith.constant 0 : index
    %c0_16 = arith.constant 0 : index
    %25 = vector.load %arg3[%c5, %c0_15, %c0_16] : memref<12x1x128xf32, #tpu.memory_space<vmem>>, vector<1x1x128xf32>
    %26 = vector.shape_cast %25 : vector<1x1x128xf32> to vector<1x128xf32>
    %c5_17 = arith.constant 5 : index
    %27 = memref.load %arg1[%c5_17] : memref<324xf32, #tpu.memory_space<smem>>
    %28 = vector.broadcast %27 : f32 to vector<1x128xf32>
    %29 = arith.mulf %28, %26 : vector<1x128xf32>
    %c6 = arith.constant 6 : index
    %c0_18 = arith.constant 0 : index
    %c0_19 = arith.constant 0 : index
    %30 = vector.load %arg3[%c6, %c0_18, %c0_19] : memref<12x1x128xf32, #tpu.memory_space<vmem>>, vector<1x1x128xf32>
    %31 = vector.shape_cast %30 : vector<1x1x128xf32> to vector<1x128xf32>
    %c6_20 = arith.constant 6 : index
    %32 = memref.load %arg1[%c6_20] : memref<324xf32, #tpu.memory_space<smem>>
    %33 = vector.broadcast %32 : f32 to vector<1x128xf32>
    %34 = arith.mulf %33, %31 : vector<1x128xf32>
    %c7 = arith.constant 7 : index
    %c0_21 = arith.constant 0 : index
    %c0_22 = arith.constant 0 : index
    %35 = vector.load %arg3[%c7, %c0_21, %c0_22] : memref<12x1x128xf32, #tpu.memory_space<vmem>>, vector<1x1x128xf32>
    %36 = vector.shape_cast %35 : vector<1x1x128xf32> to vector<1x128xf32>
    %c7_23 = arith.constant 7 : index
    %37 = memref.load %arg1[%c7_23] : memref<324xf32, #tpu.memory_space<smem>>
    %38 = vector.broadcast %37 : f32 to vector<1x128xf32>
    %39 = arith.mulf %38, %36 : vector<1x128xf32>
    %c8 = arith.constant 8 : index
    %c0_24 = arith.constant 0 : index
    %c0_25 = arith.constant 0 : index
    %40 = vector.load %arg3[%c8, %c0_24, %c0_25] : memref<12x1x128xf32, #tpu.memory_space<vmem>>, vector<1x1x128xf32>
    %41 = vector.shape_cast %40 : vector<1x1x128xf32> to vector<1x128xf32>
    %c8_26 = arith.constant 8 : index
    %42 = memref.load %arg1[%c8_26] : memref<324xf32, #tpu.memory_space<smem>>
    %43 = vector.broadcast %42 : f32 to vector<1x128xf32>
    %44 = arith.mulf %43, %41 : vector<1x128xf32>
    %c9 = arith.constant 9 : index
    %c0_27 = arith.constant 0 : index
    %c0_28 = arith.constant 0 : index
    %45 = vector.load %arg3[%c9, %c0_27, %c0_28] : memref<12x1x128xf32, #tpu.memory_space<vmem>>, vector<1x1x128xf32>
    %46 = vector.shape_cast %45 : vector<1x1x128xf32> to vector<1x128xf32>
    %c9_29 = arith.constant 9 : index
    %47 = memref.load %arg1[%c9_29] : memref<324xf32, #tpu.memory_space<smem>>
    %48 = vector.broadcast %47 : f32 to vector<1x128xf32>
    %49 = arith.mulf %48, %46 : vector<1x128xf32>
    %c10 = arith.constant 10 : index
    %c0_30 = arith.constant 0 : index
    %c0_31 = arith.constant 0 : index
    %50 = vector.load %arg3[%c10, %c0_30, %c0_31] : memref<12x1x128xf32, #tpu.memory_space<vmem>>, vector<1x1x128xf32>
    %51 = vector.shape_cast %50 : vector<1x1x128xf32> to vector<1x128xf32>
    %c10_32 = arith.constant 10 : index
    %52 = memref.load %arg1[%c10_32] : memref<324xf32, #tpu.memory_space<smem>>
    %53 = vector.broadcast %52 : f32 to vector<1x128xf32>
    %54 = arith.mulf %53, %51 : vector<1x128xf32>
    %c11 = arith.constant 11 : index
    %c0_33 = arith.constant 0 : index
    %c0_34 = arith.constant 0 : index
    %55 = vector.load %arg3[%c11, %c0_33, %c0_34] : memref<12x1x128xf32, #tpu.memory_space<vmem>>, vector<1x1x128xf32>
    %56 = vector.shape_cast %55 : vector<1x1x128xf32> to vector<1x128xf32>
    %c11_35 = arith.constant 11 : index
    %57 = memref.load %arg1[%c11_35] : memref<324xf32, #tpu.memory_space<smem>>
    %58 = vector.broadcast %57 : f32 to vector<1x128xf32>
    %59 = arith.mulf %58, %56 : vector<1x128xf32>
    %60 = arith.addf %4, %14 : vector<1x128xf32>
    %61 = arith.addf %60, %24 : vector<1x128xf32>
    %62 = arith.addf %61, %34 : vector<1x128xf32>
    %63 = arith.addf %62, %44 : vector<1x128xf32>
    %64 = arith.addf %63, %54 : vector<1x128xf32>
    %65 = arith.addf %9, %19 : vector<1x128xf32>
    %66 = arith.addf %65, %29 : vector<1x128xf32>
    %67 = arith.addf %66, %39 : vector<1x128xf32>
    %68 = arith.addf %67, %49 : vector<1x128xf32>
    %69 = arith.addf %68, %59 : vector<1x128xf32>
    %70 = arith.addf %64, %69 : vector<1x128xf32>
    %c0_36 = arith.constant 0 : index
    %71 = memref.load %arg2[%c0_36] : memref<43xf32, #tpu.memory_space<smem>>
    %72 = vector.broadcast %71 : f32 to vector<1x128xf32>
    %73 = arith.addf %70, %72 : vector<1x128xf32>
    %cst = arith.constant 0.000000e+00 : f32
    %74 = vector.broadcast %cst : f32 to vector<1x128xf32>
    %75 = arith.maximumf %73, %74 : vector<1x128xf32>
    %c0_37 = arith.constant 0 : index
    %c0_38 = arith.constant 0 : index
    %c0_39 = arith.constant 0 : index
    %76 = vector.load %arg3[%c0_37, %c0_38, %c0_39] : memref<12x1x128xf32, #tpu.memory_space<vmem>>, vector<1x1x128xf32>
    %77 = vector.shape_cast %76 : vector<1x1x128xf32> to vector<1x128xf32>
    %c12 = arith.constant 12 : index
    %78 = memref.load %arg1[%c12] : memref<324xf32, #tpu.memory_space<smem>>
    %79 = vector.broadcast %78 : f32 to vector<1x128xf32>
    %80 = arith.mulf %79, %77 : vector<1x128xf32>
    %c1_40 = arith.constant 1 : index
    %c0_41 = arith.constant 0 : index
    %c0_42 = arith.constant 0 : index
    %81 = vector.load %arg3[%c1_40, %c0_41, %c0_42] : memref<12x1x128xf32, #tpu.memory_space<vmem>>, vector<1x1x128xf32>
    %82 = vector.shape_cast %81 : vector<1x1x128xf32> to vector<1x128xf32>
    %c13 = arith.constant 13 : index
    %83 = memref.load %arg1[%c13] : memref<324xf32, #tpu.memory_space<smem>>
    %84 = vector.broadcast %83 : f32 to vector<1x128xf32>
    %85 = arith.mulf %84, %82 : vector<1x128xf32>
    %c2_43 = arith.constant 2 : index
    %c0_44 = arith.constant 0 : index
    %c0_45 = arith.constant 0 : index
    %86 = vector.load %arg3[%c2_43, %c0_44, %c0_45] : memref<12x1x128xf32, #tpu.memory_space<vmem>>, vector<1x1x128xf32>
    %87 = vector.shape_cast %86 : vector<1x1x128xf32> to vector<1x128xf32>
    %c14 = arith.constant 14 : index
    %88 = memref.load %arg1[%c14] : memref<324xf32, #tpu.memory_space<smem>>
    %89 = vector.broadcast %88 : f32 to vector<1x128xf32>
    %90 = arith.mulf %89, %87 : vector<1x128xf32>
    %c3_46 = arith.constant 3 : index
    %c0_47 = arith.constant 0 : index
    %c0_48 = arith.constant 0 : index
    %91 = vector.load %arg3[%c3_46, %c0_47, %c0_48] : memref<12x1x128xf32, #tpu.memory_space<vmem>>, vector<1x1x128xf32>
    %92 = vector.shape_cast %91 : vector<1x1x128xf32> to vector<1x128xf32>
    %c15 = arith.constant 15 : index
    %93 = memref.load %arg1[%c15] : memref<324xf32, #tpu.memory_space<smem>>
    %94 = vector.broadcast %93 : f32 to vector<1x128xf32>
    %95 = arith.mulf %94, %92 : vector<1x128xf32>
    %c4_49 = arith.constant 4 : index
    %c0_50 = arith.constant 0 : index
    %c0_51 = arith.constant 0 : index
    %96 = vector.load %arg3[%c4_49, %c0_50, %c0_51] : memref<12x1x128xf32, #tpu.memory_space<vmem>>, vector<1x1x128xf32>
    %97 = vector.shape_cast %96 : vector<1x1x128xf32> to vector<1x128xf32>
    %c16 = arith.constant 16 : index
    %98 = memref.load %arg1[%c16] : memref<324xf32, #tpu.memory_space<smem>>
    %99 = vector.broadcast %98 : f32 to vector<1x128xf32>
    %100 = arith.mulf %99, %97 : vector<1x128xf32>
    %c5_52 = arith.constant 5 : index
    %c0_53 = arith.constant 0 : index
    %c0_54 = arith.constant 0 : index
    %101 = vector.load %arg3[%c5_52, %c0_53, %c0_54] : memref<12x1x128xf32, #tpu.memory_space<vmem>>, vector<1x1x128xf32>
    %102 = vector.shape_cast %101 : vector<1x1x128xf32> to vector<1x128xf32>
    %c17 = arith.constant 17 : index
    %103 = memref.load %arg1[%c17] : memref<324xf32, #tpu.memory_space<smem>>
    %104 = vector.broadcast %103 : f32 to vector<1x128xf32>
    %105 = arith.mulf %104, %102 : vector<1x128xf32>
    %c6_55 = arith.constant 6 : index
    %c0_56 = arith.constant 0 : index
    %c0_57 = arith.constant 0 : index
    %106 = vector.load %arg3[%c6_55, %c0_56, %c0_57] : memref<12x1x128xf32, #tpu.memory_space<vmem>>, vector<1x1x128xf32>
    %107 = vector.shape_cast %106 : vector<1x1x128xf32> to vector<1x128xf32>
    %c18 = arith.constant 18 : index
    %108 = memref.load %arg1[%c18] : memref<324xf32, #tpu.memory_space<smem>>
    %109 = vector.broadcast %108 : f32 to vector<1x128xf32>
    %110 = arith.mulf %109, %107 : vector<1x128xf32>
    %c7_58 = arith.constant 7 : index
    %c0_59 = arith.constant 0 : index
    %c0_60 = arith.constant 0 : index
    %111 = vector.load %arg3[%c7_58, %c0_59, %c0_60] : memref<12x1x128xf32, #tpu.memory_space<vmem>>, vector<1x1x128xf32>
    %112 = vector.shape_cast %111 : vector<1x1x128xf32> to vector<1x128xf32>
    %c19 = arith.constant 19 : index
    %113 = memref.load %arg1[%c19] : memref<324xf32, #tpu.memory_space<smem>>
    %114 = vector.broadcast %113 : f32 to vector<1x128xf32>
    %115 = arith.mulf %114, %112 : vector<1x128xf32>
    %c8_61 = arith.constant 8 : index
    %c0_62 = arith.constant 0 : index
    %c0_63 = arith.constant 0 : index
    %116 = vector.load %arg3[%c8_61, %c0_62, %c0_63] : memref<12x1x128xf32, #tpu.memory_space<vmem>>, vector<1x1x128xf32>
    %117 = vector.shape_cast %116 : vector<1x1x128xf32> to vector<1x128xf32>
    %c20 = arith.constant 20 : index
    %118 = memref.load %arg1[%c20] : memref<324xf32, #tpu.memory_space<smem>>
    %119 = vector.broadcast %118 : f32 to vector<1x128xf32>
    %120 = arith.mulf %119, %117 : vector<1x128xf32>
    %c9_64 = arith.constant 9 : index
    %c0_65 = arith.constant 0 : index
    %c0_66 = arith.constant 0 : index
    %121 = vector.load %arg3[%c9_64, %c0_65, %c0_66] : memref<12x1x128xf32, #tpu.memory_space<vmem>>, vector<1x1x128xf32>
    %122 = vector.shape_cast %121 : vector<1x1x128xf32> to vector<1x128xf32>
    %c21 = arith.constant 21 : index
    %123 = memref.load %arg1[%c21] : memref<324xf32, #tpu.memory_space<smem>>
    %124 = vector.broadcast %123 : f32 to vector<1x128xf32>
    %125 = arith.mulf %124, %122 : vector<1x128xf32>
    %c10_67 = arith.constant 10 : index
    %c0_68 = arith.constant 0 : index
    %c0_69 = arith.constant 0 : index
    %126 = vector.load %arg3[%c10_67, %c0_68, %c0_69] : memref<12x1x128xf32, #tpu.memory_space<vmem>>, vector<1x1x128xf32>
    %127 = vector.shape_cast %126 : vector<1x1x128xf32> to vector<1x128xf32>
    %c22 = arith.constant 22 : index
    %128 = memref.load %arg1[%c22] : memref<324xf32, #tpu.memory_space<smem>>
    %129 = vector.broadcast %128 : f32 to vector<1x128xf32>
    %130 = arith.mulf %129, %127 : vector<1x128xf32>
    %c11_70 = arith.constant 11 : index
    %c0_71 = arith.constant 0 : index
    %c0_72 = arith.constant 0 : index
    %131 = vector.load %arg3[%c11_70, %c0_71, %c0_72] : memref<12x1x128xf32, #tpu.memory_space<vmem>>, vector<1x1x128xf32>
    %132 = vector.shape_cast %131 : vector<1x1x128xf32> to vector<1x128xf32>
    %c23 = arith.constant 23 : index
    %133 = memref.load %arg1[%c23] : memref<324xf32, #tpu.memory_space<smem>>
    %134 = vector.broadcast %133 : f32 to vector<1x128xf32>
    %135 = arith.mulf %134, %132 : vector<1x128xf32>
    %136 = arith.addf %80, %90 : vector<1x128xf32>
    %137 = arith.addf %136, %100 : vector<1x128xf32>
    %138 = arith.addf %137, %110 : vector<1x128xf32>
    %139 = arith.addf %138, %120 : vector<1x128xf32>
    %140 = arith.addf %139, %130 : vector<1x128xf32>
    %141 = arith.addf %85, %95 : vector<1x128xf32>
    %142 = arith.addf %141, %105 : vector<1x128xf32>
    %143 = arith.addf %142, %115 : vector<1x128xf32>
    %144 = arith.addf %143, %125 : vector<1x128xf32>
    %145 = arith.addf %144, %135 : vector<1x128xf32>
    %146 = arith.addf %140, %145 : vector<1x128xf32>
    %c1_73 = arith.constant 1 : index
    %147 = memref.load %arg2[%c1_73] : memref<43xf32, #tpu.memory_space<smem>>
    %148 = vector.broadcast %147 : f32 to vector<1x128xf32>
    %149 = arith.addf %146, %148 : vector<1x128xf32>
    %cst_74 = arith.constant 0.000000e+00 : f32
    %150 = vector.broadcast %cst_74 : f32 to vector<1x128xf32>
    %151 = arith.maximumf %149, %150 : vector<1x128xf32>
    %c0_75 = arith.constant 0 : index
    %c0_76 = arith.constant 0 : index
    %c0_77 = arith.constant 0 : index
    %152 = vector.load %arg3[%c0_75, %c0_76, %c0_77] : memref<12x1x128xf32, #tpu.memory_space<vmem>>, vector<1x1x128xf32>
    %153 = vector.shape_cast %152 : vector<1x1x128xf32> to vector<1x128xf32>
    %c24 = arith.constant 24 : index
    %154 = memref.load %arg1[%c24] : memref<324xf32, #tpu.memory_space<smem>>
    %155 = vector.broadcast %154 : f32 to vector<1x128xf32>
    %156 = arith.mulf %155, %153 : vector<1x128xf32>
    %c1_78 = arith.constant 1 : index
    %c0_79 = arith.constant 0 : index
    %c0_80 = arith.constant 0 : index
    %157 = vector.load %arg3[%c1_78, %c0_79, %c0_80] : memref<12x1x128xf32, #tpu.memory_space<vmem>>, vector<1x1x128xf32>
    %158 = vector.shape_cast %157 : vector<1x1x128xf32> to vector<1x128xf32>
    %c25 = arith.constant 25 : index
    %159 = memref.load %arg1[%c25] : memref<324xf32, #tpu.memory_space<smem>>
    %160 = vector.broadcast %159 : f32 to vector<1x128xf32>
    %161 = arith.mulf %160, %158 : vector<1x128xf32>
    %c2_81 = arith.constant 2 : index
    %c0_82 = arith.constant 0 : index
    %c0_83 = arith.constant 0 : index
    %162 = vector.load %arg3[%c2_81, %c0_82, %c0_83] : memref<12x1x128xf32, #tpu.memory_space<vmem>>, vector<1x1x128xf32>
    %163 = vector.shape_cast %162 : vector<1x1x128xf32> to vector<1x128xf32>
    %c26 = arith.constant 26 : index
    %164 = memref.load %arg1[%c26] : memref<324xf32, #tpu.memory_space<smem>>
    %165 = vector.broadcast %164 : f32 to vector<1x128xf32>
    %166 = arith.mulf %165, %163 : vector<1x128xf32>
    %c3_84 = arith.constant 3 : index
    %c0_85 = arith.constant 0 : index
    %c0_86 = arith.constant 0 : index
    %167 = vector.load %arg3[%c3_84, %c0_85, %c0_86] : memref<12x1x128xf32, #tpu.memory_space<vmem>>, vector<1x1x128xf32>
    %168 = vector.shape_cast %167 : vector<1x1x128xf32> to vector<1x128xf32>
    %c27 = arith.constant 27 : index
    %169 = memref.load %arg1[%c27] : memref<324xf32, #tpu.memory_space<smem>>
    %170 = vector.broadcast %169 : f32 to vector<1x128xf32>
    %171 = arith.mulf %170, %168 : vector<1x128xf32>
    %c4_87 = arith.constant 4 : index
    %c0_88 = arith.constant 0 : index
    %c0_89 = arith.constant 0 : index
    %172 = vector.load %arg3[%c4_87, %c0_88, %c0_89] : memref<12x1x128xf32, #tpu.memory_space<vmem>>, vector<1x1x128xf32>
    %173 = vector.shape_cast %172 : vector<1x1x128xf32> to vector<1x128xf32>
    %c28 = arith.constant 28 : index
    %174 = memref.load %arg1[%c28] : memref<324xf32, #tpu.memory_space<smem>>
    %175 = vector.broadcast %174 : f32 to vector<1x128xf32>
    %176 = arith.mulf %175, %173 : vector<1x128xf32>
    %c5_90 = arith.constant 5 : index
    %c0_91 = arith.constant 0 : index
    %c0_92 = arith.constant 0 : index
    %177 = vector.load %arg3[%c5_90, %c0_91, %c0_92] : memref<12x1x128xf32, #tpu.memory_space<vmem>>, vector<1x1x128xf32>
    %178 = vector.shape_cast %177 : vector<1x1x128xf32> to vector<1x128xf32>
    %c29 = arith.constant 29 : index
    %179 = memref.load %arg1[%c29] : memref<324xf32, #tpu.memory_space<smem>>
    %180 = vector.broadcast %179 : f32 to vector<1x128xf32>
    %181 = arith.mulf %180, %178 : vector<1x128xf32>
    %c6_93 = arith.constant 6 : index
    %c0_94 = arith.constant 0 : index
    %c0_95 = arith.constant 0 : index
    %182 = vector.load %arg3[%c6_93, %c0_94, %c0_95] : memref<12x1x128xf32, #tpu.memory_space<vmem>>, vector<1x1x128xf32>
    %183 = vector.shape_cast %182 : vector<1x1x128xf32> to vector<1x128xf32>
    %c30 = arith.constant 30 : index
    %184 = memref.load %arg1[%c30] : memref<324xf32, #tpu.memory_space<smem>>
    %185 = vector.broadcast %184 : f32 to vector<1x128xf32>
    %186 = arith.mulf %185, %183 : vector<1x128xf32>
    %c7_96 = arith.constant 7 : index
    %c0_97 = arith.constant 0 : index
    %c0_98 = arith.constant 0 : index
    %187 = vector.load %arg3[%c7_96, %c0_97, %c0_98] : memref<12x1x128xf32, #tpu.memory_space<vmem>>, vector<1x1x128xf32>
    %188 = vector.shape_cast %187 : vector<1x1x128xf32> to vector<1x128xf32>
    %c31 = arith.constant 31 : index
    %189 = memref.load %arg1[%c31] : memref<324xf32, #tpu.memory_space<smem>>
    %190 = vector.broadcast %189 : f32 to vector<1x128xf32>
    %191 = arith.mulf %190, %188 : vector<1x128xf32>
    %c8_99 = arith.constant 8 : index
    %c0_100 = arith.constant 0 : index
    %c0_101 = arith.constant 0 : index
    %192 = vector.load %arg3[%c8_99, %c0_100, %c0_101] : memref<12x1x128xf32, #tpu.memory_space<vmem>>, vector<1x1x128xf32>
    %193 = vector.shape_cast %192 : vector<1x1x128xf32> to vector<1x128xf32>
    %c32 = arith.constant 32 : index
    %194 = memref.load %arg1[%c32] : memref<324xf32, #tpu.memory_space<smem>>
    %195 = vector.broadcast %194 : f32 to vector<1x128xf32>
    %196 = arith.mulf %195, %193 : vector<1x128xf32>
    %c9_102 = arith.constant 9 : index
    %c0_103 = arith.constant 0 : index
    %c0_104 = arith.constant 0 : index
    %197 = vector.load %arg3[%c9_102, %c0_103, %c0_104] : memref<12x1x128xf32, #tpu.memory_space<vmem>>, vector<1x1x128xf32>
    %198 = vector.shape_cast %197 : vector<1x1x128xf32> to vector<1x128xf32>
    %c33 = arith.constant 33 : index
    %199 = memref.load %arg1[%c33] : memref<324xf32, #tpu.memory_space<smem>>
    %200 = vector.broadcast %199 : f32 to vector<1x128xf32>
    %201 = arith.mulf %200, %198 : vector<1x128xf32>
    %c10_105 = arith.constant 10 : index
    %c0_106 = arith.constant 0 : index
    %c0_107 = arith.constant 0 : index
    %202 = vector.load %arg3[%c10_105, %c0_106, %c0_107] : memref<12x1x128xf32, #tpu.memory_space<vmem>>, vector<1x1x128xf32>
    %203 = vector.shape_cast %202 : vector<1x1x128xf32> to vector<1x128xf32>
    %c34 = arith.constant 34 : index
    %204 = memref.load %arg1[%c34] : memref<324xf32, #tpu.memory_space<smem>>
    %205 = vector.broadcast %204 : f32 to vector<1x128xf32>
    %206 = arith.mulf %205, %203 : vector<1x128xf32>
    %c11_108 = arith.constant 11 : index
    %c0_109 = arith.constant 0 : index
    %c0_110 = arith.constant 0 : index
    %207 = vector.load %arg3[%c11_108, %c0_109, %c0_110] : memref<12x1x128xf32, #tpu.memory_space<vmem>>, vector<1x1x128xf32>
    %208 = vector.shape_cast %207 : vector<1x1x128xf32> to vector<1x128xf32>
    %c35 = arith.constant 35 : index
    %209 = memref.load %arg1[%c35] : memref<324xf32, #tpu.memory_space<smem>>
    %210 = vector.broadcast %209 : f32 to vector<1x128xf32>
    %211 = arith.mulf %210, %208 : vector<1x128xf32>
    %212 = arith.addf %156, %166 : vector<1x128xf32>
    %213 = arith.addf %212, %176 : vector<1x128xf32>
    %214 = arith.addf %213, %186 : vector<1x128xf32>
    %215 = arith.addf %214, %196 : vector<1x128xf32>
    %216 = arith.addf %215, %206 : vector<1x128xf32>
    %217 = arith.addf %161, %171 : vector<1x128xf32>
    %218 = arith.addf %217, %181 : vector<1x128xf32>
    %219 = arith.addf %218, %191 : vector<1x128xf32>
    %220 = arith.addf %219, %201 : vector<1x128xf32>
    %221 = arith.addf %220, %211 : vector<1x128xf32>
    %222 = arith.addf %216, %221 : vector<1x128xf32>
    %c2_111 = arith.constant 2 : index
    %223 = memref.load %arg2[%c2_111] : memref<43xf32, #tpu.memory_space<smem>>
    %224 = vector.broadcast %223 : f32 to vector<1x128xf32>
    %225 = arith.addf %222, %224 : vector<1x128xf32>
    %cst_112 = arith.constant 0.000000e+00 : f32
    %226 = vector.broadcast %cst_112 : f32 to vector<1x128xf32>
    %227 = arith.maximumf %225, %226 : vector<1x128xf32>
    %c0_113 = arith.constant 0 : index
    %c0_114 = arith.constant 0 : index
    %c0_115 = arith.constant 0 : index
    %228 = vector.load %arg3[%c0_113, %c0_114, %c0_115] : memref<12x1x128xf32, #tpu.memory_space<vmem>>, vector<1x1x128xf32>
    %229 = vector.shape_cast %228 : vector<1x1x128xf32> to vector<1x128xf32>
    %c36 = arith.constant 36 : index
    %230 = memref.load %arg1[%c36] : memref<324xf32, #tpu.memory_space<smem>>
    %231 = vector.broadcast %230 : f32 to vector<1x128xf32>
    %232 = arith.mulf %231, %229 : vector<1x128xf32>
    %c1_116 = arith.constant 1 : index
    %c0_117 = arith.constant 0 : index
    %c0_118 = arith.constant 0 : index
    %233 = vector.load %arg3[%c1_116, %c0_117, %c0_118] : memref<12x1x128xf32, #tpu.memory_space<vmem>>, vector<1x1x128xf32>
    %234 = vector.shape_cast %233 : vector<1x1x128xf32> to vector<1x128xf32>
    %c37 = arith.constant 37 : index
    %235 = memref.load %arg1[%c37] : memref<324xf32, #tpu.memory_space<smem>>
    %236 = vector.broadcast %235 : f32 to vector<1x128xf32>
    %237 = arith.mulf %236, %234 : vector<1x128xf32>
    %c2_119 = arith.constant 2 : index
    %c0_120 = arith.constant 0 : index
    %c0_121 = arith.constant 0 : index
    %238 = vector.load %arg3[%c2_119, %c0_120, %c0_121] : memref<12x1x128xf32, #tpu.memory_space<vmem>>, vector<1x1x128xf32>
    %239 = vector.shape_cast %238 : vector<1x1x128xf32> to vector<1x128xf32>
    %c38 = arith.constant 38 : index
    %240 = memref.load %arg1[%c38] : memref<324xf32, #tpu.memory_space<smem>>
    %241 = vector.broadcast %240 : f32 to vector<1x128xf32>
    %242 = arith.mulf %241, %239 : vector<1x128xf32>
    %c3_122 = arith.constant 3 : index
    %c0_123 = arith.constant 0 : index
    %c0_124 = arith.constant 0 : index
    %243 = vector.load %arg3[%c3_122, %c0_123, %c0_124] : memref<12x1x128xf32, #tpu.memory_space<vmem>>, vector<1x1x128xf32>
    %244 = vector.shape_cast %243 : vector<1x1x128xf32> to vector<1x128xf32>
    %c39 = arith.constant 39 : index
    %245 = memref.load %arg1[%c39] : memref<324xf32, #tpu.memory_space<smem>>
    %246 = vector.broadcast %245 : f32 to vector<1x128xf32>
    %247 = arith.mulf %246, %244 : vector<1x128xf32>
    %c4_125 = arith.constant 4 : index
    %c0_126 = arith.constant 0 : index
    %c0_127 = arith.constant 0 : index
    %248 = vector.load %arg3[%c4_125, %c0_126, %c0_127] : memref<12x1x128xf32, #tpu.memory_space<vmem>>, vector<1x1x128xf32>
    %249 = vector.shape_cast %248 : vector<1x1x128xf32> to vector<1x128xf32>
    %c40 = arith.constant 40 : index
    %250 = memref.load %arg1[%c40] : memref<324xf32, #tpu.memory_space<smem>>
    %251 = vector.broadcast %250 : f32 to vector<1x128xf32>
    %252 = arith.mulf %251, %249 : vector<1x128xf32>
    %c5_128 = arith.constant 5 : index
    %c0_129 = arith.constant 0 : index
    %c0_130 = arith.constant 0 : index
    %253 = vector.load %arg3[%c5_128, %c0_129, %c0_130] : memref<12x1x128xf32, #tpu.memory_space<vmem>>, vector<1x1x128xf32>
    %254 = vector.shape_cast %253 : vector<1x1x128xf32> to vector<1x128xf32>
    %c41 = arith.constant 41 : index
    %255 = memref.load %arg1[%c41] : memref<324xf32, #tpu.memory_space<smem>>
    %256 = vector.broadcast %255 : f32 to vector<1x128xf32>
    %257 = arith.mulf %256, %254 : vector<1x128xf32>
    %c6_131 = arith.constant 6 : index
    %c0_132 = arith.constant 0 : index
    %c0_133 = arith.constant 0 : index
    %258 = vector.load %arg3[%c6_131, %c0_132, %c0_133] : memref<12x1x128xf32, #tpu.memory_space<vmem>>, vector<1x1x128xf32>
    %259 = vector.shape_cast %258 : vector<1x1x128xf32> to vector<1x128xf32>
    %c42 = arith.constant 42 : index
    %260 = memref.load %arg1[%c42] : memref<324xf32, #tpu.memory_space<smem>>
    %261 = vector.broadcast %260 : f32 to vector<1x128xf32>
    %262 = arith.mulf %261, %259 : vector<1x128xf32>
    %c7_134 = arith.constant 7 : index
    %c0_135 = arith.constant 0 : index
    %c0_136 = arith.constant 0 : index
    %263 = vector.load %arg3[%c7_134, %c0_135, %c0_136] : memref<12x1x128xf32, #tpu.memory_space<vmem>>, vector<1x1x128xf32>
    %264 = vector.shape_cast %263 : vector<1x1x128xf32> to vector<1x128xf32>
    %c43 = arith.constant 43 : index
    %265 = memref.load %arg1[%c43] : memref<324xf32, #tpu.memory_space<smem>>
    %266 = vector.broadcast %265 : f32 to vector<1x128xf32>
    %267 = arith.mulf %266, %264 : vector<1x128xf32>
    %c8_137 = arith.constant 8 : index
    %c0_138 = arith.constant 0 : index
    %c0_139 = arith.constant 0 : index
    %268 = vector.load %arg3[%c8_137, %c0_138, %c0_139] : memref<12x1x128xf32, #tpu.memory_space<vmem>>, vector<1x1x128xf32>
    %269 = vector.shape_cast %268 : vector<1x1x128xf32> to vector<1x128xf32>
    %c44 = arith.constant 44 : index
    %270 = memref.load %arg1[%c44] : memref<324xf32, #tpu.memory_space<smem>>
    %271 = vector.broadcast %270 : f32 to vector<1x128xf32>
    %272 = arith.mulf %271, %269 : vector<1x128xf32>
    %c9_140 = arith.constant 9 : index
    %c0_141 = arith.constant 0 : index
    %c0_142 = arith.constant 0 : index
    %273 = vector.load %arg3[%c9_140, %c0_141, %c0_142] : memref<12x1x128xf32, #tpu.memory_space<vmem>>, vector<1x1x128xf32>
    %274 = vector.shape_cast %273 : vector<1x1x128xf32> to vector<1x128xf32>
    %c45 = arith.constant 45 : index
    %275 = memref.load %arg1[%c45] : memref<324xf32, #tpu.memory_space<smem>>
    %276 = vector.broadcast %275 : f32 to vector<1x128xf32>
    %277 = arith.mulf %276, %274 : vector<1x128xf32>
    %c10_143 = arith.constant 10 : index
    %c0_144 = arith.constant 0 : index
    %c0_145 = arith.constant 0 : index
    %278 = vector.load %arg3[%c10_143, %c0_144, %c0_145] : memref<12x1x128xf32, #tpu.memory_space<vmem>>, vector<1x1x128xf32>
    %279 = vector.shape_cast %278 : vector<1x1x128xf32> to vector<1x128xf32>
    %c46 = arith.constant 46 : index
    %280 = memref.load %arg1[%c46] : memref<324xf32, #tpu.memory_space<smem>>
    %281 = vector.broadcast %280 : f32 to vector<1x128xf32>
    %282 = arith.mulf %281, %279 : vector<1x128xf32>
    %c11_146 = arith.constant 11 : index
    %c0_147 = arith.constant 0 : index
    %c0_148 = arith.constant 0 : index
    %283 = vector.load %arg3[%c11_146, %c0_147, %c0_148] : memref<12x1x128xf32, #tpu.memory_space<vmem>>, vector<1x1x128xf32>
    %284 = vector.shape_cast %283 : vector<1x1x128xf32> to vector<1x128xf32>
    %c47 = arith.constant 47 : index
    %285 = memref.load %arg1[%c47] : memref<324xf32, #tpu.memory_space<smem>>
    %286 = vector.broadcast %285 : f32 to vector<1x128xf32>
    %287 = arith.mulf %286, %284 : vector<1x128xf32>
    %288 = arith.addf %232, %242 : vector<1x128xf32>
    %289 = arith.addf %288, %252 : vector<1x128xf32>
    %290 = arith.addf %289, %262 : vector<1x128xf32>
    %291 = arith.addf %290, %272 : vector<1x128xf32>
    %292 = arith.addf %291, %282 : vector<1x128xf32>
    %293 = arith.addf %237, %247 : vector<1x128xf32>
    %294 = arith.addf %293, %257 : vector<1x128xf32>
    %295 = arith.addf %294, %267 : vector<1x128xf32>
    %296 = arith.addf %295, %277 : vector<1x128xf32>
    %297 = arith.addf %296, %287 : vector<1x128xf32>
    %298 = arith.addf %292, %297 : vector<1x128xf32>
    %c3_149 = arith.constant 3 : index
    %299 = memref.load %arg2[%c3_149] : memref<43xf32, #tpu.memory_space<smem>>
    %300 = vector.broadcast %299 : f32 to vector<1x128xf32>
    %301 = arith.addf %298, %300 : vector<1x128xf32>
    %cst_150 = arith.constant 0.000000e+00 : f32
    %302 = vector.broadcast %cst_150 : f32 to vector<1x128xf32>
    %303 = arith.maximumf %301, %302 : vector<1x128xf32>
    %c0_151 = arith.constant 0 : index
    %c0_152 = arith.constant 0 : index
    %c0_153 = arith.constant 0 : index
    %304 = vector.load %arg3[%c0_151, %c0_152, %c0_153] : memref<12x1x128xf32, #tpu.memory_space<vmem>>, vector<1x1x128xf32>
    %305 = vector.shape_cast %304 : vector<1x1x128xf32> to vector<1x128xf32>
    %c48 = arith.constant 48 : index
    %306 = memref.load %arg1[%c48] : memref<324xf32, #tpu.memory_space<smem>>
    %307 = vector.broadcast %306 : f32 to vector<1x128xf32>
    %308 = arith.mulf %307, %305 : vector<1x128xf32>
    %c1_154 = arith.constant 1 : index
    %c0_155 = arith.constant 0 : index
    %c0_156 = arith.constant 0 : index
    %309 = vector.load %arg3[%c1_154, %c0_155, %c0_156] : memref<12x1x128xf32, #tpu.memory_space<vmem>>, vector<1x1x128xf32>
    %310 = vector.shape_cast %309 : vector<1x1x128xf32> to vector<1x128xf32>
    %c49 = arith.constant 49 : index
    %311 = memref.load %arg1[%c49] : memref<324xf32, #tpu.memory_space<smem>>
    %312 = vector.broadcast %311 : f32 to vector<1x128xf32>
    %313 = arith.mulf %312, %310 : vector<1x128xf32>
    %c2_157 = arith.constant 2 : index
    %c0_158 = arith.constant 0 : index
    %c0_159 = arith.constant 0 : index
    %314 = vector.load %arg3[%c2_157, %c0_158, %c0_159] : memref<12x1x128xf32, #tpu.memory_space<vmem>>, vector<1x1x128xf32>
    %315 = vector.shape_cast %314 : vector<1x1x128xf32> to vector<1x128xf32>
    %c50 = arith.constant 50 : index
    %316 = memref.load %arg1[%c50] : memref<324xf32, #tpu.memory_space<smem>>
    %317 = vector.broadcast %316 : f32 to vector<1x128xf32>
    %318 = arith.mulf %317, %315 : vector<1x128xf32>
    %c3_160 = arith.constant 3 : index
    %c0_161 = arith.constant 0 : index
    %c0_162 = arith.constant 0 : index
    %319 = vector.load %arg3[%c3_160, %c0_161, %c0_162] : memref<12x1x128xf32, #tpu.memory_space<vmem>>, vector<1x1x128xf32>
    %320 = vector.shape_cast %319 : vector<1x1x128xf32> to vector<1x128xf32>
    %c51 = arith.constant 51 : index
    %321 = memref.load %arg1[%c51] : memref<324xf32, #tpu.memory_space<smem>>
    %322 = vector.broadcast %321 : f32 to vector<1x128xf32>
    %323 = arith.mulf %322, %320 : vector<1x128xf32>
    %c4_163 = arith.constant 4 : index
    %c0_164 = arith.constant 0 : index
    %c0_165 = arith.constant 0 : index
    %324 = vector.load %arg3[%c4_163, %c0_164, %c0_165] : memref<12x1x128xf32, #tpu.memory_space<vmem>>, vector<1x1x128xf32>
    %325 = vector.shape_cast %324 : vector<1x1x128xf32> to vector<1x128xf32>
    %c52 = arith.constant 52 : index
    %326 = memref.load %arg1[%c52] : memref<324xf32, #tpu.memory_space<smem>>
    %327 = vector.broadcast %326 : f32 to vector<1x128xf32>
    %328 = arith.mulf %327, %325 : vector<1x128xf32>
    %c5_166 = arith.constant 5 : index
    %c0_167 = arith.constant 0 : index
    %c0_168 = arith.constant 0 : index
    %329 = vector.load %arg3[%c5_166, %c0_167, %c0_168] : memref<12x1x128xf32, #tpu.memory_space<vmem>>, vector<1x1x128xf32>
    %330 = vector.shape_cast %329 : vector<1x1x128xf32> to vector<1x128xf32>
    %c53 = arith.constant 53 : index
    %331 = memref.load %arg1[%c53] : memref<324xf32, #tpu.memory_space<smem>>
    %332 = vector.broadcast %331 : f32 to vector<1x128xf32>
    %333 = arith.mulf %332, %330 : vector<1x128xf32>
    %c6_169 = arith.constant 6 : index
    %c0_170 = arith.constant 0 : index
    %c0_171 = arith.constant 0 : index
    %334 = vector.load %arg3[%c6_169, %c0_170, %c0_171] : memref<12x1x128xf32, #tpu.memory_space<vmem>>, vector<1x1x128xf32>
    %335 = vector.shape_cast %334 : vector<1x1x128xf32> to vector<1x128xf32>
    %c54 = arith.constant 54 : index
    %336 = memref.load %arg1[%c54] : memref<324xf32, #tpu.memory_space<smem>>
    %337 = vector.broadcast %336 : f32 to vector<1x128xf32>
    %338 = arith.mulf %337, %335 : vector<1x128xf32>
    %c7_172 = arith.constant 7 : index
    %c0_173 = arith.constant 0 : index
    %c0_174 = arith.constant 0 : index
    %339 = vector.load %arg3[%c7_172, %c0_173, %c0_174] : memref<12x1x128xf32, #tpu.memory_space<vmem>>, vector<1x1x128xf32>
    %340 = vector.shape_cast %339 : vector<1x1x128xf32> to vector<1x128xf32>
    %c55 = arith.constant 55 : index
    %341 = memref.load %arg1[%c55] : memref<324xf32, #tpu.memory_space<smem>>
    %342 = vector.broadcast %341 : f32 to vector<1x128xf32>
    %343 = arith.mulf %342, %340 : vector<1x128xf32>
    %c8_175 = arith.constant 8 : index
    %c0_176 = arith.constant 0 : index
    %c0_177 = arith.constant 0 : index
    %344 = vector.load %arg3[%c8_175, %c0_176, %c0_177] : memref<12x1x128xf32, #tpu.memory_space<vmem>>, vector<1x1x128xf32>
    %345 = vector.shape_cast %344 : vector<1x1x128xf32> to vector<1x128xf32>
    %c56 = arith.constant 56 : index
    %346 = memref.load %arg1[%c56] : memref<324xf32, #tpu.memory_space<smem>>
    %347 = vector.broadcast %346 : f32 to vector<1x128xf32>
    %348 = arith.mulf %347, %345 : vector<1x128xf32>
    %c9_178 = arith.constant 9 : index
    %c0_179 = arith.constant 0 : index
    %c0_180 = arith.constant 0 : index
    %349 = vector.load %arg3[%c9_178, %c0_179, %c0_180] : memref<12x1x128xf32, #tpu.memory_space<vmem>>, vector<1x1x128xf32>
    %350 = vector.shape_cast %349 : vector<1x1x128xf32> to vector<1x128xf32>
    %c57 = arith.constant 57 : index
    %351 = memref.load %arg1[%c57] : memref<324xf32, #tpu.memory_space<smem>>
    %352 = vector.broadcast %351 : f32 to vector<1x128xf32>
    %353 = arith.mulf %352, %350 : vector<1x128xf32>
    %c10_181 = arith.constant 10 : index
    %c0_182 = arith.constant 0 : index
    %c0_183 = arith.constant 0 : index
    %354 = vector.load %arg3[%c10_181, %c0_182, %c0_183] : memref<12x1x128xf32, #tpu.memory_space<vmem>>, vector<1x1x128xf32>
    %355 = vector.shape_cast %354 : vector<1x1x128xf32> to vector<1x128xf32>
    %c58 = arith.constant 58 : index
    %356 = memref.load %arg1[%c58] : memref<324xf32, #tpu.memory_space<smem>>
    %357 = vector.broadcast %356 : f32 to vector<1x128xf32>
    %358 = arith.mulf %357, %355 : vector<1x128xf32>
    %c11_184 = arith.constant 11 : index
    %c0_185 = arith.constant 0 : index
    %c0_186 = arith.constant 0 : index
    %359 = vector.load %arg3[%c11_184, %c0_185, %c0_186] : memref<12x1x128xf32, #tpu.memory_space<vmem>>, vector<1x1x128xf32>
    %360 = vector.shape_cast %359 : vector<1x1x128xf32> to vector<1x128xf32>
    %c59 = arith.constant 59 : index
    %361 = memref.load %arg1[%c59] : memref<324xf32, #tpu.memory_space<smem>>
    %362 = vector.broadcast %361 : f32 to vector<1x128xf32>
    %363 = arith.mulf %362, %360 : vector<1x128xf32>
    %364 = arith.addf %308, %318 : vector<1x128xf32>
    %365 = arith.addf %364, %328 : vector<1x128xf32>
    %366 = arith.addf %365, %338 : vector<1x128xf32>
    %367 = arith.addf %366, %348 : vector<1x128xf32>
    %368 = arith.addf %367, %358 : vector<1x128xf32>
    %369 = arith.addf %313, %323 : vector<1x128xf32>
    %370 = arith.addf %369, %333 : vector<1x128xf32>
    %371 = arith.addf %370, %343 : vector<1x128xf32>
    %372 = arith.addf %371, %353 : vector<1x128xf32>
    %373 = arith.addf %372, %363 : vector<1x128xf32>
    %374 = arith.addf %368, %373 : vector<1x128xf32>
    %c4_187 = arith.constant 4 : index
    %375 = memref.load %arg2[%c4_187] : memref<43xf32, #tpu.memory_space<smem>>
    %376 = vector.broadcast %375 : f32 to vector<1x128xf32>
    %377 = arith.addf %374, %376 : vector<1x128xf32>
    %cst_188 = arith.constant 0.000000e+00 : f32
    %378 = vector.broadcast %cst_188 : f32 to vector<1x128xf32>
    %379 = arith.maximumf %377, %378 : vector<1x128xf32>
    %c0_189 = arith.constant 0 : index
    %c0_190 = arith.constant 0 : index
    %c0_191 = arith.constant 0 : index
    %380 = vector.load %arg3[%c0_189, %c0_190, %c0_191] : memref<12x1x128xf32, #tpu.memory_space<vmem>>, vector<1x1x128xf32>
    %381 = vector.shape_cast %380 : vector<1x1x128xf32> to vector<1x128xf32>
    %c60 = arith.constant 60 : index
    %382 = memref.load %arg1[%c60] : memref<324xf32, #tpu.memory_space<smem>>
    %383 = vector.broadcast %382 : f32 to vector<1x128xf32>
    %384 = arith.mulf %383, %381 : vector<1x128xf32>
    %c1_192 = arith.constant 1 : index
    %c0_193 = arith.constant 0 : index
    %c0_194 = arith.constant 0 : index
    %385 = vector.load %arg3[%c1_192, %c0_193, %c0_194] : memref<12x1x128xf32, #tpu.memory_space<vmem>>, vector<1x1x128xf32>
    %386 = vector.shape_cast %385 : vector<1x1x128xf32> to vector<1x128xf32>
    %c61 = arith.constant 61 : index
    %387 = memref.load %arg1[%c61] : memref<324xf32, #tpu.memory_space<smem>>
    %388 = vector.broadcast %387 : f32 to vector<1x128xf32>
    %389 = arith.mulf %388, %386 : vector<1x128xf32>
    %c2_195 = arith.constant 2 : index
    %c0_196 = arith.constant 0 : index
    %c0_197 = arith.constant 0 : index
    %390 = vector.load %arg3[%c2_195, %c0_196, %c0_197] : memref<12x1x128xf32, #tpu.memory_space<vmem>>, vector<1x1x128xf32>
    %391 = vector.shape_cast %390 : vector<1x1x128xf32> to vector<1x128xf32>
    %c62 = arith.constant 62 : index
    %392 = memref.load %arg1[%c62] : memref<324xf32, #tpu.memory_space<smem>>
    %393 = vector.broadcast %392 : f32 to vector<1x128xf32>
    %394 = arith.mulf %393, %391 : vector<1x128xf32>
    %c3_198 = arith.constant 3 : index
    %c0_199 = arith.constant 0 : index
    %c0_200 = arith.constant 0 : index
    %395 = vector.load %arg3[%c3_198, %c0_199, %c0_200] : memref<12x1x128xf32, #tpu.memory_space<vmem>>, vector<1x1x128xf32>
    %396 = vector.shape_cast %395 : vector<1x1x128xf32> to vector<1x128xf32>
    %c63 = arith.constant 63 : index
    %397 = memref.load %arg1[%c63] : memref<324xf32, #tpu.memory_space<smem>>
    %398 = vector.broadcast %397 : f32 to vector<1x128xf32>
    %399 = arith.mulf %398, %396 : vector<1x128xf32>
    %c4_201 = arith.constant 4 : index
    %c0_202 = arith.constant 0 : index
    %c0_203 = arith.constant 0 : index
    %400 = vector.load %arg3[%c4_201, %c0_202, %c0_203] : memref<12x1x128xf32, #tpu.memory_space<vmem>>, vector<1x1x128xf32>
    %401 = vector.shape_cast %400 : vector<1x1x128xf32> to vector<1x128xf32>
    %c64 = arith.constant 64 : index
    %402 = memref.load %arg1[%c64] : memref<324xf32, #tpu.memory_space<smem>>
    %403 = vector.broadcast %402 : f32 to vector<1x128xf32>
    %404 = arith.mulf %403, %401 : vector<1x128xf32>
    %c5_204 = arith.constant 5 : index
    %c0_205 = arith.constant 0 : index
    %c0_206 = arith.constant 0 : index
    %405 = vector.load %arg3[%c5_204, %c0_205, %c0_206] : memref<12x1x128xf32, #tpu.memory_space<vmem>>, vector<1x1x128xf32>
    %406 = vector.shape_cast %405 : vector<1x1x128xf32> to vector<1x128xf32>
    %c65 = arith.constant 65 : index
    %407 = memref.load %arg1[%c65] : memref<324xf32, #tpu.memory_space<smem>>
    %408 = vector.broadcast %407 : f32 to vector<1x128xf32>
    %409 = arith.mulf %408, %406 : vector<1x128xf32>
    %c6_207 = arith.constant 6 : index
    %c0_208 = arith.constant 0 : index
    %c0_209 = arith.constant 0 : index
    %410 = vector.load %arg3[%c6_207, %c0_208, %c0_209] : memref<12x1x128xf32, #tpu.memory_space<vmem>>, vector<1x1x128xf32>
    %411 = vector.shape_cast %410 : vector<1x1x128xf32> to vector<1x128xf32>
    %c66 = arith.constant 66 : index
    %412 = memref.load %arg1[%c66] : memref<324xf32, #tpu.memory_space<smem>>
    %413 = vector.broadcast %412 : f32 to vector<1x128xf32>
    %414 = arith.mulf %413, %411 : vector<1x128xf32>
    %c7_210 = arith.constant 7 : index
    %c0_211 = arith.constant 0 : index
    %c0_212 = arith.constant 0 : index
    %415 = vector.load %arg3[%c7_210, %c0_211, %c0_212] : memref<12x1x128xf32, #tpu.memory_space<vmem>>, vector<1x1x128xf32>
    %416 = vector.shape_cast %415 : vector<1x1x128xf32> to vector<1x128xf32>
    %c67 = arith.constant 67 : index
    %417 = memref.load %arg1[%c67] : memref<324xf32, #tpu.memory_space<smem>>
    %418 = vector.broadcast %417 : f32 to vector<1x128xf32>
    %419 = arith.mulf %418, %416 : vector<1x128xf32>
    %c8_213 = arith.constant 8 : index
    %c0_214 = arith.constant 0 : index
    %c0_215 = arith.constant 0 : index
    %420 = vector.load %arg3[%c8_213, %c0_214, %c0_215] : memref<12x1x128xf32, #tpu.memory_space<vmem>>, vector<1x1x128xf32>
    %421 = vector.shape_cast %420 : vector<1x1x128xf32> to vector<1x128xf32>
    %c68 = arith.constant 68 : index
    %422 = memref.load %arg1[%c68] : memref<324xf32, #tpu.memory_space<smem>>
    %423 = vector.broadcast %422 : f32 to vector<1x128xf32>
    %424 = arith.mulf %423, %421 : vector<1x128xf32>
    %c9_216 = arith.constant 9 : index
    %c0_217 = arith.constant 0 : index
    %c0_218 = arith.constant 0 : index
    %425 = vector.load %arg3[%c9_216, %c0_217, %c0_218] : memref<12x1x128xf32, #tpu.memory_space<vmem>>, vector<1x1x128xf32>
    %426 = vector.shape_cast %425 : vector<1x1x128xf32> to vector<1x128xf32>
    %c69 = arith.constant 69 : index
    %427 = memref.load %arg1[%c69] : memref<324xf32, #tpu.memory_space<smem>>
    %428 = vector.broadcast %427 : f32 to vector<1x128xf32>
    %429 = arith.mulf %428, %426 : vector<1x128xf32>
    %c10_219 = arith.constant 10 : index
    %c0_220 = arith.constant 0 : index
    %c0_221 = arith.constant 0 : index
    %430 = vector.load %arg3[%c10_219, %c0_220, %c0_221] : memref<12x1x128xf32, #tpu.memory_space<vmem>>, vector<1x1x128xf32>
    %431 = vector.shape_cast %430 : vector<1x1x128xf32> to vector<1x128xf32>
    %c70 = arith.constant 70 : index
    %432 = memref.load %arg1[%c70] : memref<324xf32, #tpu.memory_space<smem>>
    %433 = vector.broadcast %432 : f32 to vector<1x128xf32>
    %434 = arith.mulf %433, %431 : vector<1x128xf32>
    %c11_222 = arith.constant 11 : index
    %c0_223 = arith.constant 0 : index
    %c0_224 = arith.constant 0 : index
    %435 = vector.load %arg3[%c11_222, %c0_223, %c0_224] : memref<12x1x128xf32, #tpu.memory_space<vmem>>, vector<1x1x128xf32>
    %436 = vector.shape_cast %435 : vector<1x1x128xf32> to vector<1x128xf32>
    %c71 = arith.constant 71 : index
    %437 = memref.load %arg1[%c71] : memref<324xf32, #tpu.memory_space<smem>>
    %438 = vector.broadcast %437 : f32 to vector<1x128xf32>
    %439 = arith.mulf %438, %436 : vector<1x128xf32>
    %440 = arith.addf %384, %394 : vector<1x128xf32>
    %441 = arith.addf %440, %404 : vector<1x128xf32>
    %442 = arith.addf %441, %414 : vector<1x128xf32>
    %443 = arith.addf %442, %424 : vector<1x128xf32>
    %444 = arith.addf %443, %434 : vector<1x128xf32>
    %445 = arith.addf %389, %399 : vector<1x128xf32>
    %446 = arith.addf %445, %409 : vector<1x128xf32>
    %447 = arith.addf %446, %419 : vector<1x128xf32>
    %448 = arith.addf %447, %429 : vector<1x128xf32>
    %449 = arith.addf %448, %439 : vector<1x128xf32>
    %450 = arith.addf %444, %449 : vector<1x128xf32>
    %c5_225 = arith.constant 5 : index
    %451 = memref.load %arg2[%c5_225] : memref<43xf32, #tpu.memory_space<smem>>
    %452 = vector.broadcast %451 : f32 to vector<1x128xf32>
    %453 = arith.addf %450, %452 : vector<1x128xf32>
    %cst_226 = arith.constant 0.000000e+00 : f32
    %454 = vector.broadcast %cst_226 : f32 to vector<1x128xf32>
    %455 = arith.maximumf %453, %454 : vector<1x128xf32>
    %c0_227 = arith.constant 0 : index
    %c0_228 = arith.constant 0 : index
    %c0_229 = arith.constant 0 : index
    %456 = vector.load %arg3[%c0_227, %c0_228, %c0_229] : memref<12x1x128xf32, #tpu.memory_space<vmem>>, vector<1x1x128xf32>
    %457 = vector.shape_cast %456 : vector<1x1x128xf32> to vector<1x128xf32>
    %c72 = arith.constant 72 : index
    %458 = memref.load %arg1[%c72] : memref<324xf32, #tpu.memory_space<smem>>
    %459 = vector.broadcast %458 : f32 to vector<1x128xf32>
    %460 = arith.mulf %459, %457 : vector<1x128xf32>
    %c1_230 = arith.constant 1 : index
    %c0_231 = arith.constant 0 : index
    %c0_232 = arith.constant 0 : index
    %461 = vector.load %arg3[%c1_230, %c0_231, %c0_232] : memref<12x1x128xf32, #tpu.memory_space<vmem>>, vector<1x1x128xf32>
    %462 = vector.shape_cast %461 : vector<1x1x128xf32> to vector<1x128xf32>
    %c73 = arith.constant 73 : index
    %463 = memref.load %arg1[%c73] : memref<324xf32, #tpu.memory_space<smem>>
    %464 = vector.broadcast %463 : f32 to vector<1x128xf32>
    %465 = arith.mulf %464, %462 : vector<1x128xf32>
    %c2_233 = arith.constant 2 : index
    %c0_234 = arith.constant 0 : index
    %c0_235 = arith.constant 0 : index
    %466 = vector.load %arg3[%c2_233, %c0_234, %c0_235] : memref<12x1x128xf32, #tpu.memory_space<vmem>>, vector<1x1x128xf32>
    %467 = vector.shape_cast %466 : vector<1x1x128xf32> to vector<1x128xf32>
    %c74 = arith.constant 74 : index
    %468 = memref.load %arg1[%c74] : memref<324xf32, #tpu.memory_space<smem>>
    %469 = vector.broadcast %468 : f32 to vector<1x128xf32>
    %470 = arith.mulf %469, %467 : vector<1x128xf32>
    %c3_236 = arith.constant 3 : index
    %c0_237 = arith.constant 0 : index
    %c0_238 = arith.constant 0 : index
    %471 = vector.load %arg3[%c3_236, %c0_237, %c0_238] : memref<12x1x128xf32, #tpu.memory_space<vmem>>, vector<1x1x128xf32>
    %472 = vector.shape_cast %471 : vector<1x1x128xf32> to vector<1x128xf32>
    %c75 = arith.constant 75 : index
    %473 = memref.load %arg1[%c75] : memref<324xf32, #tpu.memory_space<smem>>
    %474 = vector.broadcast %473 : f32 to vector<1x128xf32>
    %475 = arith.mulf %474, %472 : vector<1x128xf32>
    %c4_239 = arith.constant 4 : index
    %c0_240 = arith.constant 0 : index
    %c0_241 = arith.constant 0 : index
    %476 = vector.load %arg3[%c4_239, %c0_240, %c0_241] : memref<12x1x128xf32, #tpu.memory_space<vmem>>, vector<1x1x128xf32>
    %477 = vector.shape_cast %476 : vector<1x1x128xf32> to vector<1x128xf32>
    %c76 = arith.constant 76 : index
    %478 = memref.load %arg1[%c76] : memref<324xf32, #tpu.memory_space<smem>>
    %479 = vector.broadcast %478 : f32 to vector<1x128xf32>
    %480 = arith.mulf %479, %477 : vector<1x128xf32>
    %c5_242 = arith.constant 5 : index
    %c0_243 = arith.constant 0 : index
    %c0_244 = arith.constant 0 : index
    %481 = vector.load %arg3[%c5_242, %c0_243, %c0_244] : memref<12x1x128xf32, #tpu.memory_space<vmem>>, vector<1x1x128xf32>
    %482 = vector.shape_cast %481 : vector<1x1x128xf32> to vector<1x128xf32>
    %c77 = arith.constant 77 : index
    %483 = memref.load %arg1[%c77] : memref<324xf32, #tpu.memory_space<smem>>
    %484 = vector.broadcast %483 : f32 to vector<1x128xf32>
    %485 = arith.mulf %484, %482 : vector<1x128xf32>
    %c6_245 = arith.constant 6 : index
    %c0_246 = arith.constant 0 : index
    %c0_247 = arith.constant 0 : index
    %486 = vector.load %arg3[%c6_245, %c0_246, %c0_247] : memref<12x1x128xf32, #tpu.memory_space<vmem>>, vector<1x1x128xf32>
    %487 = vector.shape_cast %486 : vector<1x1x128xf32> to vector<1x128xf32>
    %c78 = arith.constant 78 : index
    %488 = memref.load %arg1[%c78] : memref<324xf32, #tpu.memory_space<smem>>
    %489 = vector.broadcast %488 : f32 to vector<1x128xf32>
    %490 = arith.mulf %489, %487 : vector<1x128xf32>
    %c7_248 = arith.constant 7 : index
    %c0_249 = arith.constant 0 : index
    %c0_250 = arith.constant 0 : index
    %491 = vector.load %arg3[%c7_248, %c0_249, %c0_250] : memref<12x1x128xf32, #tpu.memory_space<vmem>>, vector<1x1x128xf32>
    %492 = vector.shape_cast %491 : vector<1x1x128xf32> to vector<1x128xf32>
    %c79 = arith.constant 79 : index
    %493 = memref.load %arg1[%c79] : memref<324xf32, #tpu.memory_space<smem>>
    %494 = vector.broadcast %493 : f32 to vector<1x128xf32>
    %495 = arith.mulf %494, %492 : vector<1x128xf32>
    %c8_251 = arith.constant 8 : index
    %c0_252 = arith.constant 0 : index
    %c0_253 = arith.constant 0 : index
    %496 = vector.load %arg3[%c8_251, %c0_252, %c0_253] : memref<12x1x128xf32, #tpu.memory_space<vmem>>, vector<1x1x128xf32>
    %497 = vector.shape_cast %496 : vector<1x1x128xf32> to vector<1x128xf32>
    %c80 = arith.constant 80 : index
    %498 = memref.load %arg1[%c80] : memref<324xf32, #tpu.memory_space<smem>>
    %499 = vector.broadcast %498 : f32 to vector<1x128xf32>
    %500 = arith.mulf %499, %497 : vector<1x128xf32>
    %c9_254 = arith.constant 9 : index
    %c0_255 = arith.constant 0 : index
    %c0_256 = arith.constant 0 : index
    %501 = vector.load %arg3[%c9_254, %c0_255, %c0_256] : memref<12x1x128xf32, #tpu.memory_space<vmem>>, vector<1x1x128xf32>
    %502 = vector.shape_cast %501 : vector<1x1x128xf32> to vector<1x128xf32>
    %c81 = arith.constant 81 : index
    %503 = memref.load %arg1[%c81] : memref<324xf32, #tpu.memory_space<smem>>
    %504 = vector.broadcast %503 : f32 to vector<1x128xf32>
    %505 = arith.mulf %504, %502 : vector<1x128xf32>
    %c10_257 = arith.constant 10 : index
    %c0_258 = arith.constant 0 : index
    %c0_259 = arith.constant 0 : index
    %506 = vector.load %arg3[%c10_257, %c0_258, %c0_259] : memref<12x1x128xf32, #tpu.memory_space<vmem>>, vector<1x1x128xf32>
    %507 = vector.shape_cast %506 : vector<1x1x128xf32> to vector<1x128xf32>
    %c82 = arith.constant 82 : index
    %508 = memref.load %arg1[%c82] : memref<324xf32, #tpu.memory_space<smem>>
    %509 = vector.broadcast %508 : f32 to vector<1x128xf32>
    %510 = arith.mulf %509, %507 : vector<1x128xf32>
    %c11_260 = arith.constant 11 : index
    %c0_261 = arith.constant 0 : index
    %c0_262 = arith.constant 0 : index
    %511 = vector.load %arg3[%c11_260, %c0_261, %c0_262] : memref<12x1x128xf32, #tpu.memory_space<vmem>>, vector<1x1x128xf32>
    %512 = vector.shape_cast %511 : vector<1x1x128xf32> to vector<1x128xf32>
    %c83 = arith.constant 83 : index
    %513 = memref.load %arg1[%c83] : memref<324xf32, #tpu.memory_space<smem>>
    %514 = vector.broadcast %513 : f32 to vector<1x128xf32>
    %515 = arith.mulf %514, %512 : vector<1x128xf32>
    %516 = arith.addf %460, %470 : vector<1x128xf32>
    %517 = arith.addf %516, %480 : vector<1x128xf32>
    %518 = arith.addf %517, %490 : vector<1x128xf32>
    %519 = arith.addf %518, %500 : vector<1x128xf32>
    %520 = arith.addf %519, %510 : vector<1x128xf32>
    %521 = arith.addf %465, %475 : vector<1x128xf32>
    %522 = arith.addf %521, %485 : vector<1x128xf32>
    %523 = arith.addf %522, %495 : vector<1x128xf32>
    %524 = arith.addf %523, %505 : vector<1x128xf32>
    %525 = arith.addf %524, %515 : vector<1x128xf32>
    %526 = arith.addf %520, %525 : vector<1x128xf32>
    %c6_263 = arith.constant 6 : index
    %527 = memref.load %arg2[%c6_263] : memref<43xf32, #tpu.memory_space<smem>>
    %528 = vector.broadcast %527 : f32 to vector<1x128xf32>
    %529 = arith.addf %526, %528 : vector<1x128xf32>
    %cst_264 = arith.constant 0.000000e+00 : f32
    %530 = vector.broadcast %cst_264 : f32 to vector<1x128xf32>
    %531 = arith.maximumf %529, %530 : vector<1x128xf32>
    %c0_265 = arith.constant 0 : index
    %c0_266 = arith.constant 0 : index
    %c0_267 = arith.constant 0 : index
    %532 = vector.load %arg3[%c0_265, %c0_266, %c0_267] : memref<12x1x128xf32, #tpu.memory_space<vmem>>, vector<1x1x128xf32>
    %533 = vector.shape_cast %532 : vector<1x1x128xf32> to vector<1x128xf32>
    %c84 = arith.constant 84 : index
    %534 = memref.load %arg1[%c84] : memref<324xf32, #tpu.memory_space<smem>>
    %535 = vector.broadcast %534 : f32 to vector<1x128xf32>
    %536 = arith.mulf %535, %533 : vector<1x128xf32>
    %c1_268 = arith.constant 1 : index
    %c0_269 = arith.constant 0 : index
    %c0_270 = arith.constant 0 : index
    %537 = vector.load %arg3[%c1_268, %c0_269, %c0_270] : memref<12x1x128xf32, #tpu.memory_space<vmem>>, vector<1x1x128xf32>
    %538 = vector.shape_cast %537 : vector<1x1x128xf32> to vector<1x128xf32>
    %c85 = arith.constant 85 : index
    %539 = memref.load %arg1[%c85] : memref<324xf32, #tpu.memory_space<smem>>
    %540 = vector.broadcast %539 : f32 to vector<1x128xf32>
    %541 = arith.mulf %540, %538 : vector<1x128xf32>
    %c2_271 = arith.constant 2 : index
    %c0_272 = arith.constant 0 : index
    %c0_273 = arith.constant 0 : index
    %542 = vector.load %arg3[%c2_271, %c0_272, %c0_273] : memref<12x1x128xf32, #tpu.memory_space<vmem>>, vector<1x1x128xf32>
    %543 = vector.shape_cast %542 : vector<1x1x128xf32> to vector<1x128xf32>
    %c86 = arith.constant 86 : index
    %544 = memref.load %arg1[%c86] : memref<324xf32, #tpu.memory_space<smem>>
    %545 = vector.broadcast %544 : f32 to vector<1x128xf32>
    %546 = arith.mulf %545, %543 : vector<1x128xf32>
    %c3_274 = arith.constant 3 : index
    %c0_275 = arith.constant 0 : index
    %c0_276 = arith.constant 0 : index
    %547 = vector.load %arg3[%c3_274, %c0_275, %c0_276] : memref<12x1x128xf32, #tpu.memory_space<vmem>>, vector<1x1x128xf32>
    %548 = vector.shape_cast %547 : vector<1x1x128xf32> to vector<1x128xf32>
    %c87 = arith.constant 87 : index
    %549 = memref.load %arg1[%c87] : memref<324xf32, #tpu.memory_space<smem>>
    %550 = vector.broadcast %549 : f32 to vector<1x128xf32>
    %551 = arith.mulf %550, %548 : vector<1x128xf32>
    %c4_277 = arith.constant 4 : index
    %c0_278 = arith.constant 0 : index
    %c0_279 = arith.constant 0 : index
    %552 = vector.load %arg3[%c4_277, %c0_278, %c0_279] : memref<12x1x128xf32, #tpu.memory_space<vmem>>, vector<1x1x128xf32>
    %553 = vector.shape_cast %552 : vector<1x1x128xf32> to vector<1x128xf32>
    %c88 = arith.constant 88 : index
    %554 = memref.load %arg1[%c88] : memref<324xf32, #tpu.memory_space<smem>>
    %555 = vector.broadcast %554 : f32 to vector<1x128xf32>
    %556 = arith.mulf %555, %553 : vector<1x128xf32>
    %c5_280 = arith.constant 5 : index
    %c0_281 = arith.constant 0 : index
    %c0_282 = arith.constant 0 : index
    %557 = vector.load %arg3[%c5_280, %c0_281, %c0_282] : memref<12x1x128xf32, #tpu.memory_space<vmem>>, vector<1x1x128xf32>
    %558 = vector.shape_cast %557 : vector<1x1x128xf32> to vector<1x128xf32>
    %c89 = arith.constant 89 : index
    %559 = memref.load %arg1[%c89] : memref<324xf32, #tpu.memory_space<smem>>
    %560 = vector.broadcast %559 : f32 to vector<1x128xf32>
    %561 = arith.mulf %560, %558 : vector<1x128xf32>
    %c6_283 = arith.constant 6 : index
    %c0_284 = arith.constant 0 : index
    %c0_285 = arith.constant 0 : index
    %562 = vector.load %arg3[%c6_283, %c0_284, %c0_285] : memref<12x1x128xf32, #tpu.memory_space<vmem>>, vector<1x1x128xf32>
    %563 = vector.shape_cast %562 : vector<1x1x128xf32> to vector<1x128xf32>
    %c90 = arith.constant 90 : index
    %564 = memref.load %arg1[%c90] : memref<324xf32, #tpu.memory_space<smem>>
    %565 = vector.broadcast %564 : f32 to vector<1x128xf32>
    %566 = arith.mulf %565, %563 : vector<1x128xf32>
    %c7_286 = arith.constant 7 : index
    %c0_287 = arith.constant 0 : index
    %c0_288 = arith.constant 0 : index
    %567 = vector.load %arg3[%c7_286, %c0_287, %c0_288] : memref<12x1x128xf32, #tpu.memory_space<vmem>>, vector<1x1x128xf32>
    %568 = vector.shape_cast %567 : vector<1x1x128xf32> to vector<1x128xf32>
    %c91 = arith.constant 91 : index
    %569 = memref.load %arg1[%c91] : memref<324xf32, #tpu.memory_space<smem>>
    %570 = vector.broadcast %569 : f32 to vector<1x128xf32>
    %571 = arith.mulf %570, %568 : vector<1x128xf32>
    %c8_289 = arith.constant 8 : index
    %c0_290 = arith.constant 0 : index
    %c0_291 = arith.constant 0 : index
    %572 = vector.load %arg3[%c8_289, %c0_290, %c0_291] : memref<12x1x128xf32, #tpu.memory_space<vmem>>, vector<1x1x128xf32>
    %573 = vector.shape_cast %572 : vector<1x1x128xf32> to vector<1x128xf32>
    %c92 = arith.constant 92 : index
    %574 = memref.load %arg1[%c92] : memref<324xf32, #tpu.memory_space<smem>>
    %575 = vector.broadcast %574 : f32 to vector<1x128xf32>
    %576 = arith.mulf %575, %573 : vector<1x128xf32>
    %c9_292 = arith.constant 9 : index
    %c0_293 = arith.constant 0 : index
    %c0_294 = arith.constant 0 : index
    %577 = vector.load %arg3[%c9_292, %c0_293, %c0_294] : memref<12x1x128xf32, #tpu.memory_space<vmem>>, vector<1x1x128xf32>
    %578 = vector.shape_cast %577 : vector<1x1x128xf32> to vector<1x128xf32>
    %c93 = arith.constant 93 : index
    %579 = memref.load %arg1[%c93] : memref<324xf32, #tpu.memory_space<smem>>
    %580 = vector.broadcast %579 : f32 to vector<1x128xf32>
    %581 = arith.mulf %580, %578 : vector<1x128xf32>
    %c10_295 = arith.constant 10 : index
    %c0_296 = arith.constant 0 : index
    %c0_297 = arith.constant 0 : index
    %582 = vector.load %arg3[%c10_295, %c0_296, %c0_297] : memref<12x1x128xf32, #tpu.memory_space<vmem>>, vector<1x1x128xf32>
    %583 = vector.shape_cast %582 : vector<1x1x128xf32> to vector<1x128xf32>
    %c94 = arith.constant 94 : index
    %584 = memref.load %arg1[%c94] : memref<324xf32, #tpu.memory_space<smem>>
    %585 = vector.broadcast %584 : f32 to vector<1x128xf32>
    %586 = arith.mulf %585, %583 : vector<1x128xf32>
    %c11_298 = arith.constant 11 : index
    %c0_299 = arith.constant 0 : index
    %c0_300 = arith.constant 0 : index
    %587 = vector.load %arg3[%c11_298, %c0_299, %c0_300] : memref<12x1x128xf32, #tpu.memory_space<vmem>>, vector<1x1x128xf32>
    %588 = vector.shape_cast %587 : vector<1x1x128xf32> to vector<1x128xf32>
    %c95 = arith.constant 95 : index
    %589 = memref.load %arg1[%c95] : memref<324xf32, #tpu.memory_space<smem>>
    %590 = vector.broadcast %589 : f32 to vector<1x128xf32>
    %591 = arith.mulf %590, %588 : vector<1x128xf32>
    %592 = arith.addf %536, %546 : vector<1x128xf32>
    %593 = arith.addf %592, %556 : vector<1x128xf32>
    %594 = arith.addf %593, %566 : vector<1x128xf32>
    %595 = arith.addf %594, %576 : vector<1x128xf32>
    %596 = arith.addf %595, %586 : vector<1x128xf32>
    %597 = arith.addf %541, %551 : vector<1x128xf32>
    %598 = arith.addf %597, %561 : vector<1x128xf32>
    %599 = arith.addf %598, %571 : vector<1x128xf32>
    %600 = arith.addf %599, %581 : vector<1x128xf32>
    %601 = arith.addf %600, %591 : vector<1x128xf32>
    %602 = arith.addf %596, %601 : vector<1x128xf32>
    %c7_301 = arith.constant 7 : index
    %603 = memref.load %arg2[%c7_301] : memref<43xf32, #tpu.memory_space<smem>>
    %604 = vector.broadcast %603 : f32 to vector<1x128xf32>
    %605 = arith.addf %602, %604 : vector<1x128xf32>
    %cst_302 = arith.constant 0.000000e+00 : f32
    %606 = vector.broadcast %cst_302 : f32 to vector<1x128xf32>
    %607 = arith.maximumf %605, %606 : vector<1x128xf32>
    %c96 = arith.constant 96 : index
    %608 = memref.load %arg1[%c96] : memref<324xf32, #tpu.memory_space<smem>>
    %609 = vector.broadcast %608 : f32 to vector<1x128xf32>
    %610 = arith.mulf %609, %75 : vector<1x128xf32>
    %c97 = arith.constant 97 : index
    %611 = memref.load %arg1[%c97] : memref<324xf32, #tpu.memory_space<smem>>
    %612 = vector.broadcast %611 : f32 to vector<1x128xf32>
    %613 = arith.mulf %612, %151 : vector<1x128xf32>
    %c98 = arith.constant 98 : index
    %614 = memref.load %arg1[%c98] : memref<324xf32, #tpu.memory_space<smem>>
    %615 = vector.broadcast %614 : f32 to vector<1x128xf32>
    %616 = arith.mulf %615, %227 : vector<1x128xf32>
    %c99 = arith.constant 99 : index
    %617 = memref.load %arg1[%c99] : memref<324xf32, #tpu.memory_space<smem>>
    %618 = vector.broadcast %617 : f32 to vector<1x128xf32>
    %619 = arith.mulf %618, %303 : vector<1x128xf32>
    %c100 = arith.constant 100 : index
    %620 = memref.load %arg1[%c100] : memref<324xf32, #tpu.memory_space<smem>>
    %621 = vector.broadcast %620 : f32 to vector<1x128xf32>
    %622 = arith.mulf %621, %379 : vector<1x128xf32>
    %c101 = arith.constant 101 : index
    %623 = memref.load %arg1[%c101] : memref<324xf32, #tpu.memory_space<smem>>
    %624 = vector.broadcast %623 : f32 to vector<1x128xf32>
    %625 = arith.mulf %624, %455 : vector<1x128xf32>
    %c102 = arith.constant 102 : index
    %626 = memref.load %arg1[%c102] : memref<324xf32, #tpu.memory_space<smem>>
    %627 = vector.broadcast %626 : f32 to vector<1x128xf32>
    %628 = arith.mulf %627, %531 : vector<1x128xf32>
    %c103 = arith.constant 103 : index
    %629 = memref.load %arg1[%c103] : memref<324xf32, #tpu.memory_space<smem>>
    %630 = vector.broadcast %629 : f32 to vector<1x128xf32>
    %631 = arith.mulf %630, %607 : vector<1x128xf32>
    %632 = arith.addf %610, %616 : vector<1x128xf32>
    %633 = arith.addf %632, %622 : vector<1x128xf32>
    %634 = arith.addf %633, %628 : vector<1x128xf32>
    %635 = arith.addf %613, %619 : vector<1x128xf32>
    %636 = arith.addf %635, %625 : vector<1x128xf32>
    %637 = arith.addf %636, %631 : vector<1x128xf32>
    %638 = arith.addf %634, %637 : vector<1x128xf32>
    %c8_303 = arith.constant 8 : index
    %639 = memref.load %arg2[%c8_303] : memref<43xf32, #tpu.memory_space<smem>>
    %640 = vector.broadcast %639 : f32 to vector<1x128xf32>
    %641 = arith.addf %638, %640 : vector<1x128xf32>
    %cst_304 = arith.constant 0.000000e+00 : f32
    %642 = vector.broadcast %cst_304 : f32 to vector<1x128xf32>
    %643 = arith.maximumf %641, %642 : vector<1x128xf32>
    %c104 = arith.constant 104 : index
    %644 = memref.load %arg1[%c104] : memref<324xf32, #tpu.memory_space<smem>>
    %645 = vector.broadcast %644 : f32 to vector<1x128xf32>
    %646 = arith.mulf %645, %75 : vector<1x128xf32>
    %c105 = arith.constant 105 : index
    %647 = memref.load %arg1[%c105] : memref<324xf32, #tpu.memory_space<smem>>
    %648 = vector.broadcast %647 : f32 to vector<1x128xf32>
    %649 = arith.mulf %648, %151 : vector<1x128xf32>
    %c106 = arith.constant 106 : index
    %650 = memref.load %arg1[%c106] : memref<324xf32, #tpu.memory_space<smem>>
    %651 = vector.broadcast %650 : f32 to vector<1x128xf32>
    %652 = arith.mulf %651, %227 : vector<1x128xf32>
    %c107 = arith.constant 107 : index
    %653 = memref.load %arg1[%c107] : memref<324xf32, #tpu.memory_space<smem>>
    %654 = vector.broadcast %653 : f32 to vector<1x128xf32>
    %655 = arith.mulf %654, %303 : vector<1x128xf32>
    %c108 = arith.constant 108 : index
    %656 = memref.load %arg1[%c108] : memref<324xf32, #tpu.memory_space<smem>>
    %657 = vector.broadcast %656 : f32 to vector<1x128xf32>
    %658 = arith.mulf %657, %379 : vector<1x128xf32>
    %c109 = arith.constant 109 : index
    %659 = memref.load %arg1[%c109] : memref<324xf32, #tpu.memory_space<smem>>
    %660 = vector.broadcast %659 : f32 to vector<1x128xf32>
    %661 = arith.mulf %660, %455 : vector<1x128xf32>
    %c110 = arith.constant 110 : index
    %662 = memref.load %arg1[%c110] : memref<324xf32, #tpu.memory_space<smem>>
    %663 = vector.broadcast %662 : f32 to vector<1x128xf32>
    %664 = arith.mulf %663, %531 : vector<1x128xf32>
    %c111 = arith.constant 111 : index
    %665 = memref.load %arg1[%c111] : memref<324xf32, #tpu.memory_space<smem>>
    %666 = vector.broadcast %665 : f32 to vector<1x128xf32>
    %667 = arith.mulf %666, %607 : vector<1x128xf32>
    %668 = arith.addf %646, %652 : vector<1x128xf32>
    %669 = arith.addf %668, %658 : vector<1x128xf32>
    %670 = arith.addf %669, %664 : vector<1x128xf32>
    %671 = arith.addf %649, %655 : vector<1x128xf32>
    %672 = arith.addf %671, %661 : vector<1x128xf32>
    %673 = arith.addf %672, %667 : vector<1x128xf32>
    %674 = arith.addf %670, %673 : vector<1x128xf32>
    %c9_305 = arith.constant 9 : index
    %675 = memref.load %arg2[%c9_305] : memref<43xf32, #tpu.memory_space<smem>>
    %676 = vector.broadcast %675 : f32 to vector<1x128xf32>
    %677 = arith.addf %674, %676 : vector<1x128xf32>
    %cst_306 = arith.constant 0.000000e+00 : f32
    %678 = vector.broadcast %cst_306 : f32 to vector<1x128xf32>
    %679 = arith.maximumf %677, %678 : vector<1x128xf32>
    %c112 = arith.constant 112 : index
    %680 = memref.load %arg1[%c112] : memref<324xf32, #tpu.memory_space<smem>>
    %681 = vector.broadcast %680 : f32 to vector<1x128xf32>
    %682 = arith.mulf %681, %75 : vector<1x128xf32>
    %c113 = arith.constant 113 : index
    %683 = memref.load %arg1[%c113] : memref<324xf32, #tpu.memory_space<smem>>
    %684 = vector.broadcast %683 : f32 to vector<1x128xf32>
    %685 = arith.mulf %684, %151 : vector<1x128xf32>
    %c114 = arith.constant 114 : index
    %686 = memref.load %arg1[%c114] : memref<324xf32, #tpu.memory_space<smem>>
    %687 = vector.broadcast %686 : f32 to vector<1x128xf32>
    %688 = arith.mulf %687, %227 : vector<1x128xf32>
    %c115 = arith.constant 115 : index
    %689 = memref.load %arg1[%c115] : memref<324xf32, #tpu.memory_space<smem>>
    %690 = vector.broadcast %689 : f32 to vector<1x128xf32>
    %691 = arith.mulf %690, %303 : vector<1x128xf32>
    %c116 = arith.constant 116 : index
    %692 = memref.load %arg1[%c116] : memref<324xf32, #tpu.memory_space<smem>>
    %693 = vector.broadcast %692 : f32 to vector<1x128xf32>
    %694 = arith.mulf %693, %379 : vector<1x128xf32>
    %c117 = arith.constant 117 : index
    %695 = memref.load %arg1[%c117] : memref<324xf32, #tpu.memory_space<smem>>
    %696 = vector.broadcast %695 : f32 to vector<1x128xf32>
    %697 = arith.mulf %696, %455 : vector<1x128xf32>
    %c118 = arith.constant 118 : index
    %698 = memref.load %arg1[%c118] : memref<324xf32, #tpu.memory_space<smem>>
    %699 = vector.broadcast %698 : f32 to vector<1x128xf32>
    %700 = arith.mulf %699, %531 : vector<1x128xf32>
    %c119 = arith.constant 119 : index
    %701 = memref.load %arg1[%c119] : memref<324xf32, #tpu.memory_space<smem>>
    %702 = vector.broadcast %701 : f32 to vector<1x128xf32>
    %703 = arith.mulf %702, %607 : vector<1x128xf32>
    %704 = arith.addf %682, %688 : vector<1x128xf32>
    %705 = arith.addf %704, %694 : vector<1x128xf32>
    %706 = arith.addf %705, %700 : vector<1x128xf32>
    %707 = arith.addf %685, %691 : vector<1x128xf32>
    %708 = arith.addf %707, %697 : vector<1x128xf32>
    %709 = arith.addf %708, %703 : vector<1x128xf32>
    %710 = arith.addf %706, %709 : vector<1x128xf32>
    %c10_307 = arith.constant 10 : index
    %711 = memref.load %arg2[%c10_307] : memref<43xf32, #tpu.memory_space<smem>>
    %712 = vector.broadcast %711 : f32 to vector<1x128xf32>
    %713 = arith.addf %710, %712 : vector<1x128xf32>
    %cst_308 = arith.constant 0.000000e+00 : f32
    %714 = vector.broadcast %cst_308 : f32 to vector<1x128xf32>
    %715 = arith.maximumf %713, %714 : vector<1x128xf32>
    %c120 = arith.constant 120 : index
    %716 = memref.load %arg1[%c120] : memref<324xf32, #tpu.memory_space<smem>>
    %717 = vector.broadcast %716 : f32 to vector<1x128xf32>
    %718 = arith.mulf %717, %75 : vector<1x128xf32>
    %c121 = arith.constant 121 : index
    %719 = memref.load %arg1[%c121] : memref<324xf32, #tpu.memory_space<smem>>
    %720 = vector.broadcast %719 : f32 to vector<1x128xf32>
    %721 = arith.mulf %720, %151 : vector<1x128xf32>
    %c122 = arith.constant 122 : index
    %722 = memref.load %arg1[%c122] : memref<324xf32, #tpu.memory_space<smem>>
    %723 = vector.broadcast %722 : f32 to vector<1x128xf32>
    %724 = arith.mulf %723, %227 : vector<1x128xf32>
    %c123 = arith.constant 123 : index
    %725 = memref.load %arg1[%c123] : memref<324xf32, #tpu.memory_space<smem>>
    %726 = vector.broadcast %725 : f32 to vector<1x128xf32>
    %727 = arith.mulf %726, %303 : vector<1x128xf32>
    %c124 = arith.constant 124 : index
    %728 = memref.load %arg1[%c124] : memref<324xf32, #tpu.memory_space<smem>>
    %729 = vector.broadcast %728 : f32 to vector<1x128xf32>
    %730 = arith.mulf %729, %379 : vector<1x128xf32>
    %c125 = arith.constant 125 : index
    %731 = memref.load %arg1[%c125] : memref<324xf32, #tpu.memory_space<smem>>
    %732 = vector.broadcast %731 : f32 to vector<1x128xf32>
    %733 = arith.mulf %732, %455 : vector<1x128xf32>
    %c126 = arith.constant 126 : index
    %734 = memref.load %arg1[%c126] : memref<324xf32, #tpu.memory_space<smem>>
    %735 = vector.broadcast %734 : f32 to vector<1x128xf32>
    %736 = arith.mulf %735, %531 : vector<1x128xf32>
    %c127 = arith.constant 127 : index
    %737 = memref.load %arg1[%c127] : memref<324xf32, #tpu.memory_space<smem>>
    %738 = vector.broadcast %737 : f32 to vector<1x128xf32>
    %739 = arith.mulf %738, %607 : vector<1x128xf32>
    %740 = arith.addf %718, %724 : vector<1x128xf32>
    %741 = arith.addf %740, %730 : vector<1x128xf32>
    %742 = arith.addf %741, %736 : vector<1x128xf32>
    %743 = arith.addf %721, %727 : vector<1x128xf32>
    %744 = arith.addf %743, %733 : vector<1x128xf32>
    %745 = arith.addf %744, %739 : vector<1x128xf32>
    %746 = arith.addf %742, %745 : vector<1x128xf32>
    %c11_309 = arith.constant 11 : index
    %747 = memref.load %arg2[%c11_309] : memref<43xf32, #tpu.memory_space<smem>>
    %748 = vector.broadcast %747 : f32 to vector<1x128xf32>
    %749 = arith.addf %746, %748 : vector<1x128xf32>
    %cst_310 = arith.constant 0.000000e+00 : f32
    %750 = vector.broadcast %cst_310 : f32 to vector<1x128xf32>
    %751 = arith.maximumf %749, %750 : vector<1x128xf32>
    %c128 = arith.constant 128 : index
    %752 = memref.load %arg1[%c128] : memref<324xf32, #tpu.memory_space<smem>>
    %753 = vector.broadcast %752 : f32 to vector<1x128xf32>
    %754 = arith.mulf %753, %75 : vector<1x128xf32>
    %c129 = arith.constant 129 : index
    %755 = memref.load %arg1[%c129] : memref<324xf32, #tpu.memory_space<smem>>
    %756 = vector.broadcast %755 : f32 to vector<1x128xf32>
    %757 = arith.mulf %756, %151 : vector<1x128xf32>
    %c130 = arith.constant 130 : index
    %758 = memref.load %arg1[%c130] : memref<324xf32, #tpu.memory_space<smem>>
    %759 = vector.broadcast %758 : f32 to vector<1x128xf32>
    %760 = arith.mulf %759, %227 : vector<1x128xf32>
    %c131 = arith.constant 131 : index
    %761 = memref.load %arg1[%c131] : memref<324xf32, #tpu.memory_space<smem>>
    %762 = vector.broadcast %761 : f32 to vector<1x128xf32>
    %763 = arith.mulf %762, %303 : vector<1x128xf32>
    %c132 = arith.constant 132 : index
    %764 = memref.load %arg1[%c132] : memref<324xf32, #tpu.memory_space<smem>>
    %765 = vector.broadcast %764 : f32 to vector<1x128xf32>
    %766 = arith.mulf %765, %379 : vector<1x128xf32>
    %c133 = arith.constant 133 : index
    %767 = memref.load %arg1[%c133] : memref<324xf32, #tpu.memory_space<smem>>
    %768 = vector.broadcast %767 : f32 to vector<1x128xf32>
    %769 = arith.mulf %768, %455 : vector<1x128xf32>
    %c134 = arith.constant 134 : index
    %770 = memref.load %arg1[%c134] : memref<324xf32, #tpu.memory_space<smem>>
    %771 = vector.broadcast %770 : f32 to vector<1x128xf32>
    %772 = arith.mulf %771, %531 : vector<1x128xf32>
    %c135 = arith.constant 135 : index
    %773 = memref.load %arg1[%c135] : memref<324xf32, #tpu.memory_space<smem>>
    %774 = vector.broadcast %773 : f32 to vector<1x128xf32>
    %775 = arith.mulf %774, %607 : vector<1x128xf32>
    %776 = arith.addf %754, %760 : vector<1x128xf32>
    %777 = arith.addf %776, %766 : vector<1x128xf32>
    %778 = arith.addf %777, %772 : vector<1x128xf32>
    %779 = arith.addf %757, %763 : vector<1x128xf32>
    %780 = arith.addf %779, %769 : vector<1x128xf32>
    %781 = arith.addf %780, %775 : vector<1x128xf32>
    %782 = arith.addf %778, %781 : vector<1x128xf32>
    %c12_311 = arith.constant 12 : index
    %783 = memref.load %arg2[%c12_311] : memref<43xf32, #tpu.memory_space<smem>>
    %784 = vector.broadcast %783 : f32 to vector<1x128xf32>
    %785 = arith.addf %782, %784 : vector<1x128xf32>
    %cst_312 = arith.constant 0.000000e+00 : f32
    %786 = vector.broadcast %cst_312 : f32 to vector<1x128xf32>
    %787 = arith.maximumf %785, %786 : vector<1x128xf32>
    %c136 = arith.constant 136 : index
    %788 = memref.load %arg1[%c136] : memref<324xf32, #tpu.memory_space<smem>>
    %789 = vector.broadcast %788 : f32 to vector<1x128xf32>
    %790 = arith.mulf %789, %75 : vector<1x128xf32>
    %c137 = arith.constant 137 : index
    %791 = memref.load %arg1[%c137] : memref<324xf32, #tpu.memory_space<smem>>
    %792 = vector.broadcast %791 : f32 to vector<1x128xf32>
    %793 = arith.mulf %792, %151 : vector<1x128xf32>
    %c138 = arith.constant 138 : index
    %794 = memref.load %arg1[%c138] : memref<324xf32, #tpu.memory_space<smem>>
    %795 = vector.broadcast %794 : f32 to vector<1x128xf32>
    %796 = arith.mulf %795, %227 : vector<1x128xf32>
    %c139 = arith.constant 139 : index
    %797 = memref.load %arg1[%c139] : memref<324xf32, #tpu.memory_space<smem>>
    %798 = vector.broadcast %797 : f32 to vector<1x128xf32>
    %799 = arith.mulf %798, %303 : vector<1x128xf32>
    %c140 = arith.constant 140 : index
    %800 = memref.load %arg1[%c140] : memref<324xf32, #tpu.memory_space<smem>>
    %801 = vector.broadcast %800 : f32 to vector<1x128xf32>
    %802 = arith.mulf %801, %379 : vector<1x128xf32>
    %c141 = arith.constant 141 : index
    %803 = memref.load %arg1[%c141] : memref<324xf32, #tpu.memory_space<smem>>
    %804 = vector.broadcast %803 : f32 to vector<1x128xf32>
    %805 = arith.mulf %804, %455 : vector<1x128xf32>
    %c142 = arith.constant 142 : index
    %806 = memref.load %arg1[%c142] : memref<324xf32, #tpu.memory_space<smem>>
    %807 = vector.broadcast %806 : f32 to vector<1x128xf32>
    %808 = arith.mulf %807, %531 : vector<1x128xf32>
    %c143 = arith.constant 143 : index
    %809 = memref.load %arg1[%c143] : memref<324xf32, #tpu.memory_space<smem>>
    %810 = vector.broadcast %809 : f32 to vector<1x128xf32>
    %811 = arith.mulf %810, %607 : vector<1x128xf32>
    %812 = arith.addf %790, %796 : vector<1x128xf32>
    %813 = arith.addf %812, %802 : vector<1x128xf32>
    %814 = arith.addf %813, %808 : vector<1x128xf32>
    %815 = arith.addf %793, %799 : vector<1x128xf32>
    %816 = arith.addf %815, %805 : vector<1x128xf32>
    %817 = arith.addf %816, %811 : vector<1x128xf32>
    %818 = arith.addf %814, %817 : vector<1x128xf32>
    %c13_313 = arith.constant 13 : index
    %819 = memref.load %arg2[%c13_313] : memref<43xf32, #tpu.memory_space<smem>>
    %820 = vector.broadcast %819 : f32 to vector<1x128xf32>
    %821 = arith.addf %818, %820 : vector<1x128xf32>
    %cst_314 = arith.constant 0.000000e+00 : f32
    %822 = vector.broadcast %cst_314 : f32 to vector<1x128xf32>
    %823 = arith.maximumf %821, %822 : vector<1x128xf32>
    %c144 = arith.constant 144 : index
    %824 = memref.load %arg1[%c144] : memref<324xf32, #tpu.memory_space<smem>>
    %825 = vector.broadcast %824 : f32 to vector<1x128xf32>
    %826 = arith.mulf %825, %643 : vector<1x128xf32>
    %c145 = arith.constant 145 : index
    %827 = memref.load %arg1[%c145] : memref<324xf32, #tpu.memory_space<smem>>
    %828 = vector.broadcast %827 : f32 to vector<1x128xf32>
    %829 = arith.mulf %828, %679 : vector<1x128xf32>
    %c146 = arith.constant 146 : index
    %830 = memref.load %arg1[%c146] : memref<324xf32, #tpu.memory_space<smem>>
    %831 = vector.broadcast %830 : f32 to vector<1x128xf32>
    %832 = arith.mulf %831, %715 : vector<1x128xf32>
    %c147 = arith.constant 147 : index
    %833 = memref.load %arg1[%c147] : memref<324xf32, #tpu.memory_space<smem>>
    %834 = vector.broadcast %833 : f32 to vector<1x128xf32>
    %835 = arith.mulf %834, %751 : vector<1x128xf32>
    %c148 = arith.constant 148 : index
    %836 = memref.load %arg1[%c148] : memref<324xf32, #tpu.memory_space<smem>>
    %837 = vector.broadcast %836 : f32 to vector<1x128xf32>
    %838 = arith.mulf %837, %787 : vector<1x128xf32>
    %c149 = arith.constant 149 : index
    %839 = memref.load %arg1[%c149] : memref<324xf32, #tpu.memory_space<smem>>
    %840 = vector.broadcast %839 : f32 to vector<1x128xf32>
    %841 = arith.mulf %840, %823 : vector<1x128xf32>
    %842 = arith.addf %826, %832 : vector<1x128xf32>
    %843 = arith.addf %842, %838 : vector<1x128xf32>
    %844 = arith.addf %829, %835 : vector<1x128xf32>
    %845 = arith.addf %844, %841 : vector<1x128xf32>
    %846 = arith.addf %843, %845 : vector<1x128xf32>
    %c14_315 = arith.constant 14 : index
    %847 = memref.load %arg2[%c14_315] : memref<43xf32, #tpu.memory_space<smem>>
    %848 = vector.broadcast %847 : f32 to vector<1x128xf32>
    %849 = arith.addf %846, %848 : vector<1x128xf32>
    %c150 = arith.constant 150 : index
    %850 = memref.load %arg1[%c150] : memref<324xf32, #tpu.memory_space<smem>>
    %851 = vector.broadcast %850 : f32 to vector<1x128xf32>
    %852 = arith.mulf %851, %643 : vector<1x128xf32>
    %c151 = arith.constant 151 : index
    %853 = memref.load %arg1[%c151] : memref<324xf32, #tpu.memory_space<smem>>
    %854 = vector.broadcast %853 : f32 to vector<1x128xf32>
    %855 = arith.mulf %854, %679 : vector<1x128xf32>
    %c152 = arith.constant 152 : index
    %856 = memref.load %arg1[%c152] : memref<324xf32, #tpu.memory_space<smem>>
    %857 = vector.broadcast %856 : f32 to vector<1x128xf32>
    %858 = arith.mulf %857, %715 : vector<1x128xf32>
    %c153 = arith.constant 153 : index
    %859 = memref.load %arg1[%c153] : memref<324xf32, #tpu.memory_space<smem>>
    %860 = vector.broadcast %859 : f32 to vector<1x128xf32>
    %861 = arith.mulf %860, %751 : vector<1x128xf32>
    %c154 = arith.constant 154 : index
    %862 = memref.load %arg1[%c154] : memref<324xf32, #tpu.memory_space<smem>>
    %863 = vector.broadcast %862 : f32 to vector<1x128xf32>
    %864 = arith.mulf %863, %787 : vector<1x128xf32>
    %c155 = arith.constant 155 : index
    %865 = memref.load %arg1[%c155] : memref<324xf32, #tpu.memory_space<smem>>
    %866 = vector.broadcast %865 : f32 to vector<1x128xf32>
    %867 = arith.mulf %866, %823 : vector<1x128xf32>
    %868 = arith.addf %852, %858 : vector<1x128xf32>
    %869 = arith.addf %868, %864 : vector<1x128xf32>
    %870 = arith.addf %855, %861 : vector<1x128xf32>
    %871 = arith.addf %870, %867 : vector<1x128xf32>
    %872 = arith.addf %869, %871 : vector<1x128xf32>
    %c15_316 = arith.constant 15 : index
    %873 = memref.load %arg2[%c15_316] : memref<43xf32, #tpu.memory_space<smem>>
    %874 = vector.broadcast %873 : f32 to vector<1x128xf32>
    %875 = arith.addf %872, %874 : vector<1x128xf32>
    %c156 = arith.constant 156 : index
    %876 = memref.load %arg1[%c156] : memref<324xf32, #tpu.memory_space<smem>>
    %877 = vector.broadcast %876 : f32 to vector<1x128xf32>
    %878 = arith.mulf %877, %643 : vector<1x128xf32>
    %c157 = arith.constant 157 : index
    %879 = memref.load %arg1[%c157] : memref<324xf32, #tpu.memory_space<smem>>
    %880 = vector.broadcast %879 : f32 to vector<1x128xf32>
    %881 = arith.mulf %880, %679 : vector<1x128xf32>
    %c158 = arith.constant 158 : index
    %882 = memref.load %arg1[%c158] : memref<324xf32, #tpu.memory_space<smem>>
    %883 = vector.broadcast %882 : f32 to vector<1x128xf32>
    %884 = arith.mulf %883, %715 : vector<1x128xf32>
    %c159 = arith.constant 159 : index
    %885 = memref.load %arg1[%c159] : memref<324xf32, #tpu.memory_space<smem>>
    %886 = vector.broadcast %885 : f32 to vector<1x128xf32>
    %887 = arith.mulf %886, %751 : vector<1x128xf32>
    %c160 = arith.constant 160 : index
    %888 = memref.load %arg1[%c160] : memref<324xf32, #tpu.memory_space<smem>>
    %889 = vector.broadcast %888 : f32 to vector<1x128xf32>
    %890 = arith.mulf %889, %787 : vector<1x128xf32>
    %c161 = arith.constant 161 : index
    %891 = memref.load %arg1[%c161] : memref<324xf32, #tpu.memory_space<smem>>
    %892 = vector.broadcast %891 : f32 to vector<1x128xf32>
    %893 = arith.mulf %892, %823 : vector<1x128xf32>
    %894 = arith.addf %878, %884 : vector<1x128xf32>
    %895 = arith.addf %894, %890 : vector<1x128xf32>
    %896 = arith.addf %881, %887 : vector<1x128xf32>
    %897 = arith.addf %896, %893 : vector<1x128xf32>
    %898 = arith.addf %895, %897 : vector<1x128xf32>
    %c16_317 = arith.constant 16 : index
    %899 = memref.load %arg2[%c16_317] : memref<43xf32, #tpu.memory_space<smem>>
    %900 = vector.broadcast %899 : f32 to vector<1x128xf32>
    %901 = arith.addf %898, %900 : vector<1x128xf32>
    %c162 = arith.constant 162 : index
    %902 = memref.load %arg1[%c162] : memref<324xf32, #tpu.memory_space<smem>>
    %903 = vector.broadcast %902 : f32 to vector<1x128xf32>
    %904 = arith.mulf %903, %849 : vector<1x128xf32>
    %c163 = arith.constant 163 : index
    %905 = memref.load %arg1[%c163] : memref<324xf32, #tpu.memory_space<smem>>
    %906 = vector.broadcast %905 : f32 to vector<1x128xf32>
    %907 = arith.mulf %906, %875 : vector<1x128xf32>
    %c164 = arith.constant 164 : index
    %908 = memref.load %arg1[%c164] : memref<324xf32, #tpu.memory_space<smem>>
    %909 = vector.broadcast %908 : f32 to vector<1x128xf32>
    %910 = arith.mulf %909, %901 : vector<1x128xf32>
    %911 = arith.addf %904, %910 : vector<1x128xf32>
    %912 = arith.addf %911, %907 : vector<1x128xf32>
    %c17_318 = arith.constant 17 : index
    %913 = memref.load %arg2[%c17_318] : memref<43xf32, #tpu.memory_space<smem>>
    %914 = vector.broadcast %913 : f32 to vector<1x128xf32>
    %915 = arith.addf %912, %914 : vector<1x128xf32>
    %cst_319 = arith.constant 0.000000e+00 : f32
    %916 = vector.broadcast %cst_319 : f32 to vector<1x128xf32>
    %917 = arith.maximumf %915, %916 : vector<1x128xf32>
    %c165 = arith.constant 165 : index
    %918 = memref.load %arg1[%c165] : memref<324xf32, #tpu.memory_space<smem>>
    %919 = vector.broadcast %918 : f32 to vector<1x128xf32>
    %920 = arith.mulf %919, %849 : vector<1x128xf32>
    %c166 = arith.constant 166 : index
    %921 = memref.load %arg1[%c166] : memref<324xf32, #tpu.memory_space<smem>>
    %922 = vector.broadcast %921 : f32 to vector<1x128xf32>
    %923 = arith.mulf %922, %875 : vector<1x128xf32>
    %c167 = arith.constant 167 : index
    %924 = memref.load %arg1[%c167] : memref<324xf32, #tpu.memory_space<smem>>
    %925 = vector.broadcast %924 : f32 to vector<1x128xf32>
    %926 = arith.mulf %925, %901 : vector<1x128xf32>
    %927 = arith.addf %920, %926 : vector<1x128xf32>
    %928 = arith.addf %927, %923 : vector<1x128xf32>
    %c18_320 = arith.constant 18 : index
    %929 = memref.load %arg2[%c18_320] : memref<43xf32, #tpu.memory_space<smem>>
    %930 = vector.broadcast %929 : f32 to vector<1x128xf32>
    %931 = arith.addf %928, %930 : vector<1x128xf32>
    %cst_321 = arith.constant 0.000000e+00 : f32
    %932 = vector.broadcast %cst_321 : f32 to vector<1x128xf32>
    %933 = arith.maximumf %931, %932 : vector<1x128xf32>
    %c168 = arith.constant 168 : index
    %934 = memref.load %arg1[%c168] : memref<324xf32, #tpu.memory_space<smem>>
    %935 = vector.broadcast %934 : f32 to vector<1x128xf32>
    %936 = arith.mulf %935, %849 : vector<1x128xf32>
    %c169 = arith.constant 169 : index
    %937 = memref.load %arg1[%c169] : memref<324xf32, #tpu.memory_space<smem>>
    %938 = vector.broadcast %937 : f32 to vector<1x128xf32>
    %939 = arith.mulf %938, %875 : vector<1x128xf32>
    %c170 = arith.constant 170 : index
    %940 = memref.load %arg1[%c170] : memref<324xf32, #tpu.memory_space<smem>>
    %941 = vector.broadcast %940 : f32 to vector<1x128xf32>
    %942 = arith.mulf %941, %901 : vector<1x128xf32>
    %943 = arith.addf %936, %942 : vector<1x128xf32>
    %944 = arith.addf %943, %939 : vector<1x128xf32>
    %c19_322 = arith.constant 19 : index
    %945 = memref.load %arg2[%c19_322] : memref<43xf32, #tpu.memory_space<smem>>
    %946 = vector.broadcast %945 : f32 to vector<1x128xf32>
    %947 = arith.addf %944, %946 : vector<1x128xf32>
    %cst_323 = arith.constant 0.000000e+00 : f32
    %948 = vector.broadcast %cst_323 : f32 to vector<1x128xf32>
    %949 = arith.maximumf %947, %948 : vector<1x128xf32>
    %c171 = arith.constant 171 : index
    %950 = memref.load %arg1[%c171] : memref<324xf32, #tpu.memory_space<smem>>
    %951 = vector.broadcast %950 : f32 to vector<1x128xf32>
    %952 = arith.mulf %951, %849 : vector<1x128xf32>
    %c172 = arith.constant 172 : index
    %953 = memref.load %arg1[%c172] : memref<324xf32, #tpu.memory_space<smem>>
    %954 = vector.broadcast %953 : f32 to vector<1x128xf32>
    %955 = arith.mulf %954, %875 : vector<1x128xf32>
    %c173 = arith.constant 173 : index
    %956 = memref.load %arg1[%c173] : memref<324xf32, #tpu.memory_space<smem>>
    %957 = vector.broadcast %956 : f32 to vector<1x128xf32>
    %958 = arith.mulf %957, %901 : vector<1x128xf32>
    %959 = arith.addf %952, %958 : vector<1x128xf32>
    %960 = arith.addf %959, %955 : vector<1x128xf32>
    %c20_324 = arith.constant 20 : index
    %961 = memref.load %arg2[%c20_324] : memref<43xf32, #tpu.memory_space<smem>>
    %962 = vector.broadcast %961 : f32 to vector<1x128xf32>
    %963 = arith.addf %960, %962 : vector<1x128xf32>
    %cst_325 = arith.constant 0.000000e+00 : f32
    %964 = vector.broadcast %cst_325 : f32 to vector<1x128xf32>
    %965 = arith.maximumf %963, %964 : vector<1x128xf32>
    %c174 = arith.constant 174 : index
    %966 = memref.load %arg1[%c174] : memref<324xf32, #tpu.memory_space<smem>>
    %967 = vector.broadcast %966 : f32 to vector<1x128xf32>
    %968 = arith.mulf %967, %849 : vector<1x128xf32>
    %c175 = arith.constant 175 : index
    %969 = memref.load %arg1[%c175] : memref<324xf32, #tpu.memory_space<smem>>
    %970 = vector.broadcast %969 : f32 to vector<1x128xf32>
    %971 = arith.mulf %970, %875 : vector<1x128xf32>
    %c176 = arith.constant 176 : index
    %972 = memref.load %arg1[%c176] : memref<324xf32, #tpu.memory_space<smem>>
    %973 = vector.broadcast %972 : f32 to vector<1x128xf32>
    %974 = arith.mulf %973, %901 : vector<1x128xf32>
    %975 = arith.addf %968, %974 : vector<1x128xf32>
    %976 = arith.addf %975, %971 : vector<1x128xf32>
    %c21_326 = arith.constant 21 : index
    %977 = memref.load %arg2[%c21_326] : memref<43xf32, #tpu.memory_space<smem>>
    %978 = vector.broadcast %977 : f32 to vector<1x128xf32>
    %979 = arith.addf %976, %978 : vector<1x128xf32>
    %cst_327 = arith.constant 0.000000e+00 : f32
    %980 = vector.broadcast %cst_327 : f32 to vector<1x128xf32>
    %981 = arith.maximumf %979, %980 : vector<1x128xf32>
    %c177 = arith.constant 177 : index
    %982 = memref.load %arg1[%c177] : memref<324xf32, #tpu.memory_space<smem>>
    %983 = vector.broadcast %982 : f32 to vector<1x128xf32>
    %984 = arith.mulf %983, %849 : vector<1x128xf32>
    %c178 = arith.constant 178 : index
    %985 = memref.load %arg1[%c178] : memref<324xf32, #tpu.memory_space<smem>>
    %986 = vector.broadcast %985 : f32 to vector<1x128xf32>
    %987 = arith.mulf %986, %875 : vector<1x128xf32>
    %c179 = arith.constant 179 : index
    %988 = memref.load %arg1[%c179] : memref<324xf32, #tpu.memory_space<smem>>
    %989 = vector.broadcast %988 : f32 to vector<1x128xf32>
    %990 = arith.mulf %989, %901 : vector<1x128xf32>
    %991 = arith.addf %984, %990 : vector<1x128xf32>
    %992 = arith.addf %991, %987 : vector<1x128xf32>
    %c22_328 = arith.constant 22 : index
    %993 = memref.load %arg2[%c22_328] : memref<43xf32, #tpu.memory_space<smem>>
    %994 = vector.broadcast %993 : f32 to vector<1x128xf32>
    %995 = arith.addf %992, %994 : vector<1x128xf32>
    %cst_329 = arith.constant 0.000000e+00 : f32
    %996 = vector.broadcast %cst_329 : f32 to vector<1x128xf32>
    %997 = arith.maximumf %995, %996 : vector<1x128xf32>
    %c180 = arith.constant 180 : index
    %998 = memref.load %arg1[%c180] : memref<324xf32, #tpu.memory_space<smem>>
    %999 = vector.broadcast %998 : f32 to vector<1x128xf32>
    %1000 = arith.mulf %999, %917 : vector<1x128xf32>
    %c181 = arith.constant 181 : index
    %1001 = memref.load %arg1[%c181] : memref<324xf32, #tpu.memory_space<smem>>
    %1002 = vector.broadcast %1001 : f32 to vector<1x128xf32>
    %1003 = arith.mulf %1002, %933 : vector<1x128xf32>
    %c182 = arith.constant 182 : index
    %1004 = memref.load %arg1[%c182] : memref<324xf32, #tpu.memory_space<smem>>
    %1005 = vector.broadcast %1004 : f32 to vector<1x128xf32>
    %1006 = arith.mulf %1005, %949 : vector<1x128xf32>
    %c183 = arith.constant 183 : index
    %1007 = memref.load %arg1[%c183] : memref<324xf32, #tpu.memory_space<smem>>
    %1008 = vector.broadcast %1007 : f32 to vector<1x128xf32>
    %1009 = arith.mulf %1008, %965 : vector<1x128xf32>
    %c184 = arith.constant 184 : index
    %1010 = memref.load %arg1[%c184] : memref<324xf32, #tpu.memory_space<smem>>
    %1011 = vector.broadcast %1010 : f32 to vector<1x128xf32>
    %1012 = arith.mulf %1011, %981 : vector<1x128xf32>
    %c185 = arith.constant 185 : index
    %1013 = memref.load %arg1[%c185] : memref<324xf32, #tpu.memory_space<smem>>
    %1014 = vector.broadcast %1013 : f32 to vector<1x128xf32>
    %1015 = arith.mulf %1014, %997 : vector<1x128xf32>
    %1016 = arith.addf %1000, %1006 : vector<1x128xf32>
    %1017 = arith.addf %1016, %1012 : vector<1x128xf32>
    %1018 = arith.addf %1003, %1009 : vector<1x128xf32>
    %1019 = arith.addf %1018, %1015 : vector<1x128xf32>
    %1020 = arith.addf %1017, %1019 : vector<1x128xf32>
    %c23_330 = arith.constant 23 : index
    %1021 = memref.load %arg2[%c23_330] : memref<43xf32, #tpu.memory_space<smem>>
    %1022 = vector.broadcast %1021 : f32 to vector<1x128xf32>
    %1023 = arith.addf %1020, %1022 : vector<1x128xf32>
    %cst_331 = arith.constant 0.000000e+00 : f32
    %1024 = vector.broadcast %cst_331 : f32 to vector<1x128xf32>
    %1025 = arith.maximumf %1023, %1024 : vector<1x128xf32>
    %c186 = arith.constant 186 : index
    %1026 = memref.load %arg1[%c186] : memref<324xf32, #tpu.memory_space<smem>>
    %1027 = vector.broadcast %1026 : f32 to vector<1x128xf32>
    %1028 = arith.mulf %1027, %917 : vector<1x128xf32>
    %c187 = arith.constant 187 : index
    %1029 = memref.load %arg1[%c187] : memref<324xf32, #tpu.memory_space<smem>>
    %1030 = vector.broadcast %1029 : f32 to vector<1x128xf32>
    %1031 = arith.mulf %1030, %933 : vector<1x128xf32>
    %c188 = arith.constant 188 : index
    %1032 = memref.load %arg1[%c188] : memref<324xf32, #tpu.memory_space<smem>>
    %1033 = vector.broadcast %1032 : f32 to vector<1x128xf32>
    %1034 = arith.mulf %1033, %949 : vector<1x128xf32>
    %c189 = arith.constant 189 : index
    %1035 = memref.load %arg1[%c189] : memref<324xf32, #tpu.memory_space<smem>>
    %1036 = vector.broadcast %1035 : f32 to vector<1x128xf32>
    %1037 = arith.mulf %1036, %965 : vector<1x128xf32>
    %c190 = arith.constant 190 : index
    %1038 = memref.load %arg1[%c190] : memref<324xf32, #tpu.memory_space<smem>>
    %1039 = vector.broadcast %1038 : f32 to vector<1x128xf32>
    %1040 = arith.mulf %1039, %981 : vector<1x128xf32>
    %c191 = arith.constant 191 : index
    %1041 = memref.load %arg1[%c191] : memref<324xf32, #tpu.memory_space<smem>>
    %1042 = vector.broadcast %1041 : f32 to vector<1x128xf32>
    %1043 = arith.mulf %1042, %997 : vector<1x128xf32>
    %1044 = arith.addf %1028, %1034 : vector<1x128xf32>
    %1045 = arith.addf %1044, %1040 : vector<1x128xf32>
    %1046 = arith.addf %1031, %1037 : vector<1x128xf32>
    %1047 = arith.addf %1046, %1043 : vector<1x128xf32>
    %1048 = arith.addf %1045, %1047 : vector<1x128xf32>
    %c24_332 = arith.constant 24 : index
    %1049 = memref.load %arg2[%c24_332] : memref<43xf32, #tpu.memory_space<smem>>
    %1050 = vector.broadcast %1049 : f32 to vector<1x128xf32>
    %1051 = arith.addf %1048, %1050 : vector<1x128xf32>
    %cst_333 = arith.constant 0.000000e+00 : f32
    %1052 = vector.broadcast %cst_333 : f32 to vector<1x128xf32>
    %1053 = arith.maximumf %1051, %1052 : vector<1x128xf32>
    %c192 = arith.constant 192 : index
    %1054 = memref.load %arg1[%c192] : memref<324xf32, #tpu.memory_space<smem>>
    %1055 = vector.broadcast %1054 : f32 to vector<1x128xf32>
    %1056 = arith.mulf %1055, %917 : vector<1x128xf32>
    %c193 = arith.constant 193 : index
    %1057 = memref.load %arg1[%c193] : memref<324xf32, #tpu.memory_space<smem>>
    %1058 = vector.broadcast %1057 : f32 to vector<1x128xf32>
    %1059 = arith.mulf %1058, %933 : vector<1x128xf32>
    %c194 = arith.constant 194 : index
    %1060 = memref.load %arg1[%c194] : memref<324xf32, #tpu.memory_space<smem>>
    %1061 = vector.broadcast %1060 : f32 to vector<1x128xf32>
    %1062 = arith.mulf %1061, %949 : vector<1x128xf32>
    %c195 = arith.constant 195 : index
    %1063 = memref.load %arg1[%c195] : memref<324xf32, #tpu.memory_space<smem>>
    %1064 = vector.broadcast %1063 : f32 to vector<1x128xf32>
    %1065 = arith.mulf %1064, %965 : vector<1x128xf32>
    %c196 = arith.constant 196 : index
    %1066 = memref.load %arg1[%c196] : memref<324xf32, #tpu.memory_space<smem>>
    %1067 = vector.broadcast %1066 : f32 to vector<1x128xf32>
    %1068 = arith.mulf %1067, %981 : vector<1x128xf32>
    %c197 = arith.constant 197 : index
    %1069 = memref.load %arg1[%c197] : memref<324xf32, #tpu.memory_space<smem>>
    %1070 = vector.broadcast %1069 : f32 to vector<1x128xf32>
    %1071 = arith.mulf %1070, %997 : vector<1x128xf32>
    %1072 = arith.addf %1056, %1062 : vector<1x128xf32>
    %1073 = arith.addf %1072, %1068 : vector<1x128xf32>
    %1074 = arith.addf %1059, %1065 : vector<1x128xf32>
    %1075 = arith.addf %1074, %1071 : vector<1x128xf32>
    %1076 = arith.addf %1073, %1075 : vector<1x128xf32>
    %c25_334 = arith.constant 25 : index
    %1077 = memref.load %arg2[%c25_334] : memref<43xf32, #tpu.memory_space<smem>>
    %1078 = vector.broadcast %1077 : f32 to vector<1x128xf32>
    %1079 = arith.addf %1076, %1078 : vector<1x128xf32>
    %cst_335 = arith.constant 0.000000e+00 : f32
    %1080 = vector.broadcast %cst_335 : f32 to vector<1x128xf32>
    %1081 = arith.maximumf %1079, %1080 : vector<1x128xf32>
    %c198 = arith.constant 198 : index
    %1082 = memref.load %arg1[%c198] : memref<324xf32, #tpu.memory_space<smem>>
    %1083 = vector.broadcast %1082 : f32 to vector<1x128xf32>
    %1084 = arith.mulf %1083, %917 : vector<1x128xf32>
    %c199 = arith.constant 199 : index
    %1085 = memref.load %arg1[%c199] : memref<324xf32, #tpu.memory_space<smem>>
    %1086 = vector.broadcast %1085 : f32 to vector<1x128xf32>
    %1087 = arith.mulf %1086, %933 : vector<1x128xf32>
    %c200 = arith.constant 200 : index
    %1088 = memref.load %arg1[%c200] : memref<324xf32, #tpu.memory_space<smem>>
    %1089 = vector.broadcast %1088 : f32 to vector<1x128xf32>
    %1090 = arith.mulf %1089, %949 : vector<1x128xf32>
    %c201 = arith.constant 201 : index
    %1091 = memref.load %arg1[%c201] : memref<324xf32, #tpu.memory_space<smem>>
    %1092 = vector.broadcast %1091 : f32 to vector<1x128xf32>
    %1093 = arith.mulf %1092, %965 : vector<1x128xf32>
    %c202 = arith.constant 202 : index
    %1094 = memref.load %arg1[%c202] : memref<324xf32, #tpu.memory_space<smem>>
    %1095 = vector.broadcast %1094 : f32 to vector<1x128xf32>
    %1096 = arith.mulf %1095, %981 : vector<1x128xf32>
    %c203 = arith.constant 203 : index
    %1097 = memref.load %arg1[%c203] : memref<324xf32, #tpu.memory_space<smem>>
    %1098 = vector.broadcast %1097 : f32 to vector<1x128xf32>
    %1099 = arith.mulf %1098, %997 : vector<1x128xf32>
    %1100 = arith.addf %1084, %1090 : vector<1x128xf32>
    %1101 = arith.addf %1100, %1096 : vector<1x128xf32>
    %1102 = arith.addf %1087, %1093 : vector<1x128xf32>
    %1103 = arith.addf %1102, %1099 : vector<1x128xf32>
    %1104 = arith.addf %1101, %1103 : vector<1x128xf32>
    %c26_336 = arith.constant 26 : index
    %1105 = memref.load %arg2[%c26_336] : memref<43xf32, #tpu.memory_space<smem>>
    %1106 = vector.broadcast %1105 : f32 to vector<1x128xf32>
    %1107 = arith.addf %1104, %1106 : vector<1x128xf32>
    %cst_337 = arith.constant 0.000000e+00 : f32
    %1108 = vector.broadcast %cst_337 : f32 to vector<1x128xf32>
    %1109 = arith.maximumf %1107, %1108 : vector<1x128xf32>
    %c204 = arith.constant 204 : index
    %1110 = memref.load %arg1[%c204] : memref<324xf32, #tpu.memory_space<smem>>
    %1111 = vector.broadcast %1110 : f32 to vector<1x128xf32>
    %1112 = arith.mulf %1111, %917 : vector<1x128xf32>
    %c205 = arith.constant 205 : index
    %1113 = memref.load %arg1[%c205] : memref<324xf32, #tpu.memory_space<smem>>
    %1114 = vector.broadcast %1113 : f32 to vector<1x128xf32>
    %1115 = arith.mulf %1114, %933 : vector<1x128xf32>
    %c206 = arith.constant 206 : index
    %1116 = memref.load %arg1[%c206] : memref<324xf32, #tpu.memory_space<smem>>
    %1117 = vector.broadcast %1116 : f32 to vector<1x128xf32>
    %1118 = arith.mulf %1117, %949 : vector<1x128xf32>
    %c207 = arith.constant 207 : index
    %1119 = memref.load %arg1[%c207] : memref<324xf32, #tpu.memory_space<smem>>
    %1120 = vector.broadcast %1119 : f32 to vector<1x128xf32>
    %1121 = arith.mulf %1120, %965 : vector<1x128xf32>
    %c208 = arith.constant 208 : index
    %1122 = memref.load %arg1[%c208] : memref<324xf32, #tpu.memory_space<smem>>
    %1123 = vector.broadcast %1122 : f32 to vector<1x128xf32>
    %1124 = arith.mulf %1123, %981 : vector<1x128xf32>
    %c209 = arith.constant 209 : index
    %1125 = memref.load %arg1[%c209] : memref<324xf32, #tpu.memory_space<smem>>
    %1126 = vector.broadcast %1125 : f32 to vector<1x128xf32>
    %1127 = arith.mulf %1126, %997 : vector<1x128xf32>
    %1128 = arith.addf %1112, %1118 : vector<1x128xf32>
    %1129 = arith.addf %1128, %1124 : vector<1x128xf32>
    %1130 = arith.addf %1115, %1121 : vector<1x128xf32>
    %1131 = arith.addf %1130, %1127 : vector<1x128xf32>
    %1132 = arith.addf %1129, %1131 : vector<1x128xf32>
    %c27_338 = arith.constant 27 : index
    %1133 = memref.load %arg2[%c27_338] : memref<43xf32, #tpu.memory_space<smem>>
    %1134 = vector.broadcast %1133 : f32 to vector<1x128xf32>
    %1135 = arith.addf %1132, %1134 : vector<1x128xf32>
    %cst_339 = arith.constant 0.000000e+00 : f32
    %1136 = vector.broadcast %cst_339 : f32 to vector<1x128xf32>
    %1137 = arith.maximumf %1135, %1136 : vector<1x128xf32>
    %c210 = arith.constant 210 : index
    %1138 = memref.load %arg1[%c210] : memref<324xf32, #tpu.memory_space<smem>>
    %1139 = vector.broadcast %1138 : f32 to vector<1x128xf32>
    %1140 = arith.mulf %1139, %917 : vector<1x128xf32>
    %c211 = arith.constant 211 : index
    %1141 = memref.load %arg1[%c211] : memref<324xf32, #tpu.memory_space<smem>>
    %1142 = vector.broadcast %1141 : f32 to vector<1x128xf32>
    %1143 = arith.mulf %1142, %933 : vector<1x128xf32>
    %c212 = arith.constant 212 : index
    %1144 = memref.load %arg1[%c212] : memref<324xf32, #tpu.memory_space<smem>>
    %1145 = vector.broadcast %1144 : f32 to vector<1x128xf32>
    %1146 = arith.mulf %1145, %949 : vector<1x128xf32>
    %c213 = arith.constant 213 : index
    %1147 = memref.load %arg1[%c213] : memref<324xf32, #tpu.memory_space<smem>>
    %1148 = vector.broadcast %1147 : f32 to vector<1x128xf32>
    %1149 = arith.mulf %1148, %965 : vector<1x128xf32>
    %c214 = arith.constant 214 : index
    %1150 = memref.load %arg1[%c214] : memref<324xf32, #tpu.memory_space<smem>>
    %1151 = vector.broadcast %1150 : f32 to vector<1x128xf32>
    %1152 = arith.mulf %1151, %981 : vector<1x128xf32>
    %c215 = arith.constant 215 : index
    %1153 = memref.load %arg1[%c215] : memref<324xf32, #tpu.memory_space<smem>>
    %1154 = vector.broadcast %1153 : f32 to vector<1x128xf32>
    %1155 = arith.mulf %1154, %997 : vector<1x128xf32>
    %1156 = arith.addf %1140, %1146 : vector<1x128xf32>
    %1157 = arith.addf %1156, %1152 : vector<1x128xf32>
    %1158 = arith.addf %1143, %1149 : vector<1x128xf32>
    %1159 = arith.addf %1158, %1155 : vector<1x128xf32>
    %1160 = arith.addf %1157, %1159 : vector<1x128xf32>
    %c28_340 = arith.constant 28 : index
    %1161 = memref.load %arg2[%c28_340] : memref<43xf32, #tpu.memory_space<smem>>
    %1162 = vector.broadcast %1161 : f32 to vector<1x128xf32>
    %1163 = arith.addf %1160, %1162 : vector<1x128xf32>
    %cst_341 = arith.constant 0.000000e+00 : f32
    %1164 = vector.broadcast %cst_341 : f32 to vector<1x128xf32>
    %1165 = arith.maximumf %1163, %1164 : vector<1x128xf32>
    %c216 = arith.constant 216 : index
    %1166 = memref.load %arg1[%c216] : memref<324xf32, #tpu.memory_space<smem>>
    %1167 = vector.broadcast %1166 : f32 to vector<1x128xf32>
    %1168 = arith.mulf %1167, %917 : vector<1x128xf32>
    %c217 = arith.constant 217 : index
    %1169 = memref.load %arg1[%c217] : memref<324xf32, #tpu.memory_space<smem>>
    %1170 = vector.broadcast %1169 : f32 to vector<1x128xf32>
    %1171 = arith.mulf %1170, %933 : vector<1x128xf32>
    %c218 = arith.constant 218 : index
    %1172 = memref.load %arg1[%c218] : memref<324xf32, #tpu.memory_space<smem>>
    %1173 = vector.broadcast %1172 : f32 to vector<1x128xf32>
    %1174 = arith.mulf %1173, %949 : vector<1x128xf32>
    %c219 = arith.constant 219 : index
    %1175 = memref.load %arg1[%c219] : memref<324xf32, #tpu.memory_space<smem>>
    %1176 = vector.broadcast %1175 : f32 to vector<1x128xf32>
    %1177 = arith.mulf %1176, %965 : vector<1x128xf32>
    %c220 = arith.constant 220 : index
    %1178 = memref.load %arg1[%c220] : memref<324xf32, #tpu.memory_space<smem>>
    %1179 = vector.broadcast %1178 : f32 to vector<1x128xf32>
    %1180 = arith.mulf %1179, %981 : vector<1x128xf32>
    %c221 = arith.constant 221 : index
    %1181 = memref.load %arg1[%c221] : memref<324xf32, #tpu.memory_space<smem>>
    %1182 = vector.broadcast %1181 : f32 to vector<1x128xf32>
    %1183 = arith.mulf %1182, %997 : vector<1x128xf32>
    %1184 = arith.addf %1168, %1174 : vector<1x128xf32>
    %1185 = arith.addf %1184, %1180 : vector<1x128xf32>
    %1186 = arith.addf %1171, %1177 : vector<1x128xf32>
    %1187 = arith.addf %1186, %1183 : vector<1x128xf32>
    %1188 = arith.addf %1185, %1187 : vector<1x128xf32>
    %c29_342 = arith.constant 29 : index
    %1189 = memref.load %arg2[%c29_342] : memref<43xf32, #tpu.memory_space<smem>>
    %1190 = vector.broadcast %1189 : f32 to vector<1x128xf32>
    %1191 = arith.addf %1188, %1190 : vector<1x128xf32>
    %cst_343 = arith.constant 0.000000e+00 : f32
    %1192 = vector.broadcast %cst_343 : f32 to vector<1x128xf32>
    %1193 = arith.maximumf %1191, %1192 : vector<1x128xf32>
    %c222 = arith.constant 222 : index
    %1194 = memref.load %arg1[%c222] : memref<324xf32, #tpu.memory_space<smem>>
    %1195 = vector.broadcast %1194 : f32 to vector<1x128xf32>
    %1196 = arith.mulf %1195, %917 : vector<1x128xf32>
    %c223 = arith.constant 223 : index
    %1197 = memref.load %arg1[%c223] : memref<324xf32, #tpu.memory_space<smem>>
    %1198 = vector.broadcast %1197 : f32 to vector<1x128xf32>
    %1199 = arith.mulf %1198, %933 : vector<1x128xf32>
    %c224 = arith.constant 224 : index
    %1200 = memref.load %arg1[%c224] : memref<324xf32, #tpu.memory_space<smem>>
    %1201 = vector.broadcast %1200 : f32 to vector<1x128xf32>
    %1202 = arith.mulf %1201, %949 : vector<1x128xf32>
    %c225 = arith.constant 225 : index
    %1203 = memref.load %arg1[%c225] : memref<324xf32, #tpu.memory_space<smem>>
    %1204 = vector.broadcast %1203 : f32 to vector<1x128xf32>
    %1205 = arith.mulf %1204, %965 : vector<1x128xf32>
    %c226 = arith.constant 226 : index
    %1206 = memref.load %arg1[%c226] : memref<324xf32, #tpu.memory_space<smem>>
    %1207 = vector.broadcast %1206 : f32 to vector<1x128xf32>
    %1208 = arith.mulf %1207, %981 : vector<1x128xf32>
    %c227 = arith.constant 227 : index
    %1209 = memref.load %arg1[%c227] : memref<324xf32, #tpu.memory_space<smem>>
    %1210 = vector.broadcast %1209 : f32 to vector<1x128xf32>
    %1211 = arith.mulf %1210, %997 : vector<1x128xf32>
    %1212 = arith.addf %1196, %1202 : vector<1x128xf32>
    %1213 = arith.addf %1212, %1208 : vector<1x128xf32>
    %1214 = arith.addf %1199, %1205 : vector<1x128xf32>
    %1215 = arith.addf %1214, %1211 : vector<1x128xf32>
    %1216 = arith.addf %1213, %1215 : vector<1x128xf32>
    %c30_344 = arith.constant 30 : index
    %1217 = memref.load %arg2[%c30_344] : memref<43xf32, #tpu.memory_space<smem>>
    %1218 = vector.broadcast %1217 : f32 to vector<1x128xf32>
    %1219 = arith.addf %1216, %1218 : vector<1x128xf32>
    %cst_345 = arith.constant 0.000000e+00 : f32
    %1220 = vector.broadcast %cst_345 : f32 to vector<1x128xf32>
    %1221 = arith.maximumf %1219, %1220 : vector<1x128xf32>
    %c228 = arith.constant 228 : index
    %1222 = memref.load %arg1[%c228] : memref<324xf32, #tpu.memory_space<smem>>
    %1223 = vector.broadcast %1222 : f32 to vector<1x128xf32>
    %1224 = arith.mulf %1223, %1025 : vector<1x128xf32>
    %c229 = arith.constant 229 : index
    %1225 = memref.load %arg1[%c229] : memref<324xf32, #tpu.memory_space<smem>>
    %1226 = vector.broadcast %1225 : f32 to vector<1x128xf32>
    %1227 = arith.mulf %1226, %1053 : vector<1x128xf32>
    %c230 = arith.constant 230 : index
    %1228 = memref.load %arg1[%c230] : memref<324xf32, #tpu.memory_space<smem>>
    %1229 = vector.broadcast %1228 : f32 to vector<1x128xf32>
    %1230 = arith.mulf %1229, %1081 : vector<1x128xf32>
    %c231 = arith.constant 231 : index
    %1231 = memref.load %arg1[%c231] : memref<324xf32, #tpu.memory_space<smem>>
    %1232 = vector.broadcast %1231 : f32 to vector<1x128xf32>
    %1233 = arith.mulf %1232, %1109 : vector<1x128xf32>
    %c232 = arith.constant 232 : index
    %1234 = memref.load %arg1[%c232] : memref<324xf32, #tpu.memory_space<smem>>
    %1235 = vector.broadcast %1234 : f32 to vector<1x128xf32>
    %1236 = arith.mulf %1235, %1137 : vector<1x128xf32>
    %c233 = arith.constant 233 : index
    %1237 = memref.load %arg1[%c233] : memref<324xf32, #tpu.memory_space<smem>>
    %1238 = vector.broadcast %1237 : f32 to vector<1x128xf32>
    %1239 = arith.mulf %1238, %1165 : vector<1x128xf32>
    %c234 = arith.constant 234 : index
    %1240 = memref.load %arg1[%c234] : memref<324xf32, #tpu.memory_space<smem>>
    %1241 = vector.broadcast %1240 : f32 to vector<1x128xf32>
    %1242 = arith.mulf %1241, %1193 : vector<1x128xf32>
    %c235 = arith.constant 235 : index
    %1243 = memref.load %arg1[%c235] : memref<324xf32, #tpu.memory_space<smem>>
    %1244 = vector.broadcast %1243 : f32 to vector<1x128xf32>
    %1245 = arith.mulf %1244, %1221 : vector<1x128xf32>
    %1246 = arith.addf %1224, %1230 : vector<1x128xf32>
    %1247 = arith.addf %1246, %1236 : vector<1x128xf32>
    %1248 = arith.addf %1247, %1242 : vector<1x128xf32>
    %1249 = arith.addf %1227, %1233 : vector<1x128xf32>
    %1250 = arith.addf %1249, %1239 : vector<1x128xf32>
    %1251 = arith.addf %1250, %1245 : vector<1x128xf32>
    %1252 = arith.addf %1248, %1251 : vector<1x128xf32>
    %c31_346 = arith.constant 31 : index
    %1253 = memref.load %arg2[%c31_346] : memref<43xf32, #tpu.memory_space<smem>>
    %1254 = vector.broadcast %1253 : f32 to vector<1x128xf32>
    %1255 = arith.addf %1252, %1254 : vector<1x128xf32>
    %c236 = arith.constant 236 : index
    %1256 = memref.load %arg1[%c236] : memref<324xf32, #tpu.memory_space<smem>>
    %1257 = vector.broadcast %1256 : f32 to vector<1x128xf32>
    %1258 = arith.mulf %1257, %1025 : vector<1x128xf32>
    %c237 = arith.constant 237 : index
    %1259 = memref.load %arg1[%c237] : memref<324xf32, #tpu.memory_space<smem>>
    %1260 = vector.broadcast %1259 : f32 to vector<1x128xf32>
    %1261 = arith.mulf %1260, %1053 : vector<1x128xf32>
    %c238 = arith.constant 238 : index
    %1262 = memref.load %arg1[%c238] : memref<324xf32, #tpu.memory_space<smem>>
    %1263 = vector.broadcast %1262 : f32 to vector<1x128xf32>
    %1264 = arith.mulf %1263, %1081 : vector<1x128xf32>
    %c239 = arith.constant 239 : index
    %1265 = memref.load %arg1[%c239] : memref<324xf32, #tpu.memory_space<smem>>
    %1266 = vector.broadcast %1265 : f32 to vector<1x128xf32>
    %1267 = arith.mulf %1266, %1109 : vector<1x128xf32>
    %c240 = arith.constant 240 : index
    %1268 = memref.load %arg1[%c240] : memref<324xf32, #tpu.memory_space<smem>>
    %1269 = vector.broadcast %1268 : f32 to vector<1x128xf32>
    %1270 = arith.mulf %1269, %1137 : vector<1x128xf32>
    %c241 = arith.constant 241 : index
    %1271 = memref.load %arg1[%c241] : memref<324xf32, #tpu.memory_space<smem>>
    %1272 = vector.broadcast %1271 : f32 to vector<1x128xf32>
    %1273 = arith.mulf %1272, %1165 : vector<1x128xf32>
    %c242 = arith.constant 242 : index
    %1274 = memref.load %arg1[%c242] : memref<324xf32, #tpu.memory_space<smem>>
    %1275 = vector.broadcast %1274 : f32 to vector<1x128xf32>
    %1276 = arith.mulf %1275, %1193 : vector<1x128xf32>
    %c243 = arith.constant 243 : index
    %1277 = memref.load %arg1[%c243] : memref<324xf32, #tpu.memory_space<smem>>
    %1278 = vector.broadcast %1277 : f32 to vector<1x128xf32>
    %1279 = arith.mulf %1278, %1221 : vector<1x128xf32>
    %1280 = arith.addf %1258, %1264 : vector<1x128xf32>
    %1281 = arith.addf %1280, %1270 : vector<1x128xf32>
    %1282 = arith.addf %1281, %1276 : vector<1x128xf32>
    %1283 = arith.addf %1261, %1267 : vector<1x128xf32>
    %1284 = arith.addf %1283, %1273 : vector<1x128xf32>
    %1285 = arith.addf %1284, %1279 : vector<1x128xf32>
    %1286 = arith.addf %1282, %1285 : vector<1x128xf32>
    %c32_347 = arith.constant 32 : index
    %1287 = memref.load %arg2[%c32_347] : memref<43xf32, #tpu.memory_space<smem>>
    %1288 = vector.broadcast %1287 : f32 to vector<1x128xf32>
    %1289 = arith.addf %1286, %1288 : vector<1x128xf32>
    %c244 = arith.constant 244 : index
    %1290 = memref.load %arg1[%c244] : memref<324xf32, #tpu.memory_space<smem>>
    %1291 = vector.broadcast %1290 : f32 to vector<1x128xf32>
    %1292 = arith.mulf %1291, %1025 : vector<1x128xf32>
    %c245 = arith.constant 245 : index
    %1293 = memref.load %arg1[%c245] : memref<324xf32, #tpu.memory_space<smem>>
    %1294 = vector.broadcast %1293 : f32 to vector<1x128xf32>
    %1295 = arith.mulf %1294, %1053 : vector<1x128xf32>
    %c246 = arith.constant 246 : index
    %1296 = memref.load %arg1[%c246] : memref<324xf32, #tpu.memory_space<smem>>
    %1297 = vector.broadcast %1296 : f32 to vector<1x128xf32>
    %1298 = arith.mulf %1297, %1081 : vector<1x128xf32>
    %c247 = arith.constant 247 : index
    %1299 = memref.load %arg1[%c247] : memref<324xf32, #tpu.memory_space<smem>>
    %1300 = vector.broadcast %1299 : f32 to vector<1x128xf32>
    %1301 = arith.mulf %1300, %1109 : vector<1x128xf32>
    %c248 = arith.constant 248 : index
    %1302 = memref.load %arg1[%c248] : memref<324xf32, #tpu.memory_space<smem>>
    %1303 = vector.broadcast %1302 : f32 to vector<1x128xf32>
    %1304 = arith.mulf %1303, %1137 : vector<1x128xf32>
    %c249 = arith.constant 249 : index
    %1305 = memref.load %arg1[%c249] : memref<324xf32, #tpu.memory_space<smem>>
    %1306 = vector.broadcast %1305 : f32 to vector<1x128xf32>
    %1307 = arith.mulf %1306, %1165 : vector<1x128xf32>
    %c250 = arith.constant 250 : index
    %1308 = memref.load %arg1[%c250] : memref<324xf32, #tpu.memory_space<smem>>
    %1309 = vector.broadcast %1308 : f32 to vector<1x128xf32>
    %1310 = arith.mulf %1309, %1193 : vector<1x128xf32>
    %c251 = arith.constant 251 : index
    %1311 = memref.load %arg1[%c251] : memref<324xf32, #tpu.memory_space<smem>>
    %1312 = vector.broadcast %1311 : f32 to vector<1x128xf32>
    %1313 = arith.mulf %1312, %1221 : vector<1x128xf32>
    %1314 = arith.addf %1292, %1298 : vector<1x128xf32>
    %1315 = arith.addf %1314, %1304 : vector<1x128xf32>
    %1316 = arith.addf %1315, %1310 : vector<1x128xf32>
    %1317 = arith.addf %1295, %1301 : vector<1x128xf32>
    %1318 = arith.addf %1317, %1307 : vector<1x128xf32>
    %1319 = arith.addf %1318, %1313 : vector<1x128xf32>
    %1320 = arith.addf %1316, %1319 : vector<1x128xf32>
    %c33_348 = arith.constant 33 : index
    %1321 = memref.load %arg2[%c33_348] : memref<43xf32, #tpu.memory_space<smem>>
    %1322 = vector.broadcast %1321 : f32 to vector<1x128xf32>
    %1323 = arith.addf %1320, %1322 : vector<1x128xf32>
    %c252 = arith.constant 252 : index
    %1324 = memref.load %arg1[%c252] : memref<324xf32, #tpu.memory_space<smem>>
    %1325 = vector.broadcast %1324 : f32 to vector<1x128xf32>
    %1326 = arith.mulf %1325, %1025 : vector<1x128xf32>
    %c253 = arith.constant 253 : index
    %1327 = memref.load %arg1[%c253] : memref<324xf32, #tpu.memory_space<smem>>
    %1328 = vector.broadcast %1327 : f32 to vector<1x128xf32>
    %1329 = arith.mulf %1328, %1053 : vector<1x128xf32>
    %c254 = arith.constant 254 : index
    %1330 = memref.load %arg1[%c254] : memref<324xf32, #tpu.memory_space<smem>>
    %1331 = vector.broadcast %1330 : f32 to vector<1x128xf32>
    %1332 = arith.mulf %1331, %1081 : vector<1x128xf32>
    %c255 = arith.constant 255 : index
    %1333 = memref.load %arg1[%c255] : memref<324xf32, #tpu.memory_space<smem>>
    %1334 = vector.broadcast %1333 : f32 to vector<1x128xf32>
    %1335 = arith.mulf %1334, %1109 : vector<1x128xf32>
    %c256 = arith.constant 256 : index
    %1336 = memref.load %arg1[%c256] : memref<324xf32, #tpu.memory_space<smem>>
    %1337 = vector.broadcast %1336 : f32 to vector<1x128xf32>
    %1338 = arith.mulf %1337, %1137 : vector<1x128xf32>
    %c257 = arith.constant 257 : index
    %1339 = memref.load %arg1[%c257] : memref<324xf32, #tpu.memory_space<smem>>
    %1340 = vector.broadcast %1339 : f32 to vector<1x128xf32>
    %1341 = arith.mulf %1340, %1165 : vector<1x128xf32>
    %c258 = arith.constant 258 : index
    %1342 = memref.load %arg1[%c258] : memref<324xf32, #tpu.memory_space<smem>>
    %1343 = vector.broadcast %1342 : f32 to vector<1x128xf32>
    %1344 = arith.mulf %1343, %1193 : vector<1x128xf32>
    %c259 = arith.constant 259 : index
    %1345 = memref.load %arg1[%c259] : memref<324xf32, #tpu.memory_space<smem>>
    %1346 = vector.broadcast %1345 : f32 to vector<1x128xf32>
    %1347 = arith.mulf %1346, %1221 : vector<1x128xf32>
    %1348 = arith.addf %1326, %1332 : vector<1x128xf32>
    %1349 = arith.addf %1348, %1338 : vector<1x128xf32>
    %1350 = arith.addf %1349, %1344 : vector<1x128xf32>
    %1351 = arith.addf %1329, %1335 : vector<1x128xf32>
    %1352 = arith.addf %1351, %1341 : vector<1x128xf32>
    %1353 = arith.addf %1352, %1347 : vector<1x128xf32>
    %1354 = arith.addf %1350, %1353 : vector<1x128xf32>
    %c34_349 = arith.constant 34 : index
    %1355 = memref.load %arg2[%c34_349] : memref<43xf32, #tpu.memory_space<smem>>
    %1356 = vector.broadcast %1355 : f32 to vector<1x128xf32>
    %1357 = arith.addf %1354, %1356 : vector<1x128xf32>
    %c260 = arith.constant 260 : index
    %1358 = memref.load %arg1[%c260] : memref<324xf32, #tpu.memory_space<smem>>
    %1359 = vector.broadcast %1358 : f32 to vector<1x128xf32>
    %1360 = arith.mulf %1359, %1025 : vector<1x128xf32>
    %c261 = arith.constant 261 : index
    %1361 = memref.load %arg1[%c261] : memref<324xf32, #tpu.memory_space<smem>>
    %1362 = vector.broadcast %1361 : f32 to vector<1x128xf32>
    %1363 = arith.mulf %1362, %1053 : vector<1x128xf32>
    %c262 = arith.constant 262 : index
    %1364 = memref.load %arg1[%c262] : memref<324xf32, #tpu.memory_space<smem>>
    %1365 = vector.broadcast %1364 : f32 to vector<1x128xf32>
    %1366 = arith.mulf %1365, %1081 : vector<1x128xf32>
    %c263 = arith.constant 263 : index
    %1367 = memref.load %arg1[%c263] : memref<324xf32, #tpu.memory_space<smem>>
    %1368 = vector.broadcast %1367 : f32 to vector<1x128xf32>
    %1369 = arith.mulf %1368, %1109 : vector<1x128xf32>
    %c264 = arith.constant 264 : index
    %1370 = memref.load %arg1[%c264] : memref<324xf32, #tpu.memory_space<smem>>
    %1371 = vector.broadcast %1370 : f32 to vector<1x128xf32>
    %1372 = arith.mulf %1371, %1137 : vector<1x128xf32>
    %c265 = arith.constant 265 : index
    %1373 = memref.load %arg1[%c265] : memref<324xf32, #tpu.memory_space<smem>>
    %1374 = vector.broadcast %1373 : f32 to vector<1x128xf32>
    %1375 = arith.mulf %1374, %1165 : vector<1x128xf32>
    %c266 = arith.constant 266 : index
    %1376 = memref.load %arg1[%c266] : memref<324xf32, #tpu.memory_space<smem>>
    %1377 = vector.broadcast %1376 : f32 to vector<1x128xf32>
    %1378 = arith.mulf %1377, %1193 : vector<1x128xf32>
    %c267 = arith.constant 267 : index
    %1379 = memref.load %arg1[%c267] : memref<324xf32, #tpu.memory_space<smem>>
    %1380 = vector.broadcast %1379 : f32 to vector<1x128xf32>
    %1381 = arith.mulf %1380, %1221 : vector<1x128xf32>
    %1382 = arith.addf %1360, %1366 : vector<1x128xf32>
    %1383 = arith.addf %1382, %1372 : vector<1x128xf32>
    %1384 = arith.addf %1383, %1378 : vector<1x128xf32>
    %1385 = arith.addf %1363, %1369 : vector<1x128xf32>
    %1386 = arith.addf %1385, %1375 : vector<1x128xf32>
    %1387 = arith.addf %1386, %1381 : vector<1x128xf32>
    %1388 = arith.addf %1384, %1387 : vector<1x128xf32>
    %c35_350 = arith.constant 35 : index
    %1389 = memref.load %arg2[%c35_350] : memref<43xf32, #tpu.memory_space<smem>>
    %1390 = vector.broadcast %1389 : f32 to vector<1x128xf32>
    %1391 = arith.addf %1388, %1390 : vector<1x128xf32>
    %c268 = arith.constant 268 : index
    %1392 = memref.load %arg1[%c268] : memref<324xf32, #tpu.memory_space<smem>>
    %1393 = vector.broadcast %1392 : f32 to vector<1x128xf32>
    %1394 = arith.mulf %1393, %1025 : vector<1x128xf32>
    %c269 = arith.constant 269 : index
    %1395 = memref.load %arg1[%c269] : memref<324xf32, #tpu.memory_space<smem>>
    %1396 = vector.broadcast %1395 : f32 to vector<1x128xf32>
    %1397 = arith.mulf %1396, %1053 : vector<1x128xf32>
    %c270 = arith.constant 270 : index
    %1398 = memref.load %arg1[%c270] : memref<324xf32, #tpu.memory_space<smem>>
    %1399 = vector.broadcast %1398 : f32 to vector<1x128xf32>
    %1400 = arith.mulf %1399, %1081 : vector<1x128xf32>
    %c271 = arith.constant 271 : index
    %1401 = memref.load %arg1[%c271] : memref<324xf32, #tpu.memory_space<smem>>
    %1402 = vector.broadcast %1401 : f32 to vector<1x128xf32>
    %1403 = arith.mulf %1402, %1109 : vector<1x128xf32>
    %c272 = arith.constant 272 : index
    %1404 = memref.load %arg1[%c272] : memref<324xf32, #tpu.memory_space<smem>>
    %1405 = vector.broadcast %1404 : f32 to vector<1x128xf32>
    %1406 = arith.mulf %1405, %1137 : vector<1x128xf32>
    %c273 = arith.constant 273 : index
    %1407 = memref.load %arg1[%c273] : memref<324xf32, #tpu.memory_space<smem>>
    %1408 = vector.broadcast %1407 : f32 to vector<1x128xf32>
    %1409 = arith.mulf %1408, %1165 : vector<1x128xf32>
    %c274 = arith.constant 274 : index
    %1410 = memref.load %arg1[%c274] : memref<324xf32, #tpu.memory_space<smem>>
    %1411 = vector.broadcast %1410 : f32 to vector<1x128xf32>
    %1412 = arith.mulf %1411, %1193 : vector<1x128xf32>
    %c275 = arith.constant 275 : index
    %1413 = memref.load %arg1[%c275] : memref<324xf32, #tpu.memory_space<smem>>
    %1414 = vector.broadcast %1413 : f32 to vector<1x128xf32>
    %1415 = arith.mulf %1414, %1221 : vector<1x128xf32>
    %1416 = arith.addf %1394, %1400 : vector<1x128xf32>
    %1417 = arith.addf %1416, %1406 : vector<1x128xf32>
    %1418 = arith.addf %1417, %1412 : vector<1x128xf32>
    %1419 = arith.addf %1397, %1403 : vector<1x128xf32>
    %1420 = arith.addf %1419, %1409 : vector<1x128xf32>
    %1421 = arith.addf %1420, %1415 : vector<1x128xf32>
    %1422 = arith.addf %1418, %1421 : vector<1x128xf32>
    %c36_351 = arith.constant 36 : index
    %1423 = memref.load %arg2[%c36_351] : memref<43xf32, #tpu.memory_space<smem>>
    %1424 = vector.broadcast %1423 : f32 to vector<1x128xf32>
    %1425 = arith.addf %1422, %1424 : vector<1x128xf32>
    %c276 = arith.constant 276 : index
    %1426 = memref.load %arg1[%c276] : memref<324xf32, #tpu.memory_space<smem>>
    %1427 = vector.broadcast %1426 : f32 to vector<1x128xf32>
    %1428 = arith.mulf %1427, %1025 : vector<1x128xf32>
    %c277 = arith.constant 277 : index
    %1429 = memref.load %arg1[%c277] : memref<324xf32, #tpu.memory_space<smem>>
    %1430 = vector.broadcast %1429 : f32 to vector<1x128xf32>
    %1431 = arith.mulf %1430, %1053 : vector<1x128xf32>
    %c278 = arith.constant 278 : index
    %1432 = memref.load %arg1[%c278] : memref<324xf32, #tpu.memory_space<smem>>
    %1433 = vector.broadcast %1432 : f32 to vector<1x128xf32>
    %1434 = arith.mulf %1433, %1081 : vector<1x128xf32>
    %c279 = arith.constant 279 : index
    %1435 = memref.load %arg1[%c279] : memref<324xf32, #tpu.memory_space<smem>>
    %1436 = vector.broadcast %1435 : f32 to vector<1x128xf32>
    %1437 = arith.mulf %1436, %1109 : vector<1x128xf32>
    %c280 = arith.constant 280 : index
    %1438 = memref.load %arg1[%c280] : memref<324xf32, #tpu.memory_space<smem>>
    %1439 = vector.broadcast %1438 : f32 to vector<1x128xf32>
    %1440 = arith.mulf %1439, %1137 : vector<1x128xf32>
    %c281 = arith.constant 281 : index
    %1441 = memref.load %arg1[%c281] : memref<324xf32, #tpu.memory_space<smem>>
    %1442 = vector.broadcast %1441 : f32 to vector<1x128xf32>
    %1443 = arith.mulf %1442, %1165 : vector<1x128xf32>
    %c282 = arith.constant 282 : index
    %1444 = memref.load %arg1[%c282] : memref<324xf32, #tpu.memory_space<smem>>
    %1445 = vector.broadcast %1444 : f32 to vector<1x128xf32>
    %1446 = arith.mulf %1445, %1193 : vector<1x128xf32>
    %c283 = arith.constant 283 : index
    %1447 = memref.load %arg1[%c283] : memref<324xf32, #tpu.memory_space<smem>>
    %1448 = vector.broadcast %1447 : f32 to vector<1x128xf32>
    %1449 = arith.mulf %1448, %1221 : vector<1x128xf32>
    %1450 = arith.addf %1428, %1434 : vector<1x128xf32>
    %1451 = arith.addf %1450, %1440 : vector<1x128xf32>
    %1452 = arith.addf %1451, %1446 : vector<1x128xf32>
    %1453 = arith.addf %1431, %1437 : vector<1x128xf32>
    %1454 = arith.addf %1453, %1443 : vector<1x128xf32>
    %1455 = arith.addf %1454, %1449 : vector<1x128xf32>
    %1456 = arith.addf %1452, %1455 : vector<1x128xf32>
    %c37_352 = arith.constant 37 : index
    %1457 = memref.load %arg2[%c37_352] : memref<43xf32, #tpu.memory_space<smem>>
    %1458 = vector.broadcast %1457 : f32 to vector<1x128xf32>
    %1459 = arith.addf %1456, %1458 : vector<1x128xf32>
    %c284 = arith.constant 284 : index
    %1460 = memref.load %arg1[%c284] : memref<324xf32, #tpu.memory_space<smem>>
    %1461 = vector.broadcast %1460 : f32 to vector<1x128xf32>
    %1462 = arith.mulf %1461, %1025 : vector<1x128xf32>
    %c285 = arith.constant 285 : index
    %1463 = memref.load %arg1[%c285] : memref<324xf32, #tpu.memory_space<smem>>
    %1464 = vector.broadcast %1463 : f32 to vector<1x128xf32>
    %1465 = arith.mulf %1464, %1053 : vector<1x128xf32>
    %c286 = arith.constant 286 : index
    %1466 = memref.load %arg1[%c286] : memref<324xf32, #tpu.memory_space<smem>>
    %1467 = vector.broadcast %1466 : f32 to vector<1x128xf32>
    %1468 = arith.mulf %1467, %1081 : vector<1x128xf32>
    %c287 = arith.constant 287 : index
    %1469 = memref.load %arg1[%c287] : memref<324xf32, #tpu.memory_space<smem>>
    %1470 = vector.broadcast %1469 : f32 to vector<1x128xf32>
    %1471 = arith.mulf %1470, %1109 : vector<1x128xf32>
    %c288 = arith.constant 288 : index
    %1472 = memref.load %arg1[%c288] : memref<324xf32, #tpu.memory_space<smem>>
    %1473 = vector.broadcast %1472 : f32 to vector<1x128xf32>
    %1474 = arith.mulf %1473, %1137 : vector<1x128xf32>
    %c289 = arith.constant 289 : index
    %1475 = memref.load %arg1[%c289] : memref<324xf32, #tpu.memory_space<smem>>
    %1476 = vector.broadcast %1475 : f32 to vector<1x128xf32>
    %1477 = arith.mulf %1476, %1165 : vector<1x128xf32>
    %c290 = arith.constant 290 : index
    %1478 = memref.load %arg1[%c290] : memref<324xf32, #tpu.memory_space<smem>>
    %1479 = vector.broadcast %1478 : f32 to vector<1x128xf32>
    %1480 = arith.mulf %1479, %1193 : vector<1x128xf32>
    %c291 = arith.constant 291 : index
    %1481 = memref.load %arg1[%c291] : memref<324xf32, #tpu.memory_space<smem>>
    %1482 = vector.broadcast %1481 : f32 to vector<1x128xf32>
    %1483 = arith.mulf %1482, %1221 : vector<1x128xf32>
    %1484 = arith.addf %1462, %1468 : vector<1x128xf32>
    %1485 = arith.addf %1484, %1474 : vector<1x128xf32>
    %1486 = arith.addf %1485, %1480 : vector<1x128xf32>
    %1487 = arith.addf %1465, %1471 : vector<1x128xf32>
    %1488 = arith.addf %1487, %1477 : vector<1x128xf32>
    %1489 = arith.addf %1488, %1483 : vector<1x128xf32>
    %1490 = arith.addf %1486, %1489 : vector<1x128xf32>
    %c38_353 = arith.constant 38 : index
    %1491 = memref.load %arg2[%c38_353] : memref<43xf32, #tpu.memory_space<smem>>
    %1492 = vector.broadcast %1491 : f32 to vector<1x128xf32>
    %1493 = arith.addf %1490, %1492 : vector<1x128xf32>
    %c292 = arith.constant 292 : index
    %1494 = memref.load %arg1[%c292] : memref<324xf32, #tpu.memory_space<smem>>
    %1495 = vector.broadcast %1494 : f32 to vector<1x128xf32>
    %1496 = arith.mulf %1495, %1025 : vector<1x128xf32>
    %c293 = arith.constant 293 : index
    %1497 = memref.load %arg1[%c293] : memref<324xf32, #tpu.memory_space<smem>>
    %1498 = vector.broadcast %1497 : f32 to vector<1x128xf32>
    %1499 = arith.mulf %1498, %1053 : vector<1x128xf32>
    %c294 = arith.constant 294 : index
    %1500 = memref.load %arg1[%c294] : memref<324xf32, #tpu.memory_space<smem>>
    %1501 = vector.broadcast %1500 : f32 to vector<1x128xf32>
    %1502 = arith.mulf %1501, %1081 : vector<1x128xf32>
    %c295 = arith.constant 295 : index
    %1503 = memref.load %arg1[%c295] : memref<324xf32, #tpu.memory_space<smem>>
    %1504 = vector.broadcast %1503 : f32 to vector<1x128xf32>
    %1505 = arith.mulf %1504, %1109 : vector<1x128xf32>
    %c296 = arith.constant 296 : index
    %1506 = memref.load %arg1[%c296] : memref<324xf32, #tpu.memory_space<smem>>
    %1507 = vector.broadcast %1506 : f32 to vector<1x128xf32>
    %1508 = arith.mulf %1507, %1137 : vector<1x128xf32>
    %c297 = arith.constant 297 : index
    %1509 = memref.load %arg1[%c297] : memref<324xf32, #tpu.memory_space<smem>>
    %1510 = vector.broadcast %1509 : f32 to vector<1x128xf32>
    %1511 = arith.mulf %1510, %1165 : vector<1x128xf32>
    %c298 = arith.constant 298 : index
    %1512 = memref.load %arg1[%c298] : memref<324xf32, #tpu.memory_space<smem>>
    %1513 = vector.broadcast %1512 : f32 to vector<1x128xf32>
    %1514 = arith.mulf %1513, %1193 : vector<1x128xf32>
    %c299 = arith.constant 299 : index
    %1515 = memref.load %arg1[%c299] : memref<324xf32, #tpu.memory_space<smem>>
    %1516 = vector.broadcast %1515 : f32 to vector<1x128xf32>
    %1517 = arith.mulf %1516, %1221 : vector<1x128xf32>
    %1518 = arith.addf %1496, %1502 : vector<1x128xf32>
    %1519 = arith.addf %1518, %1508 : vector<1x128xf32>
    %1520 = arith.addf %1519, %1514 : vector<1x128xf32>
    %1521 = arith.addf %1499, %1505 : vector<1x128xf32>
    %1522 = arith.addf %1521, %1511 : vector<1x128xf32>
    %1523 = arith.addf %1522, %1517 : vector<1x128xf32>
    %1524 = arith.addf %1520, %1523 : vector<1x128xf32>
    %c39_354 = arith.constant 39 : index
    %1525 = memref.load %arg2[%c39_354] : memref<43xf32, #tpu.memory_space<smem>>
    %1526 = vector.broadcast %1525 : f32 to vector<1x128xf32>
    %1527 = arith.addf %1524, %1526 : vector<1x128xf32>
    %c300 = arith.constant 300 : index
    %1528 = memref.load %arg1[%c300] : memref<324xf32, #tpu.memory_space<smem>>
    %1529 = vector.broadcast %1528 : f32 to vector<1x128xf32>
    %1530 = arith.mulf %1529, %1025 : vector<1x128xf32>
    %c301 = arith.constant 301 : index
    %1531 = memref.load %arg1[%c301] : memref<324xf32, #tpu.memory_space<smem>>
    %1532 = vector.broadcast %1531 : f32 to vector<1x128xf32>
    %1533 = arith.mulf %1532, %1053 : vector<1x128xf32>
    %c302 = arith.constant 302 : index
    %1534 = memref.load %arg1[%c302] : memref<324xf32, #tpu.memory_space<smem>>
    %1535 = vector.broadcast %1534 : f32 to vector<1x128xf32>
    %1536 = arith.mulf %1535, %1081 : vector<1x128xf32>
    %c303 = arith.constant 303 : index
    %1537 = memref.load %arg1[%c303] : memref<324xf32, #tpu.memory_space<smem>>
    %1538 = vector.broadcast %1537 : f32 to vector<1x128xf32>
    %1539 = arith.mulf %1538, %1109 : vector<1x128xf32>
    %c304 = arith.constant 304 : index
    %1540 = memref.load %arg1[%c304] : memref<324xf32, #tpu.memory_space<smem>>
    %1541 = vector.broadcast %1540 : f32 to vector<1x128xf32>
    %1542 = arith.mulf %1541, %1137 : vector<1x128xf32>
    %c305 = arith.constant 305 : index
    %1543 = memref.load %arg1[%c305] : memref<324xf32, #tpu.memory_space<smem>>
    %1544 = vector.broadcast %1543 : f32 to vector<1x128xf32>
    %1545 = arith.mulf %1544, %1165 : vector<1x128xf32>
    %c306 = arith.constant 306 : index
    %1546 = memref.load %arg1[%c306] : memref<324xf32, #tpu.memory_space<smem>>
    %1547 = vector.broadcast %1546 : f32 to vector<1x128xf32>
    %1548 = arith.mulf %1547, %1193 : vector<1x128xf32>
    %c307 = arith.constant 307 : index
    %1549 = memref.load %arg1[%c307] : memref<324xf32, #tpu.memory_space<smem>>
    %1550 = vector.broadcast %1549 : f32 to vector<1x128xf32>
    %1551 = arith.mulf %1550, %1221 : vector<1x128xf32>
    %1552 = arith.addf %1530, %1536 : vector<1x128xf32>
    %1553 = arith.addf %1552, %1542 : vector<1x128xf32>
    %1554 = arith.addf %1553, %1548 : vector<1x128xf32>
    %1555 = arith.addf %1533, %1539 : vector<1x128xf32>
    %1556 = arith.addf %1555, %1545 : vector<1x128xf32>
    %1557 = arith.addf %1556, %1551 : vector<1x128xf32>
    %1558 = arith.addf %1554, %1557 : vector<1x128xf32>
    %c40_355 = arith.constant 40 : index
    %1559 = memref.load %arg2[%c40_355] : memref<43xf32, #tpu.memory_space<smem>>
    %1560 = vector.broadcast %1559 : f32 to vector<1x128xf32>
    %1561 = arith.addf %1558, %1560 : vector<1x128xf32>
    %c308 = arith.constant 308 : index
    %1562 = memref.load %arg1[%c308] : memref<324xf32, #tpu.memory_space<smem>>
    %1563 = vector.broadcast %1562 : f32 to vector<1x128xf32>
    %1564 = arith.mulf %1563, %1025 : vector<1x128xf32>
    %c309 = arith.constant 309 : index
    %1565 = memref.load %arg1[%c309] : memref<324xf32, #tpu.memory_space<smem>>
    %1566 = vector.broadcast %1565 : f32 to vector<1x128xf32>
    %1567 = arith.mulf %1566, %1053 : vector<1x128xf32>
    %c310 = arith.constant 310 : index
    %1568 = memref.load %arg1[%c310] : memref<324xf32, #tpu.memory_space<smem>>
    %1569 = vector.broadcast %1568 : f32 to vector<1x128xf32>
    %1570 = arith.mulf %1569, %1081 : vector<1x128xf32>
    %c311 = arith.constant 311 : index
    %1571 = memref.load %arg1[%c311] : memref<324xf32, #tpu.memory_space<smem>>
    %1572 = vector.broadcast %1571 : f32 to vector<1x128xf32>
    %1573 = arith.mulf %1572, %1109 : vector<1x128xf32>
    %c312 = arith.constant 312 : index
    %1574 = memref.load %arg1[%c312] : memref<324xf32, #tpu.memory_space<smem>>
    %1575 = vector.broadcast %1574 : f32 to vector<1x128xf32>
    %1576 = arith.mulf %1575, %1137 : vector<1x128xf32>
    %c313 = arith.constant 313 : index
    %1577 = memref.load %arg1[%c313] : memref<324xf32, #tpu.memory_space<smem>>
    %1578 = vector.broadcast %1577 : f32 to vector<1x128xf32>
    %1579 = arith.mulf %1578, %1165 : vector<1x128xf32>
    %c314 = arith.constant 314 : index
    %1580 = memref.load %arg1[%c314] : memref<324xf32, #tpu.memory_space<smem>>
    %1581 = vector.broadcast %1580 : f32 to vector<1x128xf32>
    %1582 = arith.mulf %1581, %1193 : vector<1x128xf32>
    %c315 = arith.constant 315 : index
    %1583 = memref.load %arg1[%c315] : memref<324xf32, #tpu.memory_space<smem>>
    %1584 = vector.broadcast %1583 : f32 to vector<1x128xf32>
    %1585 = arith.mulf %1584, %1221 : vector<1x128xf32>
    %1586 = arith.addf %1564, %1570 : vector<1x128xf32>
    %1587 = arith.addf %1586, %1576 : vector<1x128xf32>
    %1588 = arith.addf %1587, %1582 : vector<1x128xf32>
    %1589 = arith.addf %1567, %1573 : vector<1x128xf32>
    %1590 = arith.addf %1589, %1579 : vector<1x128xf32>
    %1591 = arith.addf %1590, %1585 : vector<1x128xf32>
    %1592 = arith.addf %1588, %1591 : vector<1x128xf32>
    %c41_356 = arith.constant 41 : index
    %1593 = memref.load %arg2[%c41_356] : memref<43xf32, #tpu.memory_space<smem>>
    %1594 = vector.broadcast %1593 : f32 to vector<1x128xf32>
    %1595 = arith.addf %1592, %1594 : vector<1x128xf32>
    %c316 = arith.constant 316 : index
    %1596 = memref.load %arg1[%c316] : memref<324xf32, #tpu.memory_space<smem>>
    %1597 = vector.broadcast %1596 : f32 to vector<1x128xf32>
    %1598 = arith.mulf %1597, %1025 : vector<1x128xf32>
    %c317 = arith.constant 317 : index
    %1599 = memref.load %arg1[%c317] : memref<324xf32, #tpu.memory_space<smem>>
    %1600 = vector.broadcast %1599 : f32 to vector<1x128xf32>
    %1601 = arith.mulf %1600, %1053 : vector<1x128xf32>
    %c318 = arith.constant 318 : index
    %1602 = memref.load %arg1[%c318] : memref<324xf32, #tpu.memory_space<smem>>
    %1603 = vector.broadcast %1602 : f32 to vector<1x128xf32>
    %1604 = arith.mulf %1603, %1081 : vector<1x128xf32>
    %c319 = arith.constant 319 : index
    %1605 = memref.load %arg1[%c319] : memref<324xf32, #tpu.memory_space<smem>>
    %1606 = vector.broadcast %1605 : f32 to vector<1x128xf32>
    %1607 = arith.mulf %1606, %1109 : vector<1x128xf32>
    %c320 = arith.constant 320 : index
    %1608 = memref.load %arg1[%c320] : memref<324xf32, #tpu.memory_space<smem>>
    %1609 = vector.broadcast %1608 : f32 to vector<1x128xf32>
    %1610 = arith.mulf %1609, %1137 : vector<1x128xf32>
    %c321 = arith.constant 321 : index
    %1611 = memref.load %arg1[%c321] : memref<324xf32, #tpu.memory_space<smem>>
    %1612 = vector.broadcast %1611 : f32 to vector<1x128xf32>
    %1613 = arith.mulf %1612, %1165 : vector<1x128xf32>
    %c322 = arith.constant 322 : index
    %1614 = memref.load %arg1[%c322] : memref<324xf32, #tpu.memory_space<smem>>
    %1615 = vector.broadcast %1614 : f32 to vector<1x128xf32>
    %1616 = arith.mulf %1615, %1193 : vector<1x128xf32>
    %c323 = arith.constant 323 : index
    %1617 = memref.load %arg1[%c323] : memref<324xf32, #tpu.memory_space<smem>>
    %1618 = vector.broadcast %1617 : f32 to vector<1x128xf32>
    %1619 = arith.mulf %1618, %1221 : vector<1x128xf32>
    %1620 = arith.addf %1598, %1604 : vector<1x128xf32>
    %1621 = arith.addf %1620, %1610 : vector<1x128xf32>
    %1622 = arith.addf %1621, %1616 : vector<1x128xf32>
    %1623 = arith.addf %1601, %1607 : vector<1x128xf32>
    %1624 = arith.addf %1623, %1613 : vector<1x128xf32>
    %1625 = arith.addf %1624, %1619 : vector<1x128xf32>
    %1626 = arith.addf %1622, %1625 : vector<1x128xf32>
    %c42_357 = arith.constant 42 : index
    %1627 = memref.load %arg2[%c42_357] : memref<43xf32, #tpu.memory_space<smem>>
    %1628 = vector.broadcast %1627 : f32 to vector<1x128xf32>
    %1629 = arith.addf %1626, %1628 : vector<1x128xf32>
    %cst_358 = arith.constant 0.000000e+00 : f32
    %1630 = vector.broadcast %cst_358 : f32 to vector<1x128xf32>
    %1631 = arith.subf %1630, %1255 : vector<1x128xf32>
    %1632 = math.exp %1631 : vector<1x128xf32>
    %cst_359 = arith.constant 1.000000e+00 : f32
    %1633 = vector.broadcast %cst_359 : f32 to vector<1x128xf32>
    %1634 = arith.addf %1633, %1632 : vector<1x128xf32>
    %1635 = tpu.reciprocal %1634 {approx = true} : vector<1x128xf32> -> vector<1x128xf32>
    %c0_360 = arith.constant 0 : index
    %c0_361 = arith.constant 0 : index
    %c0_362 = arith.constant 0 : index
    %1636 = vector.load %arg4[%c0_360, %c0_361, %c0_362] : memref<12x1x128xf32, #tpu.memory_space<vmem>>, vector<1x1x128xf32>
    %1637 = vector.shape_cast %1636 : vector<1x1x128xf32> to vector<1x128xf32>
    %1638 = vector.shape_cast %1635 : vector<1x128xf32> to vector<1x1x128xf32>
    tpu.vector_store %arg4[%c0_360, %c0_361, %c0_362], %1638 {strides = array<i32>} : memref<12x1x128xf32, #tpu.memory_space<vmem>>, vector<1x1x128xf32>,
    %cst_363 = arith.constant 0.000000e+00 : f32
    %1639 = vector.broadcast %cst_363 : f32 to vector<1x128xf32>
    %1640 = arith.subf %1639, %1289 : vector<1x128xf32>
    %1641 = math.exp %1640 : vector<1x128xf32>
    %cst_364 = arith.constant 1.000000e+00 : f32
    %1642 = vector.broadcast %cst_364 : f32 to vector<1x128xf32>
    %1643 = arith.addf %1642, %1641 : vector<1x128xf32>
    %1644 = tpu.reciprocal %1643 {approx = true} : vector<1x128xf32> -> vector<1x128xf32>
    %c1_365 = arith.constant 1 : index
    %c0_366 = arith.constant 0 : index
    %c0_367 = arith.constant 0 : index
    %1645 = vector.load %arg4[%c1_365, %c0_366, %c0_367] : memref<12x1x128xf32, #tpu.memory_space<vmem>>, vector<1x1x128xf32>
    %1646 = vector.shape_cast %1645 : vector<1x1x128xf32> to vector<1x128xf32>
    %1647 = vector.shape_cast %1644 : vector<1x128xf32> to vector<1x1x128xf32>
    tpu.vector_store %arg4[%c1_365, %c0_366, %c0_367], %1647 {strides = array<i32>} : memref<12x1x128xf32, #tpu.memory_space<vmem>>, vector<1x1x128xf32>,
    %cst_368 = arith.constant 0.000000e+00 : f32
    %1648 = vector.broadcast %cst_368 : f32 to vector<1x128xf32>
    %1649 = arith.subf %1648, %1323 : vector<1x128xf32>
    %1650 = math.exp %1649 : vector<1x128xf32>
    %cst_369 = arith.constant 1.000000e+00 : f32
    %1651 = vector.broadcast %cst_369 : f32 to vector<1x128xf32>
    %1652 = arith.addf %1651, %1650 : vector<1x128xf32>
    %1653 = tpu.reciprocal %1652 {approx = true} : vector<1x128xf32> -> vector<1x128xf32>
    %c2_370 = arith.constant 2 : index
    %c0_371 = arith.constant 0 : index
    %c0_372 = arith.constant 0 : index
    %1654 = vector.load %arg4[%c2_370, %c0_371, %c0_372] : memref<12x1x128xf32, #tpu.memory_space<vmem>>, vector<1x1x128xf32>
    %1655 = vector.shape_cast %1654 : vector<1x1x128xf32> to vector<1x128xf32>
    %1656 = vector.shape_cast %1653 : vector<1x128xf32> to vector<1x1x128xf32>
    tpu.vector_store %arg4[%c2_370, %c0_371, %c0_372], %1656 {strides = array<i32>} : memref<12x1x128xf32, #tpu.memory_space<vmem>>, vector<1x1x128xf32>,
    %cst_373 = arith.constant 0.000000e+00 : f32
    %1657 = vector.broadcast %cst_373 : f32 to vector<1x128xf32>
    %1658 = arith.subf %1657, %1357 : vector<1x128xf32>
    %1659 = math.exp %1658 : vector<1x128xf32>
    %cst_374 = arith.constant 1.000000e+00 : f32
    %1660 = vector.broadcast %cst_374 : f32 to vector<1x128xf32>
    %1661 = arith.addf %1660, %1659 : vector<1x128xf32>
    %1662 = tpu.reciprocal %1661 {approx = true} : vector<1x128xf32> -> vector<1x128xf32>
    %c3_375 = arith.constant 3 : index
    %c0_376 = arith.constant 0 : index
    %c0_377 = arith.constant 0 : index
    %1663 = vector.load %arg4[%c3_375, %c0_376, %c0_377] : memref<12x1x128xf32, #tpu.memory_space<vmem>>, vector<1x1x128xf32>
    %1664 = vector.shape_cast %1663 : vector<1x1x128xf32> to vector<1x128xf32>
    %1665 = vector.shape_cast %1662 : vector<1x128xf32> to vector<1x1x128xf32>
    tpu.vector_store %arg4[%c3_375, %c0_376, %c0_377], %1665 {strides = array<i32>} : memref<12x1x128xf32, #tpu.memory_space<vmem>>, vector<1x1x128xf32>,
    %cst_378 = arith.constant 0.000000e+00 : f32
    %1666 = vector.broadcast %cst_378 : f32 to vector<1x128xf32>
    %1667 = arith.subf %1666, %1391 : vector<1x128xf32>
    %1668 = math.exp %1667 : vector<1x128xf32>
    %cst_379 = arith.constant 1.000000e+00 : f32
    %1669 = vector.broadcast %cst_379 : f32 to vector<1x128xf32>
    %1670 = arith.addf %1669, %1668 : vector<1x128xf32>
    %1671 = tpu.reciprocal %1670 {approx = true} : vector<1x128xf32> -> vector<1x128xf32>
    %c4_380 = arith.constant 4 : index
    %c0_381 = arith.constant 0 : index
    %c0_382 = arith.constant 0 : index
    %1672 = vector.load %arg4[%c4_380, %c0_381, %c0_382] : memref<12x1x128xf32, #tpu.memory_space<vmem>>, vector<1x1x128xf32>
    %1673 = vector.shape_cast %1672 : vector<1x1x128xf32> to vector<1x128xf32>
    %1674 = vector.shape_cast %1671 : vector<1x128xf32> to vector<1x1x128xf32>
    tpu.vector_store %arg4[%c4_380, %c0_381, %c0_382], %1674 {strides = array<i32>} : memref<12x1x128xf32, #tpu.memory_space<vmem>>, vector<1x1x128xf32>,
    %cst_383 = arith.constant 0.000000e+00 : f32
    %1675 = vector.broadcast %cst_383 : f32 to vector<1x128xf32>
    %1676 = arith.subf %1675, %1425 : vector<1x128xf32>
    %1677 = math.exp %1676 : vector<1x128xf32>
    %cst_384 = arith.constant 1.000000e+00 : f32
    %1678 = vector.broadcast %cst_384 : f32 to vector<1x128xf32>
    %1679 = arith.addf %1678, %1677 : vector<1x128xf32>
    %1680 = tpu.reciprocal %1679 {approx = true} : vector<1x128xf32> -> vector<1x128xf32>
    %c5_385 = arith.constant 5 : index
    %c0_386 = arith.constant 0 : index
    %c0_387 = arith.constant 0 : index
    %1681 = vector.load %arg4[%c5_385, %c0_386, %c0_387] : memref<12x1x128xf32, #tpu.memory_space<vmem>>, vector<1x1x128xf32>
    %1682 = vector.shape_cast %1681 : vector<1x1x128xf32> to vector<1x128xf32>
    %1683 = vector.shape_cast %1680 : vector<1x128xf32> to vector<1x1x128xf32>
    tpu.vector_store %arg4[%c5_385, %c0_386, %c0_387], %1683 {strides = array<i32>} : memref<12x1x128xf32, #tpu.memory_space<vmem>>, vector<1x1x128xf32>,
    %cst_388 = arith.constant 0.000000e+00 : f32
    %1684 = vector.broadcast %cst_388 : f32 to vector<1x128xf32>
    %1685 = arith.subf %1684, %1459 : vector<1x128xf32>
    %1686 = math.exp %1685 : vector<1x128xf32>
    %cst_389 = arith.constant 1.000000e+00 : f32
    %1687 = vector.broadcast %cst_389 : f32 to vector<1x128xf32>
    %1688 = arith.addf %1687, %1686 : vector<1x128xf32>
    %1689 = tpu.reciprocal %1688 {approx = true} : vector<1x128xf32> -> vector<1x128xf32>
    %c6_390 = arith.constant 6 : index
    %c0_391 = arith.constant 0 : index
    %c0_392 = arith.constant 0 : index
    %1690 = vector.load %arg4[%c6_390, %c0_391, %c0_392] : memref<12x1x128xf32, #tpu.memory_space<vmem>>, vector<1x1x128xf32>
    %1691 = vector.shape_cast %1690 : vector<1x1x128xf32> to vector<1x128xf32>
    %1692 = vector.shape_cast %1689 : vector<1x128xf32> to vector<1x1x128xf32>
    tpu.vector_store %arg4[%c6_390, %c0_391, %c0_392], %1692 {strides = array<i32>} : memref<12x1x128xf32, #tpu.memory_space<vmem>>, vector<1x1x128xf32>,
    %cst_393 = arith.constant 0.000000e+00 : f32
    %1693 = vector.broadcast %cst_393 : f32 to vector<1x128xf32>
    %1694 = arith.subf %1693, %1493 : vector<1x128xf32>
    %1695 = math.exp %1694 : vector<1x128xf32>
    %cst_394 = arith.constant 1.000000e+00 : f32
    %1696 = vector.broadcast %cst_394 : f32 to vector<1x128xf32>
    %1697 = arith.addf %1696, %1695 : vector<1x128xf32>
    %1698 = tpu.reciprocal %1697 {approx = true} : vector<1x128xf32> -> vector<1x128xf32>
    %c7_395 = arith.constant 7 : index
    %c0_396 = arith.constant 0 : index
    %c0_397 = arith.constant 0 : index
    %1699 = vector.load %arg4[%c7_395, %c0_396, %c0_397] : memref<12x1x128xf32, #tpu.memory_space<vmem>>, vector<1x1x128xf32>
    %1700 = vector.shape_cast %1699 : vector<1x1x128xf32> to vector<1x128xf32>
    %1701 = vector.shape_cast %1698 : vector<1x128xf32> to vector<1x1x128xf32>
    tpu.vector_store %arg4[%c7_395, %c0_396, %c0_397], %1701 {strides = array<i32>} : memref<12x1x128xf32, #tpu.memory_space<vmem>>, vector<1x1x128xf32>,
    %cst_398 = arith.constant 0.000000e+00 : f32
    %1702 = vector.broadcast %cst_398 : f32 to vector<1x128xf32>
    %1703 = arith.subf %1702, %1527 : vector<1x128xf32>
    %1704 = math.exp %1703 : vector<1x128xf32>
    %cst_399 = arith.constant 1.000000e+00 : f32
    %1705 = vector.broadcast %cst_399 : f32 to vector<1x128xf32>
    %1706 = arith.addf %1705, %1704 : vector<1x128xf32>
    %1707 = tpu.reciprocal %1706 {approx = true} : vector<1x128xf32> -> vector<1x128xf32>
    %c8_400 = arith.constant 8 : index
    %c0_401 = arith.constant 0 : index
    %c0_402 = arith.constant 0 : index
    %1708 = vector.load %arg4[%c8_400, %c0_401, %c0_402] : memref<12x1x128xf32, #tpu.memory_space<vmem>>, vector<1x1x128xf32>
    %1709 = vector.shape_cast %1708 : vector<1x1x128xf32> to vector<1x128xf32>
    %1710 = vector.shape_cast %1707 : vector<1x128xf32> to vector<1x1x128xf32>
    tpu.vector_store %arg4[%c8_400, %c0_401, %c0_402], %1710 {strides = array<i32>} : memref<12x1x128xf32, #tpu.memory_space<vmem>>, vector<1x1x128xf32>,
    %cst_403 = arith.constant 0.000000e+00 : f32
    %1711 = vector.broadcast %cst_403 : f32 to vector<1x128xf32>
    %1712 = arith.subf %1711, %1561 : vector<1x128xf32>
    %1713 = math.exp %1712 : vector<1x128xf32>
    %cst_404 = arith.constant 1.000000e+00 : f32
    %1714 = vector.broadcast %cst_404 : f32 to vector<1x128xf32>
    %1715 = arith.addf %1714, %1713 : vector<1x128xf32>
    %1716 = tpu.reciprocal %1715 {approx = true} : vector<1x128xf32> -> vector<1x128xf32>
    %c9_405 = arith.constant 9 : index
    %c0_406 = arith.constant 0 : index
    %c0_407 = arith.constant 0 : index
    %1717 = vector.load %arg4[%c9_405, %c0_406, %c0_407] : memref<12x1x128xf32, #tpu.memory_space<vmem>>, vector<1x1x128xf32>
    %1718 = vector.shape_cast %1717 : vector<1x1x128xf32> to vector<1x128xf32>
    %1719 = vector.shape_cast %1716 : vector<1x128xf32> to vector<1x1x128xf32>
    tpu.vector_store %arg4[%c9_405, %c0_406, %c0_407], %1719 {strides = array<i32>} : memref<12x1x128xf32, #tpu.memory_space<vmem>>, vector<1x1x128xf32>,
    %cst_408 = arith.constant 0.000000e+00 : f32
    %1720 = vector.broadcast %cst_408 : f32 to vector<1x128xf32>
    %1721 = arith.subf %1720, %1595 : vector<1x128xf32>
    %1722 = math.exp %1721 : vector<1x128xf32>
    %cst_409 = arith.constant 1.000000e+00 : f32
    %1723 = vector.broadcast %cst_409 : f32 to vector<1x128xf32>
    %1724 = arith.addf %1723, %1722 : vector<1x128xf32>
    %1725 = tpu.reciprocal %1724 {approx = true} : vector<1x128xf32> -> vector<1x128xf32>
    %c10_410 = arith.constant 10 : index
    %c0_411 = arith.constant 0 : index
    %c0_412 = arith.constant 0 : index
    %1726 = vector.load %arg4[%c10_410, %c0_411, %c0_412] : memref<12x1x128xf32, #tpu.memory_space<vmem>>, vector<1x1x128xf32>
    %1727 = vector.shape_cast %1726 : vector<1x1x128xf32> to vector<1x128xf32>
    %1728 = vector.shape_cast %1725 : vector<1x128xf32> to vector<1x1x128xf32>
    tpu.vector_store %arg4[%c10_410, %c0_411, %c0_412], %1728 {strides = array<i32>} : memref<12x1x128xf32, #tpu.memory_space<vmem>>, vector<1x1x128xf32>,
    %cst_413 = arith.constant 0.000000e+00 : f32
    %1729 = vector.broadcast %cst_413 : f32 to vector<1x128xf32>
    %1730 = arith.subf %1729, %1629 : vector<1x128xf32>
    %1731 = math.exp %1730 : vector<1x128xf32>
    %cst_414 = arith.constant 1.000000e+00 : f32
    %1732 = vector.broadcast %cst_414 : f32 to vector<1x128xf32>
    %1733 = arith.addf %1732, %1731 : vector<1x128xf32>
    %1734 = tpu.reciprocal %1733 {approx = true} : vector<1x128xf32> -> vector<1x128xf32>
    %c11_415 = arith.constant 11 : index
    %c0_416 = arith.constant 0 : index
    %c0_417 = arith.constant 0 : index
    %1735 = vector.load %arg4[%c11_415, %c0_416, %c0_417] : memref<12x1x128xf32, #tpu.memory_space<vmem>>, vector<1x1x128xf32>
    %1736 = vector.shape_cast %1735 : vector<1x1x128xf32> to vector<1x128xf32>
    %1737 = vector.shape_cast %1734 : vector<1x128xf32> to vector<1x1x128xf32>
    tpu.vector_store %arg4[%c11_415, %c0_416, %c0_417], %1737 {strides = array<i32>} : memref<12x1x128xf32, #tpu.memory_space<vmem>>, vector<1x1x128xf32>,
    return
  }
  func.func @transform_0(%arg0: i32) -> i32 {
    %c0_i32 = arith.constant 0 : i32
    %c0_i32_0 = arith.constant 0 : i32
    return %c0_i32 : i32
  }
  func.func @transform_1(%arg0: i32) -> i32 {
    %c0_i32 = arith.constant 0 : i32
    %c0_i32_0 = arith.constant 0 : i32
    return %c0_i32 : i32
  }
  func.func @transform_2(%arg0: i32) -> (i32, i32, i32) {
    %c0_i32 = arith.constant 0 : i32
    %c0_i32_0 = arith.constant 0 : i32
    %c0_i32_1 = arith.constant 0 : i32
    return %c0_i32, %arg0, %c0_i32_0 : i32, i32, i32
  }
  func.func @transform_3(%arg0: i32) -> (i32, i32, i32) {
    %c0_i32 = arith.constant 0 : i32
    %c0_i32_0 = arith.constant 0 : i32
    %c0_i32_1 = arith.constant 0 : i32
    return %c0_i32, %arg0, %c0_i32_0 : i32, i32, i32
  }
}

</mosaic_0001>

<llo_original>
// kernel: autoencoder_forward_fm.1
$region0: #{autoencoder_forward_fm.1}
  #allocation0 [shape = 'u32[]', space=smem, size = 0x4, offset = 0x4, fixed_abs, tag = 'smem constant byte address 0x4 - core index']
  #allocation1 [shape = 'u32[144,128]{1,0:T(1,128)}', space=vmem, size = 0x12000, scoped, tag = 'internal scratch']
  %s0 = inlined_call_operand.vmem [shape: f32[324], index: 0, kind: input, shape index: {}]
  %s1 = inlined_call_operand.vmem [shape: f32[43], index: 1, kind: input, shape index: {}]
  %s2 = inlined_call_operand.vmem [shape: f32[12,1,128], index: 2, kind: input, shape index: {}]
  %s3 = inlined_call_operand.vmem [shape: f32[12,1,128], index: 3, kind: output, shape index: {}]
  %s4 = sld [smem:[#allocation0]]
  $region30: #{autoencoder_forward_fm.1} parent=0
    _
  %s6 = ssub.s32 1, %s4
  %s7 = scalar_select 0, %s6, %s4
  $region1: #{autoencoder_forward_fm.1} parent=0
    #allocation2 [shape = 'u8[1536]{0}', space=smem, size = 0x600, scoped, tag = 'input window, operand 0, single buffered']
    #allocation3 [shape = 's32[1]{0}', space=sflag, size = 0x4, scoped, tag = 'scoped memory for autoencoder_forward_fm.1']
    #allocation4 [shape = 'u8[512]{0}', space=smem, size = 0x200, scoped, tag = 'input window, operand 1, single buffered']
    #allocation5 [shape = 's32[1]{0}', space=sflag, size = 0x4, scoped, tag = 'scoped memory for autoencoder_forward_fm.1']
    %8 = vsyncpa [#allocation3], 0
    %9 = vsyncpa [#allocation5], 0
    // Predicated region
    $region2: #{autoencoder_forward_fm.1} parent=1 // pred_check
      _
    $region3: #{autoencoder_forward_fm.1} parent=1 // pred_check_branch
      %11 = sbr.rel (0) target = $region5
    $region4: #{autoencoder_forward_fm.1} parent=1 // pred_region
      %s13 = ssub.s32 48, 48
      %14 = vsyncadd [#allocation3], %s13
      %s16 = sshll.u32 %s0, 4
      %s17 = int_to_ptr.vmem [resolvable:$true] %s16
      %19 = dma.vmem_to_smem %s17, 48, [#allocation2], [#allocation3]
    $region5: #{autoencoder_forward_fm.1} parent=1 // pred_fallthru
      _
    // Predicated region
    $region6: #{autoencoder_forward_fm.1} parent=1 // pred_check
      _
    $region7: #{autoencoder_forward_fm.1} parent=1 // pred_check_branch
      %21 = sbr.rel (0) target = $region9
    $region8: #{autoencoder_forward_fm.1} parent=1 // pred_region
      %s23 = ssub.s32 16, 16
      %24 = vsyncadd [#allocation5], %s23
      %s26 = sshll.u32 %s1, 4
      %s27 = int_to_ptr.vmem [resolvable:$true] %s26
      %29 = dma.vmem_to_smem %s27, 16, [#allocation4], [#allocation5]
    $region9: #{autoencoder_forward_fm.1} parent=1 // pred_fallthru
      _
    // Predicated region
    $region10: #{autoencoder_forward_fm.1} parent=1 // pred_check
      _
    $region11: #{autoencoder_forward_fm.1} parent=1 // pred_check_branch
      %31 = sbr.rel (0) target = $region13
    $region12: #{autoencoder_forward_fm.1} parent=1 // pred_region
      _
    $region13: #{autoencoder_forward_fm.1} parent=1 // pred_fallthru
      _
    // Predicated region
    $region14: #{autoencoder_forward_fm.1} parent=1 // pred_check
      _
    $region15: #{autoencoder_forward_fm.1} parent=1 // pred_check_branch
      %33 = sbr.rel (0) target = $region17
    $region16: #{autoencoder_forward_fm.1} parent=1 // pred_region
      %34 = dma.done [#allocation3], 48
    $region17: #{autoencoder_forward_fm.1} parent=1 // pred_fallthru
      _
    // Predicated region
    $region18: #{autoencoder_forward_fm.1} parent=1 // pred_check
      _
    $region19: #{autoencoder_forward_fm.1} parent=1 // pred_check_branch
      %36 = sbr.rel (0) target = $region21
    $region20: #{autoencoder_forward_fm.1} parent=1 // pred_region
      %37 = dma.done [#allocation5], 16
    $region21: #{autoencoder_forward_fm.1} parent=1 // pred_fallthru
      _
    %38 = sfence
    %v39 = vld [vmem:[%s2] sm:$0x1]
    %s40 = sld [smem:[#allocation2]]
    %v41 = vstv %s40
    %v42 = vmul.f32 %v41, %v39
    %s43 = scalar_lea.vmem %s2, 1
    %v44 = vld [vmem:[%s43] sm:$0x1]
    %s45 = sld [smem:[#allocation2 + $0x1]]
    %v46 = vstv %s45
    %v47 = vmul.f32 %v46, %v44
    %s48 = scalar_lea.vmem %s2, 2
    %v49 = vld [vmem:[%s48] sm:$0x1]
    %s50 = sld [smem:[#allocation2 + $0x2]]
    %v51 = vstv %s50
    %v52 = vmul.f32 %v51, %v49
    %s53 = scalar_lea.vmem %s2, 3
    %v54 = vld [vmem:[%s53] sm:$0x1]
    %s55 = sld [smem:[#allocation2 + $0x3]]
    %v56 = vstv %s55
    %v57 = vmul.f32 %v56, %v54
    %s58 = scalar_lea.vmem %s2, 4
    %v59 = vld [vmem:[%s58] sm:$0x1]
    %s60 = sld [smem:[#allocation2 + $0x4]]
    %v61 = vstv %s60
    %v62 = vmul.f32 %v61, %v59
    %s63 = scalar_lea.vmem %s2, 5
    %v64 = vld [vmem:[%s63] sm:$0x1]
    %s65 = sld [smem:[#allocation2 + $0x5]]
    %v66 = vstv %s65
    %v67 = vmul.f32 %v66, %v64
    %s68 = scalar_lea.vmem %s2, 6
    %v69 = vld [vmem:[%s68] sm:$0x1]
    %s70 = sld [smem:[#allocation2 + $0x6]]
    %v71 = vstv %s70
    %v72 = vmul.f32 %v71, %v69
    %s73 = scalar_lea.vmem %s2, 7
    %v74 = vld [vmem:[%s73] sm:$0x1]
    %s75 = sld [smem:[#allocation2 + $0x7]]
    %v76 = vstv %s75
    %v77 = vmul.f32 %v76, %v74
    %s78 = scalar_lea.vmem %s2, 8
    %v79 = vld [vmem:[%s78] sm:$0x1]
    %s80 = sld [smem:[#allocation2 + $0x8]]
    %v81 = vstv %s80
    %v82 = vmul.f32 %v81, %v79
    %s83 = scalar_lea.vmem %s2, 9
    %v84 = vld [vmem:[%s83] sm:$0x1]
    %s85 = sld [smem:[#allocation2 + $0x9]]
    %v86 = vstv %s85
    %v87 = vmul.f32 %v86, %v84
    %s88 = scalar_lea.vmem %s2, 10
    %v89 = vld [vmem:[%s88] sm:$0x1]
    %s90 = sld [smem:[#allocation2 + $0xa]]
    %v91 = vstv %s90
    %v92 = vmul.f32 %v91, %v89
    %s93 = scalar_lea.vmem %s2, 11
    %v94 = vld [vmem:[%s93] sm:$0x1]
    %s95 = sld [smem:[#allocation2 + $0xb]]
    %v96 = vstv %s95
    %v97 = vmul.f32 %v96, %v94
    %v98 = vadd.f32 %v42, %v52
    %v99 = vadd.f32 %v98, %v62
    %v100 = vadd.f32 %v99, %v72
    %v101 = vadd.f32 %v100, %v82
    %v102 = vadd.f32 %v101, %v92
    %v103 = vadd.f32 %v47, %v57
    %v104 = vadd.f32 %v103, %v67
    %v105 = vadd.f32 %v104, %v77
    %v106 = vadd.f32 %v105, %v87
    %v107 = vadd.f32 %v106, %v97
    %v108 = vadd.f32 %v102, %v107
    %s109 = sld [smem:[#allocation4]]
    %v110 = vstv %s109
    %v111 = vadd.f32 %v108, %v110
    %v112 = vmax.f32 %v111, 0.0
    %s113 = sld [smem:[#allocation2 + $0xc]]
    %v114 = vstv %s113
    %v115 = vmul.f32 %v114, %v39
    %s116 = sld [smem:[#allocation2 + $0xd]]
    %v117 = vstv %s116
    %v118 = vmul.f32 %v117, %v44
    %s119 = sld [smem:[#allocation2 + $0xe]]
    %v120 = vstv %s119
    %v121 = vmul.f32 %v120, %v49
    %s122 = sld [smem:[#allocation2 + $0xf]]
    %v123 = vstv %s122
    %v124 = vmul.f32 %v123, %v54
    %s125 = sld [smem:[#allocation2 + $0x10]]
    %v126 = vstv %s125
    %v127 = vmul.f32 %v126, %v59
    %s128 = sld [smem:[#allocation2 + $0x11]]
    %v129 = vstv %s128
    %v130 = vmul.f32 %v129, %v64
    %s131 = sld [smem:[#allocation2 + $0x12]]
    %v132 = vstv %s131
    %v133 = vmul.f32 %v132, %v69
    %s134 = sld [smem:[#allocation2 + $0x13]]
    %v135 = vstv %s134
    %v136 = vmul.f32 %v135, %v74
    %s137 = sld [smem:[#allocation2 + $0x14]]
    %v138 = vstv %s137
    %v139 = vmul.f32 %v138, %v79
    %s140 = sld [smem:[#allocation2 + $0x15]]
    %v141 = vstv %s140
    %v142 = vmul.f32 %v141, %v84
    %s143 = sld [smem:[#allocation2 + $0x16]]
    %v144 = vstv %s143
    %v145 = vmul.f32 %v144, %v89
    %s146 = sld [smem:[#allocation2 + $0x17]]
    %v147 = vstv %s146
    %v148 = vmul.f32 %v147, %v94
    %v149 = vadd.f32 %v115, %v121
    %v150 = vadd.f32 %v149, %v127
    %v151 = vadd.f32 %v150, %v133
    %v152 = vadd.f32 %v151, %v139
    %v153 = vadd.f32 %v152, %v145
    %v154 = vadd.f32 %v118, %v124
    %v155 = vadd.f32 %v154, %v130
    %v156 = vadd.f32 %v155, %v136
    %v157 = vadd.f32 %v156, %v142
    %v158 = vadd.f32 %v157, %v148
    %v159 = vadd.f32 %v153, %v158
    %s160 = sld [smem:[#allocation4 + $0x1]]
    %v161 = vstv %s160
    %v162 = vadd.f32 %v159, %v161
    %v163 = vmax.f32 %v162, 0.0
    %s164 = sld [smem:[#allocation2 + $0x18]]
    %v165 = vstv %s164
    %v166 = vmul.f32 %v165, %v39
    %s167 = sld [smem:[#allocation2 + $0x19]]
    %v168 = vstv %s167
    %v169 = vmul.f32 %v168, %v44
    %s170 = sld [smem:[#allocation2 + $0x1a]]
    %v171 = vstv %s170
    %v172 = vmul.f32 %v171, %v49
    %s173 = sld [smem:[#allocation2 + $0x1b]]
    %v174 = vstv %s173
    %v175 = vmul.f32 %v174, %v54
    %s176 = sld [smem:[#allocation2 + $0x1c]]
    %v177 = vstv %s176
    %v178 = vmul.f32 %v177, %v59
    %s179 = sld [smem:[#allocation2 + $0x1d]]
    %v180 = vstv %s179
    %v181 = vmul.f32 %v180, %v64
    %s182 = sld [smem:[#allocation2 + $0x1e]]
    %v183 = vstv %s182
    %v184 = vmul.f32 %v183, %v69
    %s185 = sld [smem:[#allocation2 + $0x1f]]
    %v186 = vstv %s185
    %v187 = vmul.f32 %v186, %v74
    %s188 = sld [smem:[#allocation2 + $0x20]]
    %v189 = vstv %s188
    %v190 = vmul.f32 %v189, %v79
    %s191 = sld [smem:[#allocation2 + $0x21]]
    %v192 = vstv %s191
    %v193 = vmul.f32 %v192, %v84
    %s194 = sld [smem:[#allocation2 + $0x22]]
    %v195 = vstv %s194
    %v196 = vmul.f32 %v195, %v89
    %s197 = sld [smem:[#allocation2 + $0x23]]
    %v198 = vstv %s197
    %v199 = vmul.f32 %v198, %v94
    %v200 = vadd.f32 %v166, %v172
    %v201 = vadd.f32 %v200, %v178
    %v202 = vadd.f32 %v201, %v184
    %v203 = vadd.f32 %v202, %v190
    %v204 = vadd.f32 %v203, %v196
    %v205 = vadd.f32 %v169, %v175
    %v206 = vadd.f32 %v205, %v181
    %v207 = vadd.f32 %v206, %v187
    %v208 = vadd.f32 %v207, %v193
    %v209 = vadd.f32 %v208, %v199
    %v210 = vadd.f32 %v204, %v209
    %s211 = sld [smem:[#allocation4 + $0x2]]
    %v212 = vstv %s211
    %v213 = vadd.f32 %v210, %v212
    %v214 = vmax.f32 %v213, 0.0
    %s215 = sld [smem:[#allocation2 + $0x24]]
    %v216 = vstv %s215
    %v217 = vmul.f32 %v216, %v39
    %s218 = sld [smem:[#allocation2 + $0x25]]
    %v219 = vstv %s218
    %v220 = vmul.f32 %v219, %v44
    %s221 = sld [smem:[#allocation2 + $0x26]]
    %v222 = vstv %s221
    %v223 = vmul.f32 %v222, %v49
    %s224 = sld [smem:[#allocation2 + $0x27]]
    %v225 = vstv %s224
    %v226 = vmul.f32 %v225, %v54
    %s227 = sld [smem:[#allocation2 + $0x28]]
    %v228 = vstv %s227
    %v229 = vmul.f32 %v228, %v59
    %s230 = sld [smem:[#allocation2 + $0x29]]
    %v231 = vstv %s230
    %v232 = vmul.f32 %v231, %v64
    %s233 = sld [smem:[#allocation2 + $0x2a]]
    %v234 = vstv %s233
    %v235 = vmul.f32 %v234, %v69
    %s236 = sld [smem:[#allocation2 + $0x2b]]
    %v237 = vstv %s236
    %v238 = vmul.f32 %v237, %v74
    %s239 = sld [smem:[#allocation2 + $0x2c]]
    %v240 = vstv %s239
    %v241 = vmul.f32 %v240, %v79
    %s242 = sld [smem:[#allocation2 + $0x2d]]
    %v243 = vstv %s242
    %v244 = vmul.f32 %v243, %v84
    %s245 = sld [smem:[#allocation2 + $0x2e]]
    %v246 = vstv %s245
    %v247 = vmul.f32 %v246, %v89
    %s248 = sld [smem:[#allocation2 + $0x2f]]
    %v249 = vstv %s248
    %v250 = vmul.f32 %v249, %v94
    %v251 = vadd.f32 %v217, %v223
    %v252 = vadd.f32 %v251, %v229
    %v253 = vadd.f32 %v252, %v235
    %v254 = vadd.f32 %v253, %v241
    %v255 = vadd.f32 %v254, %v247
    %v256 = vadd.f32 %v220, %v226
    %v257 = vadd.f32 %v256, %v232
    %v258 = vadd.f32 %v257, %v238
    %v259 = vadd.f32 %v258, %v244
    %v260 = vadd.f32 %v259, %v250
    %v261 = vadd.f32 %v255, %v260
    %s262 = sld [smem:[#allocation4 + $0x3]]
    %v263 = vstv %s262
    %v264 = vadd.f32 %v261, %v263
    %v265 = vmax.f32 %v264, 0.0
    %s266 = sld [smem:[#allocation2 + $0x30]]
    %v267 = vstv %s266
    %v268 = vmul.f32 %v267, %v39
    %s269 = sld [smem:[#allocation2 + $0x31]]
    %v270 = vstv %s269
    %v271 = vmul.f32 %v270, %v44
    %s272 = sld [smem:[#allocation2 + $0x32]]
    %v273 = vstv %s272
    %v274 = vmul.f32 %v273, %v49
    %s275 = sld [smem:[#allocation2 + $0x33]]
    %v276 = vstv %s275
    %v277 = vmul.f32 %v276, %v54
    %s278 = sld [smem:[#allocation2 + $0x34]]
    %v279 = vstv %s278
    %v280 = vmul.f32 %v279, %v59
    %s281 = sld [smem:[#allocation2 + $0x35]]
    %v282 = vstv %s281
    %v283 = vmul.f32 %v282, %v64
    %s284 = sld [smem:[#allocation2 + $0x36]]
    %v285 = vstv %s284
    %v286 = vmul.f32 %v285, %v69
    %s287 = sld [smem:[#allocation2 + $0x37]]
    %v288 = vstv %s287
    %v289 = vmul.f32 %v288, %v74
    %s290 = sld [smem:[#allocation2 + $0x38]]
    %v291 = vstv %s290
    %v292 = vmul.f32 %v291, %v79
    %s293 = sld [smem:[#allocation2 + $0x39]]
    %v294 = vstv %s293
    %v295 = vmul.f32 %v294, %v84
    %s296 = sld [smem:[#allocation2 + $0x3a]]
    %v297 = vstv %s296
    %v298 = vmul.f32 %v297, %v89
    %s299 = sld [smem:[#allocation2 + $0x3b]]
    %v300 = vstv %s299
    %v301 = vmul.f32 %v300, %v94
    %v302 = vadd.f32 %v268, %v274
    %v303 = vadd.f32 %v302, %v280
    %v304 = vadd.f32 %v303, %v286
    %v305 = vadd.f32 %v304, %v292
    %v306 = vadd.f32 %v305, %v298
    %v307 = vadd.f32 %v271, %v277
    %v308 = vadd.f32 %v307, %v283
    %v309 = vadd.f32 %v308, %v289
    %v310 = vadd.f32 %v309, %v295
    %v311 = vadd.f32 %v310, %v301
    %v312 = vadd.f32 %v306, %v311
    %s313 = sld [smem:[#allocation4 + $0x4]]
    %v314 = vstv %s313
    %v315 = vadd.f32 %v312, %v314
    %v316 = vmax.f32 %v315, 0.0
    %s317 = sld [smem:[#allocation2 + $0x3c]]
    %v318 = vstv %s317
    %v319 = vmul.f32 %v318, %v39
    %s320 = sld [smem:[#allocation2 + $0x3d]]
    %v321 = vstv %s320
    %v322 = vmul.f32 %v321, %v44
    %s323 = sld [smem:[#allocation2 + $0x3e]]
    %v324 = vstv %s323
    %v325 = vmul.f32 %v324, %v49
    %s326 = sld [smem:[#allocation2 + $0x3f]]
    %v327 = vstv %s326
    %v328 = vmul.f32 %v327, %v54
    %s329 = sld [smem:[#allocation2 + $0x40]]
    %v330 = vstv %s329
    %v331 = vmul.f32 %v330, %v59
    %s332 = sld [smem:[#allocation2 + $0x41]]
    %v333 = vstv %s332
    %v334 = vmul.f32 %v333, %v64
    %s335 = sld [smem:[#allocation2 + $0x42]]
    %v336 = vstv %s335
    %v337 = vmul.f32 %v336, %v69
    %s338 = sld [smem:[#allocation2 + $0x43]]
    %v339 = vstv %s338
    %v340 = vmul.f32 %v339, %v74
    %s341 = sld [smem:[#allocation2 + $0x44]]
    %v342 = vstv %s341
    %v343 = vmul.f32 %v342, %v79
    %s344 = sld [smem:[#allocation2 + $0x45]]
    %v345 = vstv %s344
    %v346 = vmul.f32 %v345, %v84
    %s347 = sld [smem:[#allocation2 + $0x46]]
    %v348 = vstv %s347
    %v349 = vmul.f32 %v348, %v89
    %s350 = sld [smem:[#allocation2 + $0x47]]
    %v351 = vstv %s350
    %v352 = vmul.f32 %v351, %v94
    %v353 = vadd.f32 %v319, %v325
    %v354 = vadd.f32 %v353, %v331
    %v355 = vadd.f32 %v354, %v337
    %v356 = vadd.f32 %v355, %v343
    %v357 = vadd.f32 %v356, %v349
    %v358 = vadd.f32 %v322, %v328
    %v359 = vadd.f32 %v358, %v334
    %v360 = vadd.f32 %v359, %v340
    %v361 = vadd.f32 %v360, %v346
    %v362 = vadd.f32 %v361, %v352
    %v363 = vadd.f32 %v357, %v362
    %s364 = sld [smem:[#allocation4 + $0x5]]
    %v365 = vstv %s364
    %v366 = vadd.f32 %v363, %v365
    %v367 = vmax.f32 %v366, 0.0
    %s368 = sld [smem:[#allocation2 + $0x48]]
    %v369 = vstv %s368
    %v370 = vmul.f32 %v369, %v39
    %s371 = sld [smem:[#allocation2 + $0x49]]
    %v372 = vstv %s371
    %v373 = vmul.f32 %v372, %v44
    %s374 = sld [smem:[#allocation2 + $0x4a]]
    %v375 = vstv %s374
    %v376 = vmul.f32 %v375, %v49
    %s377 = sld [smem:[#allocation2 + $0x4b]]
    %v378 = vstv %s377
    %v379 = vmul.f32 %v378, %v54
    %s380 = sld [smem:[#allocation2 + $0x4c]]
    %v381 = vstv %s380
    %v382 = vmul.f32 %v381, %v59
    %s383 = sld [smem:[#allocation2 + $0x4d]]
    %v384 = vstv %s383
    %v385 = vmul.f32 %v384, %v64
    %s386 = sld [smem:[#allocation2 + $0x4e]]
    %v387 = vstv %s386
    %v388 = vmul.f32 %v387, %v69
    %s389 = sld [smem:[#allocation2 + $0x4f]]
    %v390 = vstv %s389
    %v391 = vmul.f32 %v390, %v74
    %s392 = sld [smem:[#allocation2 + $0x50]]
    %v393 = vstv %s392
    %v394 = vmul.f32 %v393, %v79
    %s395 = sld [smem:[#allocation2 + $0x51]]
    %v396 = vstv %s395
    %v397 = vmul.f32 %v396, %v84
    %s398 = sld [smem:[#allocation2 + $0x52]]
    %v399 = vstv %s398
    %v400 = vmul.f32 %v399, %v89
    %s401 = sld [smem:[#allocation2 + $0x53]]
    %v402 = vstv %s401
    %v403 = vmul.f32 %v402, %v94
    %v404 = vadd.f32 %v370, %v376
    %v405 = vadd.f32 %v404, %v382
    %v406 = vadd.f32 %v405, %v388
    %v407 = vadd.f32 %v406, %v394
    %v408 = vadd.f32 %v407, %v400
    %v409 = vadd.f32 %v373, %v379
    %v410 = vadd.f32 %v409, %v385
    %v411 = vadd.f32 %v410, %v391
    %v412 = vadd.f32 %v411, %v397
    %v413 = vadd.f32 %v412, %v403
    %v414 = vadd.f32 %v408, %v413
    %s415 = sld [smem:[#allocation4 + $0x6]]
    %v416 = vstv %s415
    %v417 = vadd.f32 %v414, %v416
    %v418 = vmax.f32 %v417, 0.0
    %s419 = sld [smem:[#allocation2 + $0x54]]
    %v420 = vstv %s419
    %v421 = vmul.f32 %v420, %v39
    %s422 = sld [smem:[#allocation2 + $0x55]]
    %v423 = vstv %s422
    %v424 = vmul.f32 %v423, %v44
    %s425 = sld [smem:[#allocation2 + $0x56]]
    %v426 = vstv %s425
    %v427 = vmul.f32 %v426, %v49
    %s428 = sld [smem:[#allocation2 + $0x57]]
    %v429 = vstv %s428
    %v430 = vmul.f32 %v429, %v54
    %s431 = sld [smem:[#allocation2 + $0x58]]
    %v432 = vstv %s431
    %v433 = vmul.f32 %v432, %v59
    %s434 = sld [smem:[#allocation2 + $0x59]]
    %v435 = vstv %s434
    %v436 = vmul.f32 %v435, %v64
    %s437 = sld [smem:[#allocation2 + $0x5a]]
    %v438 = vstv %s437
    %v439 = vmul.f32 %v438, %v69
    %s440 = sld [smem:[#allocation2 + $0x5b]]
    %v441 = vstv %s440
    %v442 = vmul.f32 %v441, %v74
    %s443 = sld [smem:[#allocation2 + $0x5c]]
    %v444 = vstv %s443
    %v445 = vmul.f32 %v444, %v79
    %s446 = sld [smem:[#allocation2 + $0x5d]]
    %v447 = vstv %s446
    %v448 = vmul.f32 %v447, %v84
    %s449 = sld [smem:[#allocation2 + $0x5e]]
    %v450 = vstv %s449
    %v451 = vmul.f32 %v450, %v89
    %s452 = sld [smem:[#allocation2 + $0x5f]]
    %v453 = vstv %s452
    %v454 = vmul.f32 %v453, %v94
    %v455 = vadd.f32 %v421, %v427
    %v456 = vadd.f32 %v455, %v433
    %v457 = vadd.f32 %v456, %v439
    %v458 = vadd.f32 %v457, %v445
    %v459 = vadd.f32 %v458, %v451
    %v460 = vadd.f32 %v424, %v430
    %v461 = vadd.f32 %v460, %v436
    %v462 = vadd.f32 %v461, %v442
    %v463 = vadd.f32 %v462, %v448
    %v464 = vadd.f32 %v463, %v454
    %v465 = vadd.f32 %v459, %v464
    %s466 = sld [smem:[#allocation4 + $0x7]]
    %v467 = vstv %s466
    %v468 = vadd.f32 %v465, %v467
    %v469 = vmax.f32 %v468, 0.0
    %s470 = sld [smem:[#allocation2 + $0x60]]
    %v471 = vstv %s470
    %v472 = vmul.f32 %v471, %v112
    %s473 = sld [smem:[#allocation2 + $0x61]]
    %v474 = vstv %s473
    %v475 = vmul.f32 %v474, %v163
    %s476 = sld [smem:[#allocation2 + $0x62]]
    %v477 = vstv %s476
    %v478 = vmul.f32 %v477, %v214
    %s479 = sld [smem:[#allocation2 + $0x63]]
    %v480 = vstv %s479
    %v481 = vmul.f32 %v480, %v265
    %s482 = sld [smem:[#allocation2 + $0x64]]
    %v483 = vstv %s482
    %v484 = vmul.f32 %v483, %v316
    %s485 = sld [smem:[#allocation2 + $0x65]]
    %v486 = vstv %s485
    %v487 = vmul.f32 %v486, %v367
    %s488 = sld [smem:[#allocation2 + $0x66]]
    %v489 = vstv %s488
    %v490 = vmul.f32 %v489, %v418
    %s491 = sld [smem:[#allocation2 + $0x67]]
    %v492 = vstv %s491
    %v493 = vmul.f32 %v492, %v469
    %v494 = vadd.f32 %v472, %v478
    %v495 = vadd.f32 %v494, %v484
    %v496 = vadd.f32 %v495, %v490
    %v497 = vadd.f32 %v475, %v481
    %v498 = vadd.f32 %v497, %v487
    %v499 = vadd.f32 %v498, %v493
    %v500 = vadd.f32 %v496, %v499
    %s501 = sld [smem:[#allocation4 + $0x8]]
    %v502 = vstv %s501
    %v503 = vadd.f32 %v500, %v502
    %v504 = vmax.f32 %v503, 0.0
    %s505 = sld [smem:[#allocation2 + $0x68]]
    %v506 = vstv %s505
    %v507 = vmul.f32 %v506, %v112
    %s508 = sld [smem:[#allocation2 + $0x69]]
    %v509 = vstv %s508
    %v510 = vmul.f32 %v509, %v163
    %s511 = sld [smem:[#allocation2 + $0x6a]]
    %v512 = vstv %s511
    %v513 = vmul.f32 %v512, %v214
    %s514 = sld [smem:[#allocation2 + $0x6b]]
    %v515 = vstv %s514
    %v516 = vmul.f32 %v515, %v265
    %s517 = sld [smem:[#allocation2 + $0x6c]]
    %v518 = vstv %s517
    %v519 = vmul.f32 %v518, %v316
    %s520 = sld [smem:[#allocation2 + $0x6d]]
    %v521 = vstv %s520
    %v522 = vmul.f32 %v521, %v367
    %s523 = sld [smem:[#allocation2 + $0x6e]]
    %v524 = vstv %s523
    %v525 = vmul.f32 %v524, %v418
    %s526 = sld [smem:[#allocation2 + $0x6f]]
    %v527 = vstv %s526
    %v528 = vmul.f32 %v527, %v469
    %v529 = vadd.f32 %v507, %v513
    %v530 = vadd.f32 %v529, %v519
    %v531 = vadd.f32 %v530, %v525
    %v532 = vadd.f32 %v510, %v516
    %v533 = vadd.f32 %v532, %v522
    %v534 = vadd.f32 %v533, %v528
    %v535 = vadd.f32 %v531, %v534
    %s536 = sld [smem:[#allocation4 + $0x9]]
    %v537 = vstv %s536
    %v538 = vadd.f32 %v535, %v537
    %v539 = vmax.f32 %v538, 0.0
    %s540 = sld [smem:[#allocation2 + $0x70]]
    %v541 = vstv %s540
    %v542 = vmul.f32 %v541, %v112
    %s543 = sld [smem:[#allocation2 + $0x71]]
    %v544 = vstv %s543
    %v545 = vmul.f32 %v544, %v163
    %s546 = sld [smem:[#allocation2 + $0x72]]
    %v547 = vstv %s546
    %v548 = vmul.f32 %v547, %v214
    %s549 = sld [smem:[#allocation2 + $0x73]]
    %v550 = vstv %s549
    %v551 = vmul.f32 %v550, %v265
    %s552 = sld [smem:[#allocation2 + $0x74]]
    %v553 = vstv %s552
    %v554 = vmul.f32 %v553, %v316
    %s555 = sld [smem:[#allocation2 + $0x75]]
    %v556 = vstv %s555
    %v557 = vmul.f32 %v556, %v367
    %s558 = sld [smem:[#allocation2 + $0x76]]
    %v559 = vstv %s558
    %v560 = vmul.f32 %v559, %v418
    %s561 = sld [smem:[#allocation2 + $0x77]]
    %v562 = vstv %s561
    %v563 = vmul.f32 %v562, %v469
    %v564 = vadd.f32 %v542, %v548
    %v565 = vadd.f32 %v564, %v554
    %v566 = vadd.f32 %v565, %v560
    %v567 = vadd.f32 %v545, %v551
    %v568 = vadd.f32 %v567, %v557
    %v569 = vadd.f32 %v568, %v563
    %v570 = vadd.f32 %v566, %v569
    %s571 = sld [smem:[#allocation4 + $0xa]]
    %v572 = vstv %s571
    %v573 = vadd.f32 %v570, %v572
    %v574 = vmax.f32 %v573, 0.0
    %s575 = sld [smem:[#allocation2 + $0x78]]
    %v576 = vstv %s575
    %v577 = vmul.f32 %v576, %v112
    %s578 = sld [smem:[#allocation2 + $0x79]]
    %v579 = vstv %s578
    %v580 = vmul.f32 %v579, %v163
    %s581 = sld [smem:[#allocation2 + $0x7a]]
    %v582 = vstv %s581
    %v583 = vmul.f32 %v582, %v214
    %s584 = sld [smem:[#allocation2 + $0x7b]]
    %v585 = vstv %s584
    %v586 = vmul.f32 %v585, %v265
    %s587 = sld [smem:[#allocation2 + $0x7c]]
    %v588 = vstv %s587
    %v589 = vmul.f32 %v588, %v316
    %s590 = sld [smem:[#allocation2 + $0x7d]]
    %v591 = vstv %s590
    %v592 = vmul.f32 %v591, %v367
    %s593 = sld [smem:[#allocation2 + $0x7e]]
    %v594 = vstv %s593
    %v595 = vmul.f32 %v594, %v418
    %s596 = sld [smem:[#allocation2 + $0x7f]]
    %v597 = vstv %s596
    %v598 = vmul.f32 %v597, %v469
    %v599 = vadd.f32 %v577, %v583
    %v600 = vadd.f32 %v599, %v589
    %v601 = vadd.f32 %v600, %v595
    %v602 = vadd.f32 %v580, %v586
    %v603 = vadd.f32 %v602, %v592
    %v604 = vadd.f32 %v603, %v598
    %v605 = vadd.f32 %v601, %v604
    %s606 = sld [smem:[#allocation4 + $0xb]]
    %v607 = vstv %s606
    %v608 = vadd.f32 %v605, %v607
    %v609 = vmax.f32 %v608, 0.0
    %s610 = sld [smem:[#allocation2 + $0x80]]
    %v611 = vstv %s610
    %v612 = vmul.f32 %v611, %v112
    %s613 = sld [smem:[#allocation2 + $0x81]]
    %v614 = vstv %s613
    %v615 = vmul.f32 %v614, %v163
    %s616 = sld [smem:[#allocation2 + $0x82]]
    %v617 = vstv %s616
    %v618 = vmul.f32 %v617, %v214
    %s619 = sld [smem:[#allocation2 + $0x83]]
    %v620 = vstv %s619
    %v621 = vmul.f32 %v620, %v265
    %s622 = sld [smem:[#allocation2 + $0x84]]
    %v623 = vstv %s622
    %v624 = vmul.f32 %v623, %v316
    %s625 = sld [smem:[#allocation2 + $0x85]]
    %v626 = vstv %s625
    %v627 = vmul.f32 %v626, %v367
    %s628 = sld [smem:[#allocation2 + $0x86]]
    %v629 = vstv %s628
    %v630 = vmul.f32 %v629, %v418
    %s631 = sld [smem:[#allocation2 + $0x87]]
    %v632 = vstv %s631
    %v633 = vmul.f32 %v632, %v469
    %v634 = vadd.f32 %v612, %v618
    %v635 = vadd.f32 %v634, %v624
    %v636 = vadd.f32 %v635, %v630
    %v637 = vadd.f32 %v615, %v621
    %v638 = vadd.f32 %v637, %v627
    %v639 = vadd.f32 %v638, %v633
    %v640 = vadd.f32 %v636, %v639
    %s641 = sld [smem:[#allocation4 + $0xc]]
    %v642 = vstv %s641
    %v643 = vadd.f32 %v640, %v642
    %v644 = vmax.f32 %v643, 0.0
    %s645 = sld [smem:[#allocation2 + $0x88]]
    %v646 = vstv %s645
    %v647 = vmul.f32 %v646, %v112
    %s648 = sld [smem:[#allocation2 + $0x89]]
    %v649 = vstv %s648
    %v650 = vmul.f32 %v649, %v163
    %s651 = sld [smem:[#allocation2 + $0x8a]]
    %v652 = vstv %s651
    %v653 = vmul.f32 %v652, %v214
    %s654 = sld [smem:[#allocation2 + $0x8b]]
    %v655 = vstv %s654
    %v656 = vmul.f32 %v655, %v265
    %s657 = sld [smem:[#allocation2 + $0x8c]]
    %v658 = vstv %s657
    %v659 = vmul.f32 %v658, %v316
    %s660 = sld [smem:[#allocation2 + $0x8d]]
    %v661 = vstv %s660
    %v662 = vmul.f32 %v661, %v367
    %s663 = sld [smem:[#allocation2 + $0x8e]]
    %v664 = vstv %s663
    %v665 = vmul.f32 %v664, %v418
    %s666 = sld [smem:[#allocation2 + $0x8f]]
    %v667 = vstv %s666
    %v668 = vmul.f32 %v667, %v469
    %v669 = vadd.f32 %v647, %v653
    %v670 = vadd.f32 %v669, %v659
    %v671 = vadd.f32 %v670, %v665
    %v672 = vadd.f32 %v650, %v656
    %v673 = vadd.f32 %v672, %v662
    %v674 = vadd.f32 %v673, %v668
    %v675 = vadd.f32 %v671, %v674
    %s676 = sld [smem:[#allocation4 + $0xd]]
    %v677 = vstv %s676
    %v678 = vadd.f32 %v675, %v677
    %v679 = vmax.f32 %v678, 0.0
    %s680 = sld [smem:[#allocation2 + $0x90]]
    %v681 = vstv %s680
    %v682 = vmul.f32 %v681, %v504
    %s683 = sld [smem:[#allocation2 + $0x91]]
    %v684 = vstv %s683
    %v685 = vmul.f32 %v684, %v539
    %s686 = sld [smem:[#allocation2 + $0x92]]
    %v687 = vstv %s686
    %v688 = vmul.f32 %v687, %v574
    %s689 = sld [smem:[#allocation2 + $0x93]]
    %v690 = vstv %s689
    %v691 = vmul.f32 %v690, %v609
    %s692 = sld [smem:[#allocation2 + $0x94]]
    %v693 = vstv %s692
    %v694 = vmul.f32 %v693, %v644
    %s695 = sld [smem:[#allocation2 + $0x95]]
    %v696 = vstv %s695
    %v697 = vmul.f32 %v696, %v679
    %v698 = vadd.f32 %v682, %v688
    %v699 = vadd.f32 %v698, %v694
    %v700 = vadd.f32 %v685, %v691
    %v701 = vadd.f32 %v700, %v697
    %v702 = vadd.f32 %v699, %v701
    %s703 = sld [smem:[#allocation4 + $0xe]]
    %v704 = vstv %s703
    %v705 = vadd.f32 %v702, %v704
    %s706 = sld [smem:[#allocation2 + $0x96]]
    %v707 = vstv %s706
    %v708 = vmul.f32 %v707, %v504
    %s709 = sld [smem:[#allocation2 + $0x97]]
    %v710 = vstv %s709
    %v711 = vmul.f32 %v710, %v539
    %s712 = sld [smem:[#allocation2 + $0x98]]
    %v713 = vstv %s712
    %v714 = vmul.f32 %v713, %v574
    %s715 = sld [smem:[#allocation2 + $0x99]]
    %v716 = vstv %s715
    %v717 = vmul.f32 %v716, %v609
    %s718 = sld [smem:[#allocation2 + $0x9a]]
    %v719 = vstv %s718
    %v720 = vmul.f32 %v719, %v644
    %s721 = sld [smem:[#allocation2 + $0x9b]]
    %v722 = vstv %s721
    %v723 = vmul.f32 %v722, %v679
    %v724 = vadd.f32 %v708, %v714
    %v725 = vadd.f32 %v724, %v720
    %v726 = vadd.f32 %v711, %v717
    %v727 = vadd.f32 %v726, %v723
    %v728 = vadd.f32 %v725, %v727
    %s729 = sld [smem:[#allocation4 + $0xf]]
    %v730 = vstv %s729
    %v731 = vadd.f32 %v728, %v730
    %s732 = sld [smem:[#allocation2 + $0x9c]]
    %v733 = vstv %s732
    %v734 = vmul.f32 %v733, %v504
    %s735 = sld [smem:[#allocation2 + $0x9d]]
    %v736 = vstv %s735
    %v737 = vmul.f32 %v736, %v539
    %s738 = sld [smem:[#allocation2 + $0x9e]]
    %v739 = vstv %s738
    %v740 = vmul.f32 %v739, %v574
    %s741 = sld [smem:[#allocation2 + $0x9f]]
    %v742 = vstv %s741
    %v743 = vmul.f32 %v742, %v609
    %s744 = sld [smem:[#allocation2 + $0xa0]]
    %v745 = vstv %s744
    %v746 = vmul.f32 %v745, %v644
    %s747 = sld [smem:[#allocation2 + $0xa1]]
    %v748 = vstv %s747
    %v749 = vmul.f32 %v748, %v679
    %v750 = vadd.f32 %v734, %v740
    %v751 = vadd.f32 %v750, %v746
    %v752 = vadd.f32 %v737, %v743
    %v753 = vadd.f32 %v752, %v749
    %v754 = vadd.f32 %v751, %v753
    %s755 = sld [smem:[#allocation4 + $0x10]]
    %v756 = vstv %s755
    %v757 = vadd.f32 %v754, %v756
    %s758 = sld [smem:[#allocation2 + $0xa2]]
    %v759 = vstv %s758
    %v760 = vmul.f32 %v759, %v705
    %s761 = sld [smem:[#allocation2 + $0xa3]]
    %v762 = vstv %s761
    %v763 = vmul.f32 %v762, %v731
    %s764 = sld [smem:[#allocation2 + $0xa4]]
    %v765 = vstv %s764
    %v766 = vmul.f32 %v765, %v757
    %v767 = vadd.f32 %v760, %v766
    %v768 = vadd.f32 %v767, %v763
    %s769 = sld [smem:[#allocation4 + $0x11]]
    %v770 = vstv %s769
    %v771 = vadd.f32 %v768, %v770
    %v772 = vmax.f32 %v771, 0.0
    %s773 = sld [smem:[#allocation2 + $0xa5]]
    %v774 = vstv %s773
    %v775 = vmul.f32 %v774, %v705
    %s776 = sld [smem:[#allocation2 + $0xa6]]
    %v777 = vstv %s776
    %v778 = vmul.f32 %v777, %v731
    %s779 = sld [smem:[#allocation2 + $0xa7]]
    %v780 = vstv %s779
    %v781 = vmul.f32 %v780, %v757
    %v782 = vadd.f32 %v775, %v781
    %v783 = vadd.f32 %v782, %v778
    %s784 = sld [smem:[#allocation4 + $0x12]]
    %v785 = vstv %s784
    %v786 = vadd.f32 %v783, %v785
    %v787 = vmax.f32 %v786, 0.0
    %s788 = sld [smem:[#allocation2 + $0xa8]]
    %v789 = vstv %s788
    %v790 = vmul.f32 %v789, %v705
    %s791 = sld [smem:[#allocation2 + $0xa9]]
    %v792 = vstv %s791
    %v793 = vmul.f32 %v792, %v731
    %s794 = sld [smem:[#allocation2 + $0xaa]]
    %v795 = vstv %s794
    %v796 = vmul.f32 %v795, %v757
    %v797 = vadd.f32 %v790, %v796
    %v798 = vadd.f32 %v797, %v793
    %s799 = sld [smem:[#allocation4 + $0x13]]
    %v800 = vstv %s799
    %v801 = vadd.f32 %v798, %v800
    %v802 = vmax.f32 %v801, 0.0
    %s803 = sld [smem:[#allocation2 + $0xab]]
    %v804 = vstv %s803
    %v805 = vmul.f32 %v804, %v705
    %s806 = sld [smem:[#allocation2 + $0xac]]
    %v807 = vstv %s806
    %v808 = vmul.f32 %v807, %v731
    %s809 = sld [smem:[#allocation2 + $0xad]]
    %v810 = vstv %s809
    %v811 = vmul.f32 %v810, %v757
    %v812 = vadd.f32 %v805, %v811
    %v813 = vadd.f32 %v812, %v808
    %s814 = sld [smem:[#allocation4 + $0x14]]
    %v815 = vstv %s814
    %v816 = vadd.f32 %v813, %v815
    %v817 = vmax.f32 %v816, 0.0
    %s818 = sld [smem:[#allocation2 + $0xae]]
    %v819 = vstv %s818
    %v820 = vmul.f32 %v819, %v705
    %s821 = sld [smem:[#allocation2 + $0xaf]]
    %v822 = vstv %s821
    %v823 = vmul.f32 %v822, %v731
    %s824 = sld [smem:[#allocation2 + $0xb0]]
    %v825 = vstv %s824
    %v826 = vmul.f32 %v825, %v757
    %v827 = vadd.f32 %v820, %v826
    %v828 = vadd.f32 %v827, %v823
    %s829 = sld [smem:[#allocation4 + $0x15]]
    %v830 = vstv %s829
    %v831 = vadd.f32 %v828, %v830
    %v832 = vmax.f32 %v831, 0.0
    %s833 = sld [smem:[#allocation2 + $0xb1]]
    %v834 = vstv %s833
    %v835 = vmul.f32 %v834, %v705
    %s836 = sld [smem:[#allocation2 + $0xb2]]
    %v837 = vstv %s836
    %v838 = vmul.f32 %v837, %v731
    %s839 = sld [smem:[#allocation2 + $0xb3]]
    %v840 = vstv %s839
    %v841 = vmul.f32 %v840, %v757
    %v842 = vadd.f32 %v835, %v841
    %v843 = vadd.f32 %v842, %v838
    %s844 = sld [smem:[#allocation4 + $0x16]]
    %v845 = vstv %s844
    %v846 = vadd.f32 %v843, %v845
    %v847 = vmax.f32 %v846, 0.0
    %s848 = sld [smem:[#allocation2 + $0xb4]]
    %v849 = vstv %s848
    %v850 = vmul.f32 %v849, %v772
    %s851 = sld [smem:[#allocation2 + $0xb5]]
    %v852 = vstv %s851
    %v853 = vmul.f32 %v852, %v787
    %s854 = sld [smem:[#allocation2 + $0xb6]]
    %v855 = vstv %s854
    %v856 = vmul.f32 %v855, %v802
    %s857 = sld [smem:[#allocation2 + $0xb7]]
    %v858 = vstv %s857
    %v859 = vmul.f32 %v858, %v817
    %s860 = sld [smem:[#allocation2 + $0xb8]]
    %v861 = vstv %s860
    %v862 = vmul.f32 %v861, %v832
    %s863 = sld [smem:[#allocation2 + $0xb9]]
    %v864 = vstv %s863
    %v865 = vmul.f32 %v864, %v847
    %v866 = vadd.f32 %v850, %v856
    %v867 = vadd.f32 %v866, %v862
    %v868 = vadd.f32 %v853, %v859
    %v869 = vadd.f32 %v868, %v865
    %v870 = vadd.f32 %v867, %v869
    %s871 = sld [smem:[#allocation4 + $0x17]]
    %v872 = vstv %s871
    %v873 = vadd.f32 %v870, %v872
    %v874 = vmax.f32 %v873, 0.0
    %s875 = sld [smem:[#allocation2 + $0xba]]
    %v876 = vstv %s875
    %v877 = vmul.f32 %v876, %v772
    %s878 = sld [smem:[#allocation2 + $0xbb]]
    %v879 = vstv %s878
    %v880 = vmul.f32 %v879, %v787
    %s881 = sld [smem:[#allocation2 + $0xbc]]
    %v882 = vstv %s881
    %v883 = vmul.f32 %v882, %v802
    %s884 = sld [smem:[#allocation2 + $0xbd]]
    %v885 = vstv %s884
    %v886 = vmul.f32 %v885, %v817
    %s887 = sld [smem:[#allocation2 + $0xbe]]
    %v888 = vstv %s887
    %v889 = vmul.f32 %v888, %v832
    %s890 = sld [smem:[#allocation2 + $0xbf]]
    %v891 = vstv %s890
    %v892 = vmul.f32 %v891, %v847
    %v893 = vadd.f32 %v877, %v883
    %v894 = vadd.f32 %v893, %v889
    %v895 = vadd.f32 %v880, %v886
    %v896 = vadd.f32 %v895, %v892
    %v897 = vadd.f32 %v894, %v896
    %s898 = sld [smem:[#allocation4 + $0x18]]
    %v899 = vstv %s898
    %v900 = vadd.f32 %v897, %v899
    %v901 = vmax.f32 %v900, 0.0
    %s902 = sld [smem:[#allocation2 + $0xc0]]
    %v903 = vstv %s902
    %v904 = vmul.f32 %v903, %v772
    %s905 = sld [smem:[#allocation2 + $0xc1]]
    %v906 = vstv %s905
    %v907 = vmul.f32 %v906, %v787
    %s908 = sld [smem:[#allocation2 + $0xc2]]
    %v909 = vstv %s908
    %v910 = vmul.f32 %v909, %v802
    %s911 = sld [smem:[#allocation2 + $0xc3]]
    %v912 = vstv %s911
    %v913 = vmul.f32 %v912, %v817
    %s914 = sld [smem:[#allocation2 + $0xc4]]
    %v915 = vstv %s914
    %v916 = vmul.f32 %v915, %v832
    %s917 = sld [smem:[#allocation2 + $0xc5]]
    %v918 = vstv %s917
    %v919 = vmul.f32 %v918, %v847
    %v920 = vadd.f32 %v904, %v910
    %v921 = vadd.f32 %v920, %v916
    %v922 = vadd.f32 %v907, %v913
    %v923 = vadd.f32 %v922, %v919
    %v924 = vadd.f32 %v921, %v923
    %s925 = sld [smem:[#allocation4 + $0x19]]
    %v926 = vstv %s925
    %v927 = vadd.f32 %v924, %v926
    %v928 = vmax.f32 %v927, 0.0
    %s929 = sld [smem:[#allocation2 + $0xc6]]
    %v930 = vstv %s929
    %v931 = vmul.f32 %v930, %v772
    %s932 = sld [smem:[#allocation2 + $0xc7]]
    %v933 = vstv %s932
    %v934 = vmul.f32 %v933, %v787
    %s935 = sld [smem:[#allocation2 + $0xc8]]
    %v936 = vstv %s935
    %v937 = vmul.f32 %v936, %v802
    %s938 = sld [smem:[#allocation2 + $0xc9]]
    %v939 = vstv %s938
    %v940 = vmul.f32 %v939, %v817
    %s941 = sld [smem:[#allocation2 + $0xca]]
    %v942 = vstv %s941
    %v943 = vmul.f32 %v942, %v832
    %s944 = sld [smem:[#allocation2 + $0xcb]]
    %v945 = vstv %s944
    %v946 = vmul.f32 %v945, %v847
    %v947 = vadd.f32 %v931, %v937
    %v948 = vadd.f32 %v947, %v943
    %v949 = vadd.f32 %v934, %v940
    %v950 = vadd.f32 %v949, %v946
    %v951 = vadd.f32 %v948, %v950
    %s952 = sld [smem:[#allocation4 + $0x1a]]
    %v953 = vstv %s952
    %v954 = vadd.f32 %v951, %v953
    %v955 = vmax.f32 %v954, 0.0
    %s956 = sld [smem:[#allocation2 + $0xcc]]
    %v957 = vstv %s956
    %v958 = vmul.f32 %v957, %v772
    %s959 = sld [smem:[#allocation2 + $0xcd]]
    %v960 = vstv %s959
    %v961 = vmul.f32 %v960, %v787
    %s962 = sld [smem:[#allocation2 + $0xce]]
    %v963 = vstv %s962
    %v964 = vmul.f32 %v963, %v802
    %s965 = sld [smem:[#allocation2 + $0xcf]]
    %v966 = vstv %s965
    %v967 = vmul.f32 %v966, %v817
    %s968 = sld [smem:[#allocation2 + $0xd0]]
    %v969 = vstv %s968
    %v970 = vmul.f32 %v969, %v832
    %s971 = sld [smem:[#allocation2 + $0xd1]]
    %v972 = vstv %s971
    %v973 = vmul.f32 %v972, %v847
    %v974 = vadd.f32 %v958, %v964
    %v975 = vadd.f32 %v974, %v970
    %v976 = vadd.f32 %v961, %v967
    %v977 = vadd.f32 %v976, %v973
    %v978 = vadd.f32 %v975, %v977
    %s979 = sld [smem:[#allocation4 + $0x1b]]
    %v980 = vstv %s979
    %v981 = vadd.f32 %v978, %v980
    %v982 = vmax.f32 %v981, 0.0
    %s983 = sld [smem:[#allocation2 + $0xd2]]
    %v984 = vstv %s983
    %v985 = vmul.f32 %v984, %v772
    %s986 = sld [smem:[#allocation2 + $0xd3]]
    %v987 = vstv %s986
    %v988 = vmul.f32 %v987, %v787
    %s989 = sld [smem:[#allocation2 + $0xd4]]
    %v990 = vstv %s989
    %v991 = vmul.f32 %v990, %v802
    %s992 = sld [smem:[#allocation2 + $0xd5]]
    %v993 = vstv %s992
    %v994 = vmul.f32 %v993, %v817
    %s995 = sld [smem:[#allocation2 + $0xd6]]
    %v996 = vstv %s995
    %v997 = vmul.f32 %v996, %v832
    %s998 = sld [smem:[#allocation2 + $0xd7]]
    %v999 = vstv %s998
    %v1000 = vmul.f32 %v999, %v847
    %v1001 = vadd.f32 %v985, %v991
    %v1002 = vadd.f32 %v1001, %v997
    %v1003 = vadd.f32 %v988, %v994
    %v1004 = vadd.f32 %v1003, %v1000
    %v1005 = vadd.f32 %v1002, %v1004
    %s1006 = sld [smem:[#allocation4 + $0x1c]]
    %v1007 = vstv %s1006
    %v1008 = vadd.f32 %v1005, %v1007
    %v1009 = vmax.f32 %v1008, 0.0
    %s1010 = sld [smem:[#allocation2 + $0xd8]]
    %v1011 = vstv %s1010
    %v1012 = vmul.f32 %v1011, %v772
    %s1013 = sld [smem:[#allocation2 + $0xd9]]
    %v1014 = vstv %s1013
    %v1015 = vmul.f32 %v1014, %v787
    %s1016 = sld [smem:[#allocation2 + $0xda]]
    %v1017 = vstv %s1016
    %v1018 = vmul.f32 %v1017, %v802
    %s1019 = sld [smem:[#allocation2 + $0xdb]]
    %v1020 = vstv %s1019
    %v1021 = vmul.f32 %v1020, %v817
    %s1022 = sld [smem:[#allocation2 + $0xdc]]
    %v1023 = vstv %s1022
    %v1024 = vmul.f32 %v1023, %v832
    %s1025 = sld [smem:[#allocation2 + $0xdd]]
    %v1026 = vstv %s1025
    %v1027 = vmul.f32 %v1026, %v847
    %v1028 = vadd.f32 %v1012, %v1018
    %v1029 = vadd.f32 %v1028, %v1024
    %v1030 = vadd.f32 %v1015, %v1021
    %v1031 = vadd.f32 %v1030, %v1027
    %v1032 = vadd.f32 %v1029, %v1031
    %s1033 = sld [smem:[#allocation4 + $0x1d]]
    %v1034 = vstv %s1033
    %v1035 = vadd.f32 %v1032, %v1034
    %v1036 = vmax.f32 %v1035, 0.0
    %s1037 = sld [smem:[#allocation2 + $0xde]]
    %v1038 = vstv %s1037
    %v1039 = vmul.f32 %v1038, %v772
    %s1040 = sld [smem:[#allocation2 + $0xdf]]
    %v1041 = vstv %s1040
    %v1042 = vmul.f32 %v1041, %v787
    %s1043 = sld [smem:[#allocation2 + $0xe0]]
    %v1044 = vstv %s1043
    %v1045 = vmul.f32 %v1044, %v802
    %s1046 = sld [smem:[#allocation2 + $0xe1]]
    %v1047 = vstv %s1046
    %v1048 = vmul.f32 %v1047, %v817
    %s1049 = sld [smem:[#allocation2 + $0xe2]]
    %v1050 = vstv %s1049
    %v1051 = vmul.f32 %v1050, %v832
    %s1052 = sld [smem:[#allocation2 + $0xe3]]
    %v1053 = vstv %s1052
    %v1054 = vmul.f32 %v1053, %v847
    %v1055 = vadd.f32 %v1039, %v1045
    %v1056 = vadd.f32 %v1055, %v1051
    %v1057 = vadd.f32 %v1042, %v1048
    %v1058 = vadd.f32 %v1057, %v1054
    %v1059 = vadd.f32 %v1056, %v1058
    %s1060 = sld [smem:[#allocation4 + $0x1e]]
    %v1061 = vstv %s1060
    %v1062 = vadd.f32 %v1059, %v1061
    %v1063 = vmax.f32 %v1062, 0.0
    %s1064 = sld [smem:[#allocation2 + $0xe4]]
    %v1065 = vstv %s1064
    %v1066 = vmul.f32 %v1065, %v874
    %s1067 = sld [smem:[#allocation2 + $0xe5]]
    %v1068 = vstv %s1067
    %v1069 = vmul.f32 %v1068, %v901
    %s1070 = sld [smem:[#allocation2 + $0xe6]]
    %v1071 = vstv %s1070
    %v1072 = vmul.f32 %v1071, %v928
    %s1073 = sld [smem:[#allocation2 + $0xe7]]
    %v1074 = vstv %s1073
    %v1075 = vmul.f32 %v1074, %v955
    %s1076 = sld [smem:[#allocation2 + $0xe8]]
    %v1077 = vstv %s1076
    %v1078 = vmul.f32 %v1077, %v982
    %s1079 = sld [smem:[#allocation2 + $0xe9]]
    %v1080 = vstv %s1079
    %v1081 = vmul.f32 %v1080, %v1009
    %s1082 = sld [smem:[#allocation2 + $0xea]]
    %v1083 = vstv %s1082
    %v1084 = vmul.f32 %v1083, %v1036
    %s1085 = sld [smem:[#allocation2 + $0xeb]]
    %v1086 = vstv %s1085
    %v1087 = vmul.f32 %v1086, %v1063
    %v1088 = vadd.f32 %v1066, %v1072
    %v1089 = vadd.f32 %v1088, %v1078
    %v1090 = vadd.f32 %v1089, %v1084
    %v1091 = vadd.f32 %v1069, %v1075
    %v1092 = vadd.f32 %v1091, %v1081
    %v1093 = vadd.f32 %v1092, %v1087
    %v1094 = vadd.f32 %v1090, %v1093
    %s1095 = sld [smem:[#allocation4 + $0x1f]]
    %v1096 = vstv %s1095
    %v1097 = vadd.f32 %v1094, %v1096
    %s1098 = sld [smem:[#allocation2 + $0xec]]
    %v1099 = vstv %s1098
    %v1100 = vmul.f32 %v1099, %v874
    %s1101 = sld [smem:[#allocation2 + $0xed]]
    %v1102 = vstv %s1101
    %v1103 = vmul.f32 %v1102, %v901
    %s1104 = sld [smem:[#allocation2 + $0xee]]
    %v1105 = vstv %s1104
    %v1106 = vmul.f32 %v1105, %v928
    %s1107 = sld [smem:[#allocation2 + $0xef]]
    %v1108 = vstv %s1107
    %v1109 = vmul.f32 %v1108, %v955
    %s1110 = sld [smem:[#allocation2 + $0xf0]]
    %v1111 = vstv %s1110
    %v1112 = vmul.f32 %v1111, %v982
    %s1113 = sld [smem:[#allocation2 + $0xf1]]
    %v1114 = vstv %s1113
    %v1115 = vmul.f32 %v1114, %v1009
    %s1116 = sld [smem:[#allocation2 + $0xf2]]
    %v1117 = vstv %s1116
    %v1118 = vmul.f32 %v1117, %v1036
    %s1119 = sld [smem:[#allocation2 + $0xf3]]
    %v1120 = vstv %s1119
    %v1121 = vmul.f32 %v1120, %v1063
    %v1122 = vadd.f32 %v1100, %v1106
    %v1123 = vadd.f32 %v1122, %v1112
    %v1124 = vadd.f32 %v1123, %v1118
    %v1125 = vadd.f32 %v1103, %v1109
    %v1126 = vadd.f32 %v1125, %v1115
    %v1127 = vadd.f32 %v1126, %v1121
    %v1128 = vadd.f32 %v1124, %v1127
    %s1129 = sld [smem:[#allocation4 + $0x20]]
    %v1130 = vstv %s1129
    %v1131 = vadd.f32 %v1128, %v1130
    %s1132 = sld [smem:[#allocation2 + $0xf4]]
    %v1133 = vstv %s1132
    %v1134 = vmul.f32 %v1133, %v874
    %s1135 = sld [smem:[#allocation2 + $0xf5]]
    %v1136 = vstv %s1135
    %v1137 = vmul.f32 %v1136, %v901
    %s1138 = sld [smem:[#allocation2 + $0xf6]]
    %v1139 = vstv %s1138
    %v1140 = vmul.f32 %v1139, %v928
    %s1141 = sld [smem:[#allocation2 + $0xf7]]
    %v1142 = vstv %s1141
    %v1143 = vmul.f32 %v1142, %v955
    %s1144 = sld [smem:[#allocation2 + $0xf8]]
    %v1145 = vstv %s1144
    %v1146 = vmul.f32 %v1145, %v982
    %s1147 = sld [smem:[#allocation2 + $0xf9]]
    %v1148 = vstv %s1147
    %v1149 = vmul.f32 %v1148, %v1009
    %s1150 = sld [smem:[#allocation2 + $0xfa]]
    %v1151 = vstv %s1150
    %v1152 = vmul.f32 %v1151, %v1036
    %s1153 = sld [smem:[#allocation2 + $0xfb]]
    %v1154 = vstv %s1153
    %v1155 = vmul.f32 %v1154, %v1063
    %v1156 = vadd.f32 %v1134, %v1140
    %v1157 = vadd.f32 %v1156, %v1146
    %v1158 = vadd.f32 %v1157, %v1152
    %v1159 = vadd.f32 %v1137, %v1143
    %v1160 = vadd.f32 %v1159, %v1149
    %v1161 = vadd.f32 %v1160, %v1155
    %v1162 = vadd.f32 %v1158, %v1161
    %s1163 = sld [smem:[#allocation4 + $0x21]]
    %v1164 = vstv %s1163
    %v1165 = vadd.f32 %v1162, %v1164
    %s1166 = sld [smem:[#allocation2 + $0xfc]]
    %v1167 = vstv %s1166
    %v1168 = vmul.f32 %v1167, %v874
    %s1169 = sld [smem:[#allocation2 + $0xfd]]
    %v1170 = vstv %s1169
    %v1171 = vmul.f32 %v1170, %v901
    %s1172 = sld [smem:[#allocation2 + $0xfe]]
    %v1173 = vstv %s1172
    %v1174 = vmul.f32 %v1173, %v928
    %s1175 = sld [smem:[#allocation2 + $0xff]]
    %v1176 = vstv %s1175
    %v1177 = vmul.f32 %v1176, %v955
    %s1178 = sld [smem:[#allocation2 + $0x100]]
    %v1179 = vstv %s1178
    %v1180 = vmul.f32 %v1179, %v982
    %s1181 = sld [smem:[#allocation2 + $0x101]]
    %v1182 = vstv %s1181
    %v1183 = vmul.f32 %v1182, %v1009
    %s1184 = sld [smem:[#allocation2 + $0x102]]
    %v1185 = vstv %s1184
    %v1186 = vmul.f32 %v1185, %v1036
    %s1187 = sld [smem:[#allocation2 + $0x103]]
    %v1188 = vstv %s1187
    %v1189 = vmul.f32 %v1188, %v1063
    %v1190 = vadd.f32 %v1168, %v1174
    %v1191 = vadd.f32 %v1190, %v1180
    %v1192 = vadd.f32 %v1191, %v1186
    %v1193 = vadd.f32 %v1171, %v1177
    %v1194 = vadd.f32 %v1193, %v1183
    %v1195 = vadd.f32 %v1194, %v1189
    %v1196 = vadd.f32 %v1192, %v1195
    %s1197 = sld [smem:[#allocation4 + $0x22]]
    %v1198 = vstv %s1197
    %v1199 = vadd.f32 %v1196, %v1198
    %s1200 = sld [smem:[#allocation2 + $0x104]]
    %v1201 = vstv %s1200
    %v1202 = vmul.f32 %v1201, %v874
    %s1203 = sld [smem:[#allocation2 + $0x105]]
    %v1204 = vstv %s1203
    %v1205 = vmul.f32 %v1204, %v901
    %s1206 = sld [smem:[#allocation2 + $0x106]]
    %v1207 = vstv %s1206
    %v1208 = vmul.f32 %v1207, %v928
    %s1209 = sld [smem:[#allocation2 + $0x107]]
    %v1210 = vstv %s1209
    %v1211 = vmul.f32 %v1210, %v955
    %s1212 = sld [smem:[#allocation2 + $0x108]]
    %v1213 = vstv %s1212
    %v1214 = vmul.f32 %v1213, %v982
    %s1215 = sld [smem:[#allocation2 + $0x109]]
    %v1216 = vstv %s1215
    %v1217 = vmul.f32 %v1216, %v1009
    %s1218 = sld [smem:[#allocation2 + $0x10a]]
    %v1219 = vstv %s1218
    %v1220 = vmul.f32 %v1219, %v1036
    %s1221 = sld [smem:[#allocation2 + $0x10b]]
    %v1222 = vstv %s1221
    %v1223 = vmul.f32 %v1222, %v1063
    %v1224 = vadd.f32 %v1202, %v1208
    %v1225 = vadd.f32 %v1224, %v1214
    %v1226 = vadd.f32 %v1225, %v1220
    %v1227 = vadd.f32 %v1205, %v1211
    %v1228 = vadd.f32 %v1227, %v1217
    %v1229 = vadd.f32 %v1228, %v1223
    %v1230 = vadd.f32 %v1226, %v1229
    %s1231 = sld [smem:[#allocation4 + $0x23]]
    %v1232 = vstv %s1231
    %v1233 = vadd.f32 %v1230, %v1232
    %s1234 = sld [smem:[#allocation2 + $0x10c]]
    %v1235 = vstv %s1234
    %v1236 = vmul.f32 %v1235, %v874
    %s1237 = sld [smem:[#allocation2 + $0x10d]]
    %v1238 = vstv %s1237
    %v1239 = vmul.f32 %v1238, %v901
    %s1240 = sld [smem:[#allocation2 + $0x10e]]
    %v1241 = vstv %s1240
    %v1242 = vmul.f32 %v1241, %v928
    %s1243 = sld [smem:[#allocation2 + $0x10f]]
    %v1244 = vstv %s1243
    %v1245 = vmul.f32 %v1244, %v955
    %s1246 = sld [smem:[#allocation2 + $0x110]]
    %v1247 = vstv %s1246
    %v1248 = vmul.f32 %v1247, %v982
    %s1249 = sld [smem:[#allocation2 + $0x111]]
    %v1250 = vstv %s1249
    %v1251 = vmul.f32 %v1250, %v1009
    %s1252 = sld [smem:[#allocation2 + $0x112]]
    %v1253 = vstv %s1252
    %v1254 = vmul.f32 %v1253, %v1036
    %s1255 = sld [smem:[#allocation2 + $0x113]]
    %v1256 = vstv %s1255
    %v1257 = vmul.f32 %v1256, %v1063
    %v1258 = vadd.f32 %v1236, %v1242
    %v1259 = vadd.f32 %v1258, %v1248
    %v1260 = vadd.f32 %v1259, %v1254
    %v1261 = vadd.f32 %v1239, %v1245
    %v1262 = vadd.f32 %v1261, %v1251
    %v1263 = vadd.f32 %v1262, %v1257
    %v1264 = vadd.f32 %v1260, %v1263
    %s1265 = sld [smem:[#allocation4 + $0x24]]
    %v1266 = vstv %s1265
    %v1267 = vadd.f32 %v1264, %v1266
    %s1268 = sld [smem:[#allocation2 + $0x114]]
    %v1269 = vstv %s1268
    %v1270 = vmul.f32 %v1269, %v874
    %s1271 = sld [smem:[#allocation2 + $0x115]]
    %v1272 = vstv %s1271
    %v1273 = vmul.f32 %v1272, %v901
    %s1274 = sld [smem:[#allocation2 + $0x116]]
    %v1275 = vstv %s1274
    %v1276 = vmul.f32 %v1275, %v928
    %s1277 = sld [smem:[#allocation2 + $0x117]]
    %v1278 = vstv %s1277
    %v1279 = vmul.f32 %v1278, %v955
    %s1280 = sld [smem:[#allocation2 + $0x118]]
    %v1281 = vstv %s1280
    %v1282 = vmul.f32 %v1281, %v982
    %s1283 = sld [smem:[#allocation2 + $0x119]]
    %v1284 = vstv %s1283
    %v1285 = vmul.f32 %v1284, %v1009
    %s1286 = sld [smem:[#allocation2 + $0x11a]]
    %v1287 = vstv %s1286
    %v1288 = vmul.f32 %v1287, %v1036
    %s1289 = sld [smem:[#allocation2 + $0x11b]]
    %v1290 = vstv %s1289
    %v1291 = vmul.f32 %v1290, %v1063
    %v1292 = vadd.f32 %v1270, %v1276
    %v1293 = vadd.f32 %v1292, %v1282
    %v1294 = vadd.f32 %v1293, %v1288
    %v1295 = vadd.f32 %v1273, %v1279
    %v1296 = vadd.f32 %v1295, %v1285
    %v1297 = vadd.f32 %v1296, %v1291
    %v1298 = vadd.f32 %v1294, %v1297
    %s1299 = sld [smem:[#allocation4 + $0x25]]
    %v1300 = vstv %s1299
    %v1301 = vadd.f32 %v1298, %v1300
    %s1302 = sld [smem:[#allocation2 + $0x11c]]
    %v1303 = vstv %s1302
    %v1304 = vmul.f32 %v1303, %v874
    %s1305 = sld [smem:[#allocation2 + $0x11d]]
    %v1306 = vstv %s1305
    %v1307 = vmul.f32 %v1306, %v901
    %s1308 = sld [smem:[#allocation2 + $0x11e]]
    %v1309 = vstv %s1308
    %v1310 = vmul.f32 %v1309, %v928
    %s1311 = sld [smem:[#allocation2 + $0x11f]]
    %v1312 = vstv %s1311
    %v1313 = vmul.f32 %v1312, %v955
    %s1314 = sld [smem:[#allocation2 + $0x120]]
    %v1315 = vstv %s1314
    %v1316 = vmul.f32 %v1315, %v982
    %s1317 = sld [smem:[#allocation2 + $0x121]]
    %v1318 = vstv %s1317
    %v1319 = vmul.f32 %v1318, %v1009
    %s1320 = sld [smem:[#allocation2 + $0x122]]
    %v1321 = vstv %s1320
    %v1322 = vmul.f32 %v1321, %v1036
    %s1323 = sld [smem:[#allocation2 + $0x123]]
    %v1324 = vstv %s1323
    %v1325 = vmul.f32 %v1324, %v1063
    %v1326 = vadd.f32 %v1304, %v1310
    %v1327 = vadd.f32 %v1326, %v1316
    %v1328 = vadd.f32 %v1327, %v1322
    %v1329 = vadd.f32 %v1307, %v1313
    %v1330 = vadd.f32 %v1329, %v1319
    %v1331 = vadd.f32 %v1330, %v1325
    %v1332 = vadd.f32 %v1328, %v1331
    %s1333 = sld [smem:[#allocation4 + $0x26]]
    %v1334 = vstv %s1333
    %v1335 = vadd.f32 %v1332, %v1334
    %s1336 = sld [smem:[#allocation2 + $0x124]]
    %v1337 = vstv %s1336
    %v1338 = vmul.f32 %v1337, %v874
    %s1339 = sld [smem:[#allocation2 + $0x125]]
    %v1340 = vstv %s1339
    %v1341 = vmul.f32 %v1340, %v901
    %s1342 = sld [smem:[#allocation2 + $0x126]]
    %v1343 = vstv %s1342
    %v1344 = vmul.f32 %v1343, %v928
    %s1345 = sld [smem:[#allocation2 + $0x127]]
    %v1346 = vstv %s1345
    %v1347 = vmul.f32 %v1346, %v955
    %s1348 = sld [smem:[#allocation2 + $0x128]]
    %v1349 = vstv %s1348
    %v1350 = vmul.f32 %v1349, %v982
    %s1351 = sld [smem:[#allocation2 + $0x129]]
    %v1352 = vstv %s1351
    %v1353 = vmul.f32 %v1352, %v1009
    %s1354 = sld [smem:[#allocation2 + $0x12a]]
    %v1355 = vstv %s1354
    %v1356 = vmul.f32 %v1355, %v1036
    %s1357 = sld [smem:[#allocation2 + $0x12b]]
    %v1358 = vstv %s1357
    %v1359 = vmul.f32 %v1358, %v1063
    %v1360 = vadd.f32 %v1338, %v1344
    %v1361 = vadd.f32 %v1360, %v1350
    %v1362 = vadd.f32 %v1361, %v1356
    %v1363 = vadd.f32 %v1341, %v1347
    %v1364 = vadd.f32 %v1363, %v1353
    %v1365 = vadd.f32 %v1364, %v1359
    %v1366 = vadd.f32 %v1362, %v1365
    %s1367 = sld [smem:[#allocation4 + $0x27]]
    %v1368 = vstv %s1367
    %v1369 = vadd.f32 %v1366, %v1368
    %s1370 = sld [smem:[#allocation2 + $0x12c]]
    %v1371 = vstv %s1370
    %v1372 = vmul.f32 %v1371, %v874
    %s1373 = sld [smem:[#allocation2 + $0x12d]]
    %v1374 = vstv %s1373
    %v1375 = vmul.f32 %v1374, %v901
    %s1376 = sld [smem:[#allocation2 + $0x12e]]
    %v1377 = vstv %s1376
    %v1378 = vmul.f32 %v1377, %v928
    %s1379 = sld [smem:[#allocation2 + $0x12f]]
    %v1380 = vstv %s1379
    %v1381 = vmul.f32 %v1380, %v955
    %s1382 = sld [smem:[#allocation2 + $0x130]]
    %v1383 = vstv %s1382
    %v1384 = vmul.f32 %v1383, %v982
    %s1385 = sld [smem:[#allocation2 + $0x131]]
    %v1386 = vstv %s1385
    %v1387 = vmul.f32 %v1386, %v1009
    %s1388 = sld [smem:[#allocation2 + $0x132]]
    %v1389 = vstv %s1388
    %v1390 = vmul.f32 %v1389, %v1036
    %s1391 = sld [smem:[#allocation2 + $0x133]]
    %v1392 = vstv %s1391
    %v1393 = vmul.f32 %v1392, %v1063
    %v1394 = vadd.f32 %v1372, %v1378
    %v1395 = vadd.f32 %v1394, %v1384
    %v1396 = vadd.f32 %v1395, %v1390
    %v1397 = vadd.f32 %v1375, %v1381
    %v1398 = vadd.f32 %v1397, %v1387
    %v1399 = vadd.f32 %v1398, %v1393
    %v1400 = vadd.f32 %v1396, %v1399
    %s1401 = sld [smem:[#allocation4 + $0x28]]
    %v1402 = vstv %s1401
    %v1403 = vadd.f32 %v1400, %v1402
    %s1404 = sld [smem:[#allocation2 + $0x134]]
    %v1405 = vstv %s1404
    %v1406 = vmul.f32 %v1405, %v874
    %s1407 = sld [smem:[#allocation2 + $0x135]]
    %v1408 = vstv %s1407
    %v1409 = vmul.f32 %v1408, %v901
    %s1410 = sld [smem:[#allocation2 + $0x136]]
    %v1411 = vstv %s1410
    %v1412 = vmul.f32 %v1411, %v928
    %s1413 = sld [smem:[#allocation2 + $0x137]]
    %v1414 = vstv %s1413
    %v1415 = vmul.f32 %v1414, %v955
    %s1416 = sld [smem:[#allocation2 + $0x138]]
    %v1417 = vstv %s1416
    %v1418 = vmul.f32 %v1417, %v982
    %s1419 = sld [smem:[#allocation2 + $0x139]]
    %v1420 = vstv %s1419
    %v1421 = vmul.f32 %v1420, %v1009
    %s1422 = sld [smem:[#allocation2 + $0x13a]]
    %v1423 = vstv %s1422
    %v1424 = vmul.f32 %v1423, %v1036
    %s1425 = sld [smem:[#allocation2 + $0x13b]]
    %v1426 = vstv %s1425
    %v1427 = vmul.f32 %v1426, %v1063
    %v1428 = vadd.f32 %v1406, %v1412
    %v1429 = vadd.f32 %v1428, %v1418
    %v1430 = vadd.f32 %v1429, %v1424
    %v1431 = vadd.f32 %v1409, %v1415
    %v1432 = vadd.f32 %v1431, %v1421
    %v1433 = vadd.f32 %v1432, %v1427
    %v1434 = vadd.f32 %v1430, %v1433
    %s1435 = sld [smem:[#allocation4 + $0x29]]
    %v1436 = vstv %s1435
    %v1437 = vadd.f32 %v1434, %v1436
    %s1438 = sld [smem:[#allocation2 + $0x13c]]
    %v1439 = vstv %s1438
    %v1440 = vmul.f32 %v1439, %v874
    %s1441 = sld [smem:[#allocation2 + $0x13d]]
    %v1442 = vstv %s1441
    %v1443 = vmul.f32 %v1442, %v901
    %s1444 = sld [smem:[#allocation2 + $0x13e]]
    %v1445 = vstv %s1444
    %v1446 = vmul.f32 %v1445, %v928
    %s1447 = sld [smem:[#allocation2 + $0x13f]]
    %v1448 = vstv %s1447
    %v1449 = vmul.f32 %v1448, %v955
    %s1450 = sld [smem:[#allocation2 + $0x140]]
    %v1451 = vstv %s1450
    %v1452 = vmul.f32 %v1451, %v982
    %s1453 = sld [smem:[#allocation2 + $0x141]]
    %v1454 = vstv %s1453
    %v1455 = vmul.f32 %v1454, %v1009
    %s1456 = sld [smem:[#allocation2 + $0x142]]
    %v1457 = vstv %s1456
    %v1458 = vmul.f32 %v1457, %v1036
    %s1459 = sld [smem:[#allocation2 + $0x143]]
    %v1460 = vstv %s1459
    %v1461 = vmul.f32 %v1460, %v1063
    %v1462 = vadd.f32 %v1440, %v1446
    %v1463 = vadd.f32 %v1462, %v1452
    %v1464 = vadd.f32 %v1463, %v1458
    %v1465 = vadd.f32 %v1443, %v1449
    %v1466 = vadd.f32 %v1465, %v1455
    %v1467 = vadd.f32 %v1466, %v1461
    %v1468 = vadd.f32 %v1464, %v1467
    %s1469 = sld [smem:[#allocation4 + $0x2a]]
    %v1470 = vstv %s1469
    %v1471 = vadd.f32 %v1468, %v1470
    %v1472 = vsub.f32 0.0, %v1097
    %v1473 = vmul.f32 %v1472, 1.442695
    %v1474 = vpow.pop %v1473
    %v1475 = vadd.f32 %v1474, 1.0
    %v1476 = vrcp.pop %v1475
    %1477 = vst [vmem:[%s3] sm:$0x1] %v1476
    %v1478 = vsub.f32 0.0, %v1131
    %v1479 = vmul.f32 %v1478, 1.442695
    %v1480 = vpow.pop %v1479
    %v1481 = vadd.f32 %v1480, 1.0
    %v1482 = vrcp.pop %v1481
    %s1483 = scalar_lea.vmem %s3, 1
    %1484 = vst [vmem:[%s1483] sm:$0x1] %v1482
    %v1485 = vsub.f32 0.0, %v1165
    %v1486 = vmul.f32 %v1485, 1.442695
    %v1487 = vpow.pop %v1486
    %v1488 = vadd.f32 %v1487, 1.0
    %v1489 = vrcp.pop %v1488
    %s1490 = scalar_lea.vmem %s3, 2
    %1491 = vst [vmem:[%s1490] sm:$0x1] %v1489
    %v1492 = vsub.f32 0.0, %v1199
    %v1493 = vmul.f32 %v1492, 1.442695
    %v1494 = vpow.pop %v1493
    %v1495 = vadd.f32 %v1494, 1.0
    %v1496 = vrcp.pop %v1495
    %s1497 = scalar_lea.vmem %s3, 3
    %1498 = vst [vmem:[%s1497] sm:$0x1] %v1496
    %v1499 = vsub.f32 0.0, %v1233
    %v1500 = vmul.f32 %v1499, 1.442695
    %v1501 = vpow.pop %v1500
    %v1502 = vadd.f32 %v1501, 1.0
    %v1503 = vrcp.pop %v1502
    %s1504 = scalar_lea.vmem %s3, 4
    %1505 = vst [vmem:[%s1504] sm:$0x1] %v1503
    %v1506 = vsub.f32 0.0, %v1267
    %v1507 = vmul.f32 %v1506, 1.442695
    %v1508 = vpow.pop %v1507
    %v1509 = vadd.f32 %v1508, 1.0
    %v1510 = vrcp.pop %v1509
    %s1511 = scalar_lea.vmem %s3, 5
    %1512 = vst [vmem:[%s1511] sm:$0x1] %v1510
    %v1513 = vsub.f32 0.0, %v1301
    %v1514 = vmul.f32 %v1513, 1.442695
    %v1515 = vpow.pop %v1514
    %v1516 = vadd.f32 %v1515, 1.0
    %v1517 = vrcp.pop %v1516
    %s1518 = scalar_lea.vmem %s3, 6
    %1519 = vst [vmem:[%s1518] sm:$0x1] %v1517
    %v1520 = vsub.f32 0.0, %v1335
    %v1521 = vmul.f32 %v1520, 1.442695
    %v1522 = vpow.pop %v1521
    %v1523 = vadd.f32 %v1522, 1.0
    %v1524 = vrcp.pop %v1523
    %s1525 = scalar_lea.vmem %s3, 7
    %1526 = vst [vmem:[%s1525] sm:$0x1] %v1524
    %v1527 = vsub.f32 0.0, %v1369
    %v1528 = vmul.f32 %v1527, 1.442695
    %v1529 = vpow.pop %v1528
    %v1530 = vadd.f32 %v1529, 1.0
    %v1531 = vrcp.pop %v1530
    %s1532 = scalar_lea.vmem %s3, 8
    %1533 = vst [vmem:[%s1532] sm:$0x1] %v1531
    %v1534 = vsub.f32 0.0, %v1403
    %v1535 = vmul.f32 %v1534, 1.442695
    %v1536 = vpow.pop %v1535
    %v1537 = vadd.f32 %v1536, 1.0
    %v1538 = vrcp.pop %v1537
    %s1539 = scalar_lea.vmem %s3, 9
    %1540 = vst [vmem:[%s1539] sm:$0x1] %v1538
    %v1541 = vsub.f32 0.0, %v1437
    %v1542 = vmul.f32 %v1541, 1.442695
    %v1543 = vpow.pop %v1542
    %v1544 = vadd.f32 %v1543, 1.0
    %v1545 = vrcp.pop %v1544
    %s1546 = scalar_lea.vmem %s3, 10
    %1547 = vst [vmem:[%s1546] sm:$0x1] %v1545
    %v1548 = vsub.f32 0.0, %v1471
    %v1549 = vmul.f32 %v1548, 1.442695
    %v1550 = vpow.pop %v1549
    %v1551 = vadd.f32 %v1550, 1.0
    %v1552 = vrcp.pop %v1551
    %s1553 = scalar_lea.vmem %s3, 11
    %1554 = vst [vmem:[%s1553] sm:$0x1] %v1552
    // Predicated region
    $region22: #{autoencoder_forward_fm.1} parent=1 // pred_check
      _
    $region23: #{autoencoder_forward_fm.1} parent=1 // pred_check_branch
      %1556 = sbr.rel (0) target = $region25
    $region24: #{autoencoder_forward_fm.1} parent=1 // pred_region
      _
    $region25: #{autoencoder_forward_fm.1} parent=1 // pred_fallthru
      _
    // Predicated region
    $region26: #{autoencoder_forward_fm.1} parent=1 // pred_check
      _
    $region27: #{autoencoder_forward_fm.1} parent=1 // pred_check_branch
      %1558 = sbr.rel (0) target = $region29
    $region28: #{autoencoder_forward_fm.1} parent=1 // pred_region
      _
    $region29: #{autoencoder_forward_fm.1} parent=1 // pred_fallthru
      _
    %1559 = vsyncpa [#allocation3], 1
    %1560 = vsyncpa [#allocation5], 1

</llo_original>
